<compile_context>
chip_gen: v7x
topology: tpu7x:2x2x1
jax: 0.10.0
libtpu: 0.0.40
codegen_flags: <defaults>
</compile_context>

<pallas_src>
import functools

import jax
import jax.numpy as jnp
from jax.experimental import pallas as pl
from jax.experimental.pallas import tpu as pltpu

_EPS = 1e-5


def _round_up(x, m):
    return (x + m - 1) // m * m


def _device_kind():
    try:
        return jax.devices()[0].device_kind.lower()
    except Exception:
        return ""


# ---------------- Pass 1: in-kernel im2col conv + per-image batch-stat partials ----
def _conv_stats_kernel(x_ref, w_ref, y_ref, sum_ref, ssq_ref, *,
                       k, dil, stride, Ho, Wo):
    # x_ref: (Hp, Wp, Cinp) bf16 (one spatially padded image)
    # w_ref: (k*k, Cinp, Cp) bf16 (tap-major weight)
    # y_ref: (Ho*Wo, Cp) bf16; sum_ref/ssq_ref: (1, Cp) f32 per-image partials
    cp = y_ref.shape[-1]
    acc = jnp.zeros((Ho * Wo, cp), jnp.float32)
    for kh in range(k):
        for kw in range(k):
            if stride == 1:
                xs = x_ref[kh * dil: kh * dil + Ho,
                           kw * dil: kw * dil + Wo, :]
            else:
                xs = x_ref[pl.ds(kh * dil, Ho, stride=stride),
                           pl.ds(kw * dil, Wo, stride=stride), :]
            xs = xs.reshape(Ho * Wo, xs.shape[-1])
            acc = acc + jnp.dot(xs, w_ref[kh * k + kw],
                                preferred_element_type=jnp.float32)
    # bf16 intermediate to HBM; stats from the f32 accumulator (full precision).
    y_ref[...] = acc.astype(y_ref.dtype)
    sum_ref[...] = jnp.sum(acc, axis=0, keepdims=True)
    ssq_ref[...] = jnp.sum(acc * acc, axis=0, keepdims=True)


# ---------------- Pass 2: normalize with batch stats (scale/shift) + ReLU ----------
def _bn_relu_kernel(y_ref, scale_ref, shift_ref, o_ref, *, relu):
    y = y_ref[...].astype(jnp.float32)
    out = y * scale_ref[...] + shift_ref[...]
    if relu:
        out = jnp.maximum(out, 0.0)
    o_ref[...] = out.astype(o_ref.dtype)


@functools.partial(jax.jit, static_argnames=("kernel_size", "stride", "padding",
                                              "dilation", "groups", "relu", "bn"))
def basic_conv_forward(x, weight, gamma, beta, *, kernel_size, stride=1,
                       padding=0, dilation=1, groups=1, relu=True, bn=True):
    """x: (N, Cin, H, W); weight: (Cout, Cin, k, k); gamma/beta: (Cout,). Returns NCHW."""
    if groups != 1:
        # TODO(synk): grouped conv (groups != 1) is not implemented.
        raise NotImplementedError("groups != 1 not supported")
    # TODO(synk): BatchNorm2d running_mean/running_var update (momentum=0.01) and
    # bias=True are not implemented; this is the pure training-stats forward.
    N, Cin, H, W = x.shape
    Cout = weight.shape[0]
    k, d, s, p = kernel_size, dilation, stride, padding

    Ho = (H + 2 * p - d * (k - 1) - 1) // s + 1
    Wo = (W + 2 * p - d * (k - 1) - 1) // s + 1
    HoWo = Ho * Wo
    Hp, Wp = H + 2 * p, W + 2 * p

    # Per-generation tuning: lane quantum for Cout, scoped-VMEM budget.
    kind = _device_kind()
    lane_q = 256 if ("v5" not in kind and Cout >= 256) else 128
    Cp = _round_up(Cout, lane_q)
    Cinp = _round_up(Cin, 8)
    vmem_limit = 48 * 1024 * 1024 if "v7" in kind else 96 * 1024 * 1024

    # NHWC, bf16, spatial zero-pad for the conv, channel pad to Cinp (zero channels
    # are inert).  This is the ONLY input copy; no k*k patch matrix is built.
    # TODO(synk): for chained BasicConv blocks, accept/return NHWC directly to
    # drop both layout transposes.
    x_nhwc = jnp.transpose(x, (0, 2, 3, 1)).astype(jnp.bfloat16)
    xp = jnp.pad(x_nhwc, ((0, 0), (p, p), (p, p), (0, Cinp - Cin)))

    # weight (Cout, Cin, k, k) -> tap-major (k*k, Cinp, Cp) bf16.
    w_t = jnp.transpose(weight, (2, 3, 1, 0)).reshape(k * k, Cin, Cout)
    w_p = jnp.pad(w_t.astype(jnp.bfloat16),
                  ((0, 0), (0, Cinp - Cin), (0, Cp - Cout)))

    gamma_p = jnp.pad(gamma.astype(jnp.float32), (0, Cp - Cout))
    beta_p = jnp.pad(beta.astype(jnp.float32), (0, Cp - Cout))

    cost1 = pl.CostEstimate(
        flops=2 * N * HoWo * Cinp * Cp * k * k,
        transcendentals=0,
        bytes_accessed=(N * Hp * Wp * Cinp * 2 + k * k * Cinp * Cp * 2
                        + N * HoWo * Cp * 2 + 2 * N * Cp * 4),
    )

    kern1 = functools.partial(_conv_stats_kernel, k=k, dil=d, stride=s, Ho=Ho, Wo=Wo)

    # ---- Pass 1: per-image fused im2col + conv + partial stats ------------------
    # TODO(synk): very large feature maps (Ho*Wo*Cp exceeding VMEM) would need
    # output-row tiling with halo DMA (pl.ANY + make_async_copy); per-image blocks
    # are sufficient for typical BasicConv feature maps.
    y_bf16, psum, pssq = pl.pallas_call(
        kern1,
        out_shape=(
            jax.ShapeDtypeStruct((N, HoWo, Cp), jnp.bfloat16),
            jax.ShapeDtypeStruct((N, 1, Cp), jnp.float32),
            jax.ShapeDtypeStruct((N, 1, Cp), jnp.float32),
        ),
        grid=(N,),
        in_specs=[
            pl.BlockSpec((None, Hp, Wp, Cinp), lambda n: (n, 0, 0, 0)),
            pl.BlockSpec((k * k, Cinp, Cp), lambda n: (0, 0, 0)),
        ],
        out_specs=(
            pl.BlockSpec((None, HoWo, Cp), lambda n: (n, 0, 0)),
            pl.BlockSpec((None, 1, Cp), lambda n: (n, 0, 0)),
            pl.BlockSpec((None, 1, Cp), lambda n: (n, 0, 0)),
        ),
        compiler_params=pltpu.CompilerParams(
            dimension_semantics=("parallel",),      # no grid-resident accumulator
            vmem_limit_bytes=vmem_limit,
        ),
        cost_estimate=cost1,
    )(xp, w_p)

    # ---- Tiny finalize (Cp elements) in plain JAX: fold BN into scale/shift -----
    if bn:
        m_f = jnp.float32(N * HoWo)
        csum = jnp.sum(psum[:, 0, :], axis=0, keepdims=True)      # (1, Cp)
        cssq = jnp.sum(pssq[:, 0, :], axis=0, keepdims=True)      # (1, Cp)
        mean = csum / m_f
        var = jnp.maximum(cssq / m_f - mean * mean, 0.0)          # biased var
        inv_std = jax.lax.rsqrt(var + _EPS)
        scale = gamma_p[None, :] * inv_std                        # 0 in padded channels
        shift = beta_p[None, :] - mean * scale
    else:
        scale = jnp.ones((1, Cp), jnp.float32)
        shift = jnp.zeros((1, Cp), jnp.float32)

    # ---- Pass 2: affine + ReLU over large lane-dense row tiles -------------------
    TM2 = HoWo if HoWo <= 2048 else 1024
    kern2 = functools.partial(_bn_relu_kernel, relu=relu)
    out_pad = pl.pallas_call(
        kern2,
        out_shape=jax.ShapeDtypeStruct((N, HoWo, Cp), jnp.float32),
        grid=(N, pl.cdiv(HoWo, TM2)),
        in_specs=[
            pl.BlockSpec((None, TM2, Cp), lambda n, i: (n, i, 0)),
            pl.BlockSpec((1, Cp), lambda n, i: (0, 0)),
            pl.BlockSpec((1, Cp), lambda n, i: (0, 0)),
        ],
        out_specs=pl.BlockSpec((None, TM2, Cp), lambda n, i: (n, i, 0)),
        compiler_params=pltpu.CompilerParams(
            dimension_semantics=("parallel", "parallel"),
            vmem_limit_bytes=vmem_limit,
        ),
    )(y_bf16, scale, shift)

    out = out_pad[:, :, :Cout].reshape(N, Ho, Wo, Cout)
    return jnp.transpose(out, (0, 3, 1, 2))                       # back to NCHW


def _reference(x, weight, gamma, beta, *, stride, padding, dilation):
    y = jax.lax.conv_general_dilated(
        x, weight, window_strides=(stride, stride),
        padding=((padding, padding), (padding, padding)),
        rhs_dilation=(dilation, dilation),
        dimension_numbers=("NCHW", "OIHW", "NCHW"))
    mean = jnp.mean(y, axis=(0, 2, 3), keepdims=True)
    var = jnp.mean((y - mean) ** 2, axis=(0, 2, 3), keepdims=True)
    y = (y - mean) * jax.lax.rsqrt(var + _EPS)
    y = y * gamma[None, :, None, None] + beta[None, :, None, None]
    return jnp.maximum(y, 0.0)


if __name__ == "__main__":
    # BasicConv(in_planes=4, out_planes=8, kernel_size=3, stride=1, padding=1,
    #           relu=True, bn=True, bias=False)
    N, Cin, H, W = 2, 4, 16, 16
    Cout, ksz, stride, pad = 8, 3, 1, 1

    key = jax.random.PRNGKey(0)
    kx, kw_, kg, kb = jax.random.split(key, 4)
    x = jax.random.normal(kx, (N, Cin, H, W), dtype=jnp.float32)
    weight = jax.random.normal(kw_, (Cout, Cin, ksz, ksz), dtype=jnp.float32) * 0.1
    gamma = 1.0 + 0.1 * jax.random.normal(kg, (Cout,), dtype=jnp.float32)
    beta = 0.1 * jax.random.normal(kb, (Cout,), dtype=jnp.float32)

    out = basic_conv_forward(x, weight, gamma, beta,
                             kernel_size=ksz, stride=stride, padding=pad)
    out = jax.block_until_ready(out)
    assert out.shape == (N, Cout, H, W)

    ref = _reference(x, weight, gamma, beta, stride=stride, padding=pad, dilation=1)
    max_err = float(jnp.max(jnp.abs(out - ref)))
    # bf16 MXU operands + bf16 intermediate -> loose tolerance vs f32 reference.
    assert max_err < 0.1, f"mismatch vs reference: {max_err}"

    print("KERNEL_OK")
</pallas_src>

<mosaic_0001>
module attributes {stable_mosaic.version = 11 : i64} {
  func.func @_conv_stats_kernel(%arg0: i32, %arg1: memref<1x18x18x8xbf16, #tpu.memory_space<vmem>>, %arg2: memref<9x8x128xbf16, #tpu.memory_space<vmem>>, %arg3: memref<1x256x128xbf16, #tpu.memory_space<vmem>>, %arg4: memref<1x1x128xf32, #tpu.memory_space<vmem>>, %arg5: memref<1x1x128xf32, #tpu.memory_space<vmem>>) attributes {dimension_semantics = [#tpu.dimension_semantics<parallel>], iteration_bounds = array<i64: 2>, scalar_prefetch = 0 : i64, scratch_operands = 0 : i64, tpu.core_type = #tpu.core_type<tc>, window_params = [{transform_indices = @transform_0, window_bounds = array<i64: 1, 18, 18, 8>}, {pipeline_mode = #tpu.pipeline_mode<synchronous>, transform_indices = @transform_1, window_bounds = array<i64: 9, 8, 128>}, {transform_indices = @transform_2, window_bounds = array<i64: 1, 256, 128>}, {transform_indices = @transform_3, window_bounds = array<i64: 1, 1, 128>}, {transform_indices = @transform_4, window_bounds = array<i64: 1, 1, 128>}]} {
    %cst = arith.constant 0.000000e+00 : f32
    %0 = vector.broadcast %cst : f32 to vector<256x128xf32>
    %c0 = arith.constant 0 : index
    %c0_0 = arith.constant 0 : index
    %c0_1 = arith.constant 0 : index
    %c0_2 = arith.constant 0 : index
    %1 = vector.load %arg1[%c0, %c0_0, %c0_1, %c0_2] : memref<1x18x18x8xbf16, #tpu.memory_space<vmem>>, vector<1x16x16x8xbf16>
    %2 = vector.shape_cast %1 : vector<1x16x16x8xbf16> to vector<16x16x8xbf16>
    %3 = vector.shape_cast %2 : vector<16x16x8xbf16> to vector<256x8xbf16>
    %c0_3 = arith.constant 0 : index
    %c0_4 = arith.constant 0 : index
    %c0_5 = arith.constant 0 : index
    %4 = vector.load %arg2[%c0_3, %c0_4, %c0_5] : memref<9x8x128xbf16, #tpu.memory_space<vmem>>, vector<1x8x128xbf16>
    %5 = vector.shape_cast %4 : vector<1x8x128xbf16> to vector<8x128xbf16>
    %cst_6 = arith.constant dense<0.000000e+00> : vector<256x128xf32>
    %6 = tpu.matmul %3, %5, %cst_6 {dimension_numbers = #tpu.dot_dimension_numbers<[1], [0], [0], [1], [0, 0, 1, 1], [], []>} : vector<256x8xbf16>, vector<8x128xbf16>, vector<256x128xf32> -> vector<256x128xf32>
    %7 = arith.addf %0, %6 : vector<256x128xf32>
    %c0_7 = arith.constant 0 : index
    %c0_8 = arith.constant 0 : index
    %c1 = arith.constant 1 : index
    %c0_9 = arith.constant 0 : index
    %8 = vector.load %arg1[%c0_7, %c0_8, %c1, %c0_9] : memref<1x18x18x8xbf16, #tpu.memory_space<vmem>>, vector<1x16x16x8xbf16>
    %9 = vector.shape_cast %8 : vector<1x16x16x8xbf16> to vector<16x16x8xbf16>
    %10 = vector.shape_cast %9 : vector<16x16x8xbf16> to vector<256x8xbf16>
    %c1_10 = arith.constant 1 : index
    %c0_11 = arith.constant 0 : index
    %c0_12 = arith.constant 0 : index
    %11 = vector.load %arg2[%c1_10, %c0_11, %c0_12] : memref<9x8x128xbf16, #tpu.memory_space<vmem>>, vector<1x8x128xbf16>
    %12 = vector.shape_cast %11 : vector<1x8x128xbf16> to vector<8x128xbf16>
    %cst_13 = arith.constant dense<0.000000e+00> : vector<256x128xf32>
    %13 = tpu.matmul %10, %12, %cst_13 {dimension_numbers = #tpu.dot_dimension_numbers<[1], [0], [0], [1], [0, 0, 1, 1], [], []>} : vector<256x8xbf16>, vector<8x128xbf16>, vector<256x128xf32> -> vector<256x128xf32>
    %14 = arith.addf %7, %13 : vector<256x128xf32>
    %c0_14 = arith.constant 0 : index
    %c0_15 = arith.constant 0 : index
    %c2 = arith.constant 2 : index
    %c0_16 = arith.constant 0 : index
    %15 = vector.load %arg1[%c0_14, %c0_15, %c2, %c0_16] : memref<1x18x18x8xbf16, #tpu.memory_space<vmem>>, vector<1x16x16x8xbf16>
    %16 = vector.shape_cast %15 : vector<1x16x16x8xbf16> to vector<16x16x8xbf16>
    %17 = vector.shape_cast %16 : vector<16x16x8xbf16> to vector<256x8xbf16>
    %c2_17 = arith.constant 2 : index
    %c0_18 = arith.constant 0 : index
    %c0_19 = arith.constant 0 : index
    %18 = vector.load %arg2[%c2_17, %c0_18, %c0_19] : memref<9x8x128xbf16, #tpu.memory_space<vmem>>, vector<1x8x128xbf16>
    %19 = vector.shape_cast %18 : vector<1x8x128xbf16> to vector<8x128xbf16>
    %cst_20 = arith.constant dense<0.000000e+00> : vector<256x128xf32>
    %20 = tpu.matmul %17, %19, %cst_20 {dimension_numbers = #tpu.dot_dimension_numbers<[1], [0], [0], [1], [0, 0, 1, 1], [], []>} : vector<256x8xbf16>, vector<8x128xbf16>, vector<256x128xf32> -> vector<256x128xf32>
    %21 = arith.addf %14, %20 : vector<256x128xf32>
    %c0_21 = arith.constant 0 : index
    %c1_22 = arith.constant 1 : index
    %c0_23 = arith.constant 0 : index
    %c0_24 = arith.constant 0 : index
    %22 = vector.load %arg1[%c0_21, %c1_22, %c0_23, %c0_24] : memref<1x18x18x8xbf16, #tpu.memory_space<vmem>>, vector<1x16x16x8xbf16>
    %23 = vector.shape_cast %22 : vector<1x16x16x8xbf16> to vector<16x16x8xbf16>
    %24 = vector.shape_cast %23 : vector<16x16x8xbf16> to vector<256x8xbf16>
    %c3 = arith.constant 3 : index
    %c0_25 = arith.constant 0 : index
    %c0_26 = arith.constant 0 : index
    %25 = vector.load %arg2[%c3, %c0_25, %c0_26] : memref<9x8x128xbf16, #tpu.memory_space<vmem>>, vector<1x8x128xbf16>
    %26 = vector.shape_cast %25 : vector<1x8x128xbf16> to vector<8x128xbf16>
    %cst_27 = arith.constant dense<0.000000e+00> : vector<256x128xf32>
    %27 = tpu.matmul %24, %26, %cst_27 {dimension_numbers = #tpu.dot_dimension_numbers<[1], [0], [0], [1], [0, 0, 1, 1], [], []>} : vector<256x8xbf16>, vector<8x128xbf16>, vector<256x128xf32> -> vector<256x128xf32>
    %28 = arith.addf %21, %27 : vector<256x128xf32>
    %c0_28 = arith.constant 0 : index
    %c1_29 = arith.constant 1 : index
    %c1_30 = arith.constant 1 : index
    %c0_31 = arith.constant 0 : index
    %29 = vector.load %arg1[%c0_28, %c1_29, %c1_30, %c0_31] : memref<1x18x18x8xbf16, #tpu.memory_space<vmem>>, vector<1x16x16x8xbf16>
    %30 = vector.shape_cast %29 : vector<1x16x16x8xbf16> to vector<16x16x8xbf16>
    %31 = vector.shape_cast %30 : vector<16x16x8xbf16> to vector<256x8xbf16>
    %c4 = arith.constant 4 : index
    %c0_32 = arith.constant 0 : index
    %c0_33 = arith.constant 0 : index
    %32 = vector.load %arg2[%c4, %c0_32, %c0_33] : memref<9x8x128xbf16, #tpu.memory_space<vmem>>, vector<1x8x128xbf16>
    %33 = vector.shape_cast %32 : vector<1x8x128xbf16> to vector<8x128xbf16>
    %cst_34 = arith.constant dense<0.000000e+00> : vector<256x128xf32>
    %34 = tpu.matmul %31, %33, %cst_34 {dimension_numbers = #tpu.dot_dimension_numbers<[1], [0], [0], [1], [0, 0, 1, 1], [], []>} : vector<256x8xbf16>, vector<8x128xbf16>, vector<256x128xf32> -> vector<256x128xf32>
    %35 = arith.addf %28, %34 : vector<256x128xf32>
    %c0_35 = arith.constant 0 : index
    %c1_36 = arith.constant 1 : index
    %c2_37 = arith.constant 2 : index
    %c0_38 = arith.constant 0 : index
    %36 = vector.load %arg1[%c0_35, %c1_36, %c2_37, %c0_38] : memref<1x18x18x8xbf16, #tpu.memory_space<vmem>>, vector<1x16x16x8xbf16>
    %37 = vector.shape_cast %36 : vector<1x16x16x8xbf16> to vector<16x16x8xbf16>
    %38 = vector.shape_cast %37 : vector<16x16x8xbf16> to vector<256x8xbf16>
    %c5 = arith.constant 5 : index
    %c0_39 = arith.constant 0 : index
    %c0_40 = arith.constant 0 : index
    %39 = vector.load %arg2[%c5, %c0_39, %c0_40] : memref<9x8x128xbf16, #tpu.memory_space<vmem>>, vector<1x8x128xbf16>
    %40 = vector.shape_cast %39 : vector<1x8x128xbf16> to vector<8x128xbf16>
    %cst_41 = arith.constant dense<0.000000e+00> : vector<256x128xf32>
    %41 = tpu.matmul %38, %40, %cst_41 {dimension_numbers = #tpu.dot_dimension_numbers<[1], [0], [0], [1], [0, 0, 1, 1], [], []>} : vector<256x8xbf16>, vector<8x128xbf16>, vector<256x128xf32> -> vector<256x128xf32>
    %42 = arith.addf %35, %41 : vector<256x128xf32>
    %c0_42 = arith.constant 0 : index
    %c2_43 = arith.constant 2 : index
    %c0_44 = arith.constant 0 : index
    %c0_45 = arith.constant 0 : index
    %43 = vector.load %arg1[%c0_42, %c2_43, %c0_44, %c0_45] : memref<1x18x18x8xbf16, #tpu.memory_space<vmem>>, vector<1x16x16x8xbf16>
    %44 = vector.shape_cast %43 : vector<1x16x16x8xbf16> to vector<16x16x8xbf16>
    %45 = vector.shape_cast %44 : vector<16x16x8xbf16> to vector<256x8xbf16>
    %c6 = arith.constant 6 : index
    %c0_46 = arith.constant 0 : index
    %c0_47 = arith.constant 0 : index
    %46 = vector.load %arg2[%c6, %c0_46, %c0_47] : memref<9x8x128xbf16, #tpu.memory_space<vmem>>, vector<1x8x128xbf16>
    %47 = vector.shape_cast %46 : vector<1x8x128xbf16> to vector<8x128xbf16>
    %cst_48 = arith.constant dense<0.000000e+00> : vector<256x128xf32>
    %48 = tpu.matmul %45, %47, %cst_48 {dimension_numbers = #tpu.dot_dimension_numbers<[1], [0], [0], [1], [0, 0, 1, 1], [], []>} : vector<256x8xbf16>, vector<8x128xbf16>, vector<256x128xf32> -> vector<256x128xf32>
    %49 = arith.addf %42, %48 : vector<256x128xf32>
    %c0_49 = arith.constant 0 : index
    %c2_50 = arith.constant 2 : index
    %c1_51 = arith.constant 1 : index
    %c0_52 = arith.constant 0 : index
    %50 = vector.load %arg1[%c0_49, %c2_50, %c1_51, %c0_52] : memref<1x18x18x8xbf16, #tpu.memory_space<vmem>>, vector<1x16x16x8xbf16>
    %51 = vector.shape_cast %50 : vector<1x16x16x8xbf16> to vector<16x16x8xbf16>
    %52 = vector.shape_cast %51 : vector<16x16x8xbf16> to vector<256x8xbf16>
    %c7 = arith.constant 7 : index
    %c0_53 = arith.constant 0 : index
    %c0_54 = arith.constant 0 : index
    %53 = vector.load %arg2[%c7, %c0_53, %c0_54] : memref<9x8x128xbf16, #tpu.memory_space<vmem>>, vector<1x8x128xbf16>
    %54 = vector.shape_cast %53 : vector<1x8x128xbf16> to vector<8x128xbf16>
    %cst_55 = arith.constant dense<0.000000e+00> : vector<256x128xf32>
    %55 = tpu.matmul %52, %54, %cst_55 {dimension_numbers = #tpu.dot_dimension_numbers<[1], [0], [0], [1], [0, 0, 1, 1], [], []>} : vector<256x8xbf16>, vector<8x128xbf16>, vector<256x128xf32> -> vector<256x128xf32>
    %56 = arith.addf %49, %55 : vector<256x128xf32>
    %c0_56 = arith.constant 0 : index
    %c2_57 = arith.constant 2 : index
    %c2_58 = arith.constant 2 : index
    %c0_59 = arith.constant 0 : index
    %57 = vector.load %arg1[%c0_56, %c2_57, %c2_58, %c0_59] : memref<1x18x18x8xbf16, #tpu.memory_space<vmem>>, vector<1x16x16x8xbf16>
    %58 = vector.shape_cast %57 : vector<1x16x16x8xbf16> to vector<16x16x8xbf16>
    %59 = vector.shape_cast %58 : vector<16x16x8xbf16> to vector<256x8xbf16>
    %c8 = arith.constant 8 : index
    %c0_60 = arith.constant 0 : index
    %c0_61 = arith.constant 0 : index
    %60 = vector.load %arg2[%c8, %c0_60, %c0_61] : memref<9x8x128xbf16, #tpu.memory_space<vmem>>, vector<1x8x128xbf16>
    %61 = vector.shape_cast %60 : vector<1x8x128xbf16> to vector<8x128xbf16>
    %cst_62 = arith.constant dense<0.000000e+00> : vector<256x128xf32>
    %62 = tpu.matmul %59, %61, %cst_62 {dimension_numbers = #tpu.dot_dimension_numbers<[1], [0], [0], [1], [0, 0, 1, 1], [], []>} : vector<256x8xbf16>, vector<8x128xbf16>, vector<256x128xf32> -> vector<256x128xf32>
    %63 = arith.addf %56, %62 : vector<256x128xf32>
    %64 = arith.truncf %63 : vector<256x128xf32> to vector<256x128xbf16>
    %c0_63 = arith.constant 0 : index
    %c0_64 = arith.constant 0 : index
    %c0_65 = arith.constant 0 : index
    %65 = vector.load %arg3[%c0_63, %c0_64, %c0_65] : memref<1x256x128xbf16, #tpu.memory_space<vmem>>, vector<1x256x128xbf16>
    %66 = vector.shape_cast %65 : vector<1x256x128xbf16> to vector<256x128xbf16>
    %67 = vector.shape_cast %64 : vector<256x128xbf16> to vector<1x256x128xbf16>
    tpu.vector_store %arg3[%c0_63, %c0_64, %c0_65], %67 {strides = array<i32>} : memref<1x256x128xbf16, #tpu.memory_space<vmem>>, vector<1x256x128xbf16>,
    %cst_66 = arith.constant dense<0.000000e+00> : vector<128xf32>
    %68 = vector.multi_reduction <add>, %63, %cst_66 [0] : vector<256x128xf32> to vector<128xf32>
    %69 = vector.shape_cast %68 : vector<128xf32> to vector<1x128xf32>
    %c0_67 = arith.constant 0 : index
    %c0_68 = arith.constant 0 : index
    %c0_69 = arith.constant 0 : index
    %70 = vector.load %arg4[%c0_67, %c0_68, %c0_69] : memref<1x1x128xf32, #tpu.memory_space<vmem>>, vector<1x1x128xf32>
    %71 = vector.shape_cast %70 : vector<1x1x128xf32> to vector<1x128xf32>
    %72 = vector.shape_cast %69 : vector<1x128xf32> to vector<1x1x128xf32>
    tpu.vector_store %arg4[%c0_67, %c0_68, %c0_69], %72 {strides = array<i32>} : memref<1x1x128xf32, #tpu.memory_space<vmem>>, vector<1x1x128xf32>,
    %73 = arith.mulf %63, %63 : vector<256x128xf32>
    %cst_70 = arith.constant dense<0.000000e+00> : vector<128xf32>
    %74 = vector.multi_reduction <add>, %73, %cst_70 [0] : vector<256x128xf32> to vector<128xf32>
    %75 = vector.shape_cast %74 : vector<128xf32> to vector<1x128xf32>
    %c0_71 = arith.constant 0 : index
    %c0_72 = arith.constant 0 : index
    %c0_73 = arith.constant 0 : index
    %76 = vector.load %arg5[%c0_71, %c0_72, %c0_73] : memref<1x1x128xf32, #tpu.memory_space<vmem>>, vector<1x1x128xf32>
    %77 = vector.shape_cast %76 : vector<1x1x128xf32> to vector<1x128xf32>
    %78 = vector.shape_cast %75 : vector<1x128xf32> to vector<1x1x128xf32>
    tpu.vector_store %arg5[%c0_71, %c0_72, %c0_73], %78 {strides = array<i32>} : memref<1x1x128xf32, #tpu.memory_space<vmem>>, vector<1x1x128xf32>,
    return
  }
  func.func @transform_0(%arg0: i32) -> (i32, i32, i32, i32) {
    %c0_i32 = arith.constant 0 : i32
    %c0_i32_0 = arith.constant 0 : i32
    %c0_i32_1 = arith.constant 0 : i32
    %c0_i32_2 = arith.constant 0 : i32
    return %arg0, %c0_i32, %c0_i32_0, %c0_i32_1 : i32, i32, i32, i32
  }
  func.func @transform_1(%arg0: i32) -> (i32, i32, i32) {
    %c0_i32 = arith.constant 0 : i32
    %c0_i32_0 = arith.constant 0 : i32
    %c0_i32_1 = arith.constant 0 : i32
    %c0_i32_2 = arith.constant 0 : i32
    return %c0_i32, %c0_i32_0, %c0_i32_1 : i32, i32, i32
  }
  func.func @transform_2(%arg0: i32) -> (i32, i32, i32) {
    %c0_i32 = arith.constant 0 : i32
    %c0_i32_0 = arith.constant 0 : i32
    %c0_i32_1 = arith.constant 0 : i32
    return %arg0, %c0_i32, %c0_i32_0 : i32, i32, i32
  }
  func.func @transform_3(%arg0: i32) -> (i32, i32, i32) {
    %c0_i32 = arith.constant 0 : i32
    %c0_i32_0 = arith.constant 0 : i32
    %c0_i32_1 = arith.constant 0 : i32
    return %arg0, %c0_i32, %c0_i32_0 : i32, i32, i32
  }
  func.func @transform_4(%arg0: i32) -> (i32, i32, i32) {
    %c0_i32 = arith.constant 0 : i32
    %c0_i32_0 = arith.constant 0 : i32
    %c0_i32_1 = arith.constant 0 : i32
    return %arg0, %c0_i32, %c0_i32_0 : i32, i32, i32
  }
}

module attributes {stable_mosaic.version = 11 : i64} {
  func.func @_bn_relu_kernel(%arg0: i32, %arg1: i32, %arg2: memref<1x256x128xbf16, #tpu.memory_space<vmem>>, %arg3: memref<1x128xf32, #tpu.memory_space<vmem>>, %arg4: memref<1x128xf32, #tpu.memory_space<vmem>>, %arg5: memref<1x256x128xf32, #tpu.memory_space<vmem>>) attributes {dimension_semantics = [#tpu.dimension_semantics<parallel>, #tpu.dimension_semantics<parallel>], iteration_bounds = array<i64: 2, 1>, scalar_prefetch = 0 : i64, scratch_operands = 0 : i64, tpu.core_type = #tpu.core_type<tc>, window_params = [{transform_indices = @transform_0, window_bounds = array<i64: 1, 256, 128>}, {pipeline_mode = #tpu.pipeline_mode<synchronous>, transform_indices = @transform_1, window_bounds = array<i64: 1, 128>}, {pipeline_mode = #tpu.pipeline_mode<synchronous>, transform_indices = @transform_2, window_bounds = array<i64: 1, 128>}, {transform_indices = @transform_3, window_bounds = array<i64: 1, 256, 128>}]} {
    %c0 = arith.constant 0 : index
    %c0_0 = arith.constant 0 : index
    %c0_1 = arith.constant 0 : index
    %0 = vector.load %arg2[%c0, %c0_0, %c0_1] : memref<1x256x128xbf16, #tpu.memory_space<vmem>>, vector<1x256x128xbf16>
    %1 = vector.shape_cast %0 : vector<1x256x128xbf16> to vector<256x128xbf16>
    %2 = arith.extf %1 : vector<256x128xbf16> to vector<256x128xf32>
    %c0_2 = arith.constant 0 : index
    %c0_3 = arith.constant 0 : index
    %3 = vector.load %arg3[%c0_2, %c0_3] : memref<1x128xf32, #tpu.memory_space<vmem>>, vector<1x128xf32>
    %4 = vector.broadcast %3 : vector<1x128xf32> to vector<256x128xf32>
    %5 = arith.mulf %2, %4 : vector<256x128xf32>
    %c0_4 = arith.constant 0 : index
    %c0_5 = arith.constant 0 : index
    %6 = vector.load %arg4[%c0_4, %c0_5] : memref<1x128xf32, #tpu.memory_space<vmem>>, vector<1x128xf32>
    %7 = vector.broadcast %6 : vector<1x128xf32> to vector<256x128xf32>
    %8 = arith.addf %5, %7 : vector<256x128xf32>
    %cst = arith.constant 0.000000e+00 : f32
    %9 = vector.broadcast %cst : f32 to vector<256x128xf32>
    %10 = arith.maximumf %8, %9 : vector<256x128xf32>
    %c0_6 = arith.constant 0 : index
    %c0_7 = arith.constant 0 : index
    %c0_8 = arith.constant 0 : index
    %11 = vector.load %arg5[%c0_6, %c0_7, %c0_8] : memref<1x256x128xf32, #tpu.memory_space<vmem>>, vector<1x256x128xf32>
    %12 = vector.shape_cast %11 : vector<1x256x128xf32> to vector<256x128xf32>
    %13 = vector.shape_cast %10 : vector<256x128xf32> to vector<1x256x128xf32>
    tpu.vector_store %arg5[%c0_6, %c0_7, %c0_8], %13 {strides = array<i32>} : memref<1x256x128xf32, #tpu.memory_space<vmem>>, vector<1x256x128xf32>,
    return
  }
  func.func @transform_0(%arg0: i32, %arg1: i32) -> (i32, i32, i32) {
    %c0_i32 = arith.constant 0 : i32
    %c0_i32_0 = arith.constant 0 : i32
    return %arg0, %arg1, %c0_i32 : i32, i32, i32
  }
  func.func @transform_1(%arg0: i32, %arg1: i32) -> (i32, i32) {
    %c0_i32 = arith.constant 0 : i32
    %c0_i32_0 = arith.constant 0 : i32
    %c0_i32_1 = arith.constant 0 : i32
    return %c0_i32, %c0_i32_0 : i32, i32
  }
  func.func @transform_2(%arg0: i32, %arg1: i32) -> (i32, i32) {
    %c0_i32 = arith.constant 0 : i32
    %c0_i32_0 = arith.constant 0 : i32
    %c0_i32_1 = arith.constant 0 : i32
    return %c0_i32, %c0_i32_0 : i32, i32
  }
  func.func @transform_3(%arg0: i32, %arg1: i32) -> (i32, i32, i32) {
    %c0_i32 = arith.constant 0 : i32
    %c0_i32_0 = arith.constant 0 : i32
    return %arg0, %arg1, %c0_i32 : i32, i32, i32
  }
}

</mosaic_0001>

<llo_original>
// kernel: basic_conv_forward.3
$region0: #{basic_conv_forward.3}
  #allocation0 [shape = 'u32[]', space=smem, size = 0x4, offset = 0x4, fixed_abs, tag = 'smem constant byte address 0x4 - core index']
  #allocation1 [shape = 'u32[144,128]{1,0:T(1,128)}', space=vmem, size = 0x12000, scoped, tag = 'internal scratch']
  %s0 = inlined_call_operand.hbm [shape: bf16[2,256,128], index: 0, kind: input, shape index: {}]
  %s1 = inlined_call_operand.hbm [shape: f32[1,128], index: 1, kind: input, shape index: {}]
  %s2 = inlined_call_operand.hbm [shape: f32[1,128], index: 2, kind: input, shape index: {}]
  %s3 = inlined_call_operand.hbm [shape: f32[2,256,128], index: 3, kind: output, shape index: {}]
  %s4 = sld [smem:[#allocation0]]
  $region57: #{basic_conv_forward.3} parent=0
    _
  %s6 = ssub.s32 1, %s4
  %s7 = scalar_select 0, %s6, %s4
  $region1: #{basic_conv_forward.3} parent=0
    #allocation2 [shape = 'u8[131072]{0}', space=vmem, size = 0x20000, scoped, tag = 'input window, operand 0']
    #allocation3 [shape = 's32[2]{0}', space=sflag, size = 0x8, scoped, tag = 'scoped memory for basic_conv_forward.3']
    #allocation4 [shape = 's32[2]{0}', space=sflag, size = 0x8, scoped, tag = 'scoped memory for basic_conv_forward.3']
    #allocation5 [shape = 'u8[512]{0}', space=vmem, size = 0x400, scoped, tag = 'input window, operand 1, single buffered']
    #allocation6 [shape = 's32[1]{0}', space=sflag, size = 0x4, scoped, tag = 'scoped memory for basic_conv_forward.3']
    #allocation7 [shape = 'u8[512]{0}', space=vmem, size = 0x400, scoped, tag = 'input window, operand 2, single buffered']
    #allocation8 [shape = 'u8[262144]{0}', space=vmem, size = 0x40000, scoped, tag = 'output window, operand 0']
    %8 = vsyncpa [#allocation3], 0
    %s9 = scalar_lea.sflag [#allocation3], 1
    %10 = vsyncpa %s9, 0
    %11 = vsyncpa [#allocation6], 0
    %12 = vsyncpa [#allocation4], 0
    %s13 = scalar_lea.sflag [#allocation4], 1
    %14 = vsyncpa %s13, 0
    loop: start=0, step=1, limit=4
    $region2: #{basic_conv_forward.3} parent=1 // loop_pre_header
      _
    $region3: #{basic_conv_forward.3} parent=1 // loop_header
      %s16 = sphi 0, %s20
      %p17 = scmp.ge.s32.totalorder %s16, 4
      %s23 = sphi 0, %s35
      %s24 = sphi 0, %s31
      %s25 = sphi 0, %s23
      %s26 = sphi 0, %s24
      %s27 = sphi 0, %s25
      %s28 = sphi 0, %s26
      %s40 = sphi 0, %s42
      %s43 = sphi 0, %s40
      %s44 = sphi 0, %s43
      %s60 = sphi 0, %s44
      %s64 = sphi 0, %s64
      %s66 = sphi 0, %s64
      %s67 = sphi 0, %s66
      %s81 = sphi 0, %s67
      %s85 = sphi 0, %s85
      %s87 = sphi 0, %s85
      %s88 = sphi 0, %s87
      %s102 = sphi 0, %s88
      %s110 = sphi 0, %s112
      %s113 = sphi 0, %s110
      %s114 = sphi 0, %s113
      %s130 = sphi 0, %s114
    $region4: #{basic_conv_forward.3} parent=1 // loop_header_branch
      %19 = sbr.rel (%p17) target = $region8
    $region5: #{basic_conv_forward.3} parent=1 // loop_body
      %s21 = ssub.s32 %s16, 1
      %s22 = ssub.s32 %s16, 2
      %s29 = sadd.s32 1, %s24
      %p30 = scmp.ge.s32.totalorder %s29, 1
      %s31 = scalar_select %p30, 0, %s29
      %s32 = sadd.s32 1, %s23
      %s33 = scalar_select %p30, %s32, %s23
      %p34 = scmp.ge.s32.totalorder %s33, 2
      %s35 = scalar_select %p34, 0, %s33
      %s36 = ssub.s32 %s23, %s35
      %s37 = ssub.s32 %s24, %s31
      %s38 = sor.u32 %s36, %s37
      %p39 = scmp.eq.s32.totalorder %s38, 0
      %s41 = sadd.s32 %s40, 1
      %s42 = scalar_select %p39, %s40, %s41
      %p45 = pneg %p39
      %p46 = scmp.eq.s32.totalorder %s16, 1
      %p47 = por %p45, %p46
      %p48 = scmp.ne.s32.totalorder %s40, %s43
      %p49 = scmp.eq.s32.totalorder %s16, 0
      %p50 = por %p48, %p49
      %p51 = scmp.ne.s32.totalorder %s40, %s43
      %p52 = scmp.eq.s32.totalorder %s21, 1
      %p53 = por %p51, %p52
      %p54 = scmp.ne.s32.totalorder %s43, %s44
      %p55 = scmp.eq.s32.totalorder %s21, 0
      %p56 = por %p54, %p55
      %p57 = scmp.ne.s32.totalorder %s43, %s44
      %p58 = scmp.eq.s32.totalorder %s22, 1
      %p59 = por %p57, %p58
      %p61 = scmp.ne.s32.totalorder %s44, %s60
      %p62 = scmp.eq.s32.totalorder %s22, 0
      %p63 = por %p61, %p62
      %s65 = sadd.s32 %s64, 1
      %p68 = scmp.eq.s32.totalorder %s16, 1
      %p69 = scmp.ne.s32.totalorder %s64, %s66
      %p70 = scmp.eq.s32.totalorder %s16, 0
      %p71 = por %p69, %p70
      %p72 = scmp.ne.s32.totalorder %s64, %s66
      %p73 = scmp.eq.s32.totalorder %s21, 1
      %p74 = por %p72, %p73
      %p75 = scmp.ne.s32.totalorder %s66, %s67
      %p76 = scmp.eq.s32.totalorder %s21, 0
      %p77 = por %p75, %p76
      %p78 = scmp.ne.s32.totalorder %s66, %s67
      %p79 = scmp.eq.s32.totalorder %s22, 1
      %p80 = por %p78, %p79
      %p82 = scmp.ne.s32.totalorder %s67, %s81
      %p83 = scmp.eq.s32.totalorder %s22, 0
      %p84 = por %p82, %p83
      %s86 = sadd.s32 %s85, 1
      %p89 = scmp.eq.s32.totalorder %s16, 1
      %p90 = scmp.ne.s32.totalorder %s85, %s87
      %p91 = scmp.eq.s32.totalorder %s16, 0
      %p92 = por %p90, %p91
      %p93 = scmp.ne.s32.totalorder %s85, %s87
      %p94 = scmp.eq.s32.totalorder %s21, 1
      %p95 = por %p93, %p94
      %p96 = scmp.ne.s32.totalorder %s87, %s88
      %p97 = scmp.eq.s32.totalorder %s21, 0
      %p98 = por %p96, %p97
      %p99 = scmp.ne.s32.totalorder %s87, %s88
      %p100 = scmp.eq.s32.totalorder %s22, 1
      %p101 = por %p99, %p100
      %p103 = scmp.ne.s32.totalorder %s88, %s102
      %p104 = scmp.eq.s32.totalorder %s22, 0
      %p105 = por %p103, %p104
      %s106 = ssub.s32 %s23, %s35
      %s107 = ssub.s32 %s24, %s31
      %s108 = sor.u32 %s106, %s107
      %p109 = scmp.eq.s32.totalorder %s108, 0
      %s111 = sadd.s32 %s110, 1
      %s112 = scalar_select %p109, %s110, %s111
      %p115 = pneg %p109
      %p116 = scmp.eq.s32.totalorder %s16, 1
      %p117 = por %p115, %p116
      %p118 = scmp.ne.s32.totalorder %s110, %s113
      %p119 = scmp.eq.s32.totalorder %s16, 0
      %p120 = por %p118, %p119
      %p121 = scmp.ne.s32.totalorder %s110, %s113
      %p122 = scmp.eq.s32.totalorder %s21, 1
      %p123 = por %p121, %p122
      %p124 = scmp.ne.s32.totalorder %s113, %s114
      %p125 = scmp.eq.s32.totalorder %s21, 0
      %p126 = por %p124, %p125
      %p127 = scmp.ne.s32.totalorder %s113, %s114
      %p128 = scmp.eq.s32.totalorder %s22, 1
      %p129 = por %p127, %p128
      %p131 = scmp.ne.s32.totalorder %s114, %s130
      %p132 = scmp.eq.s32.totalorder %s22, 0
      %p133 = por %p131, %p132
      %p134 = scmp.le.s32.totalorder 1, %s16
      %p135 = scmp.lt.s32.totalorder %s16, 3
      %p136 = pnand %p134, %p135
      %p137 = pneg %p136
      // Predicated region
      $region9: #{basic_conv_forward.3} parent=5 // pred_check
        _
      $region10: #{basic_conv_forward.3} parent=5 // pred_check_branch
        %139 = sbr.rel (%p136) target = $region12
      $region11: #{basic_conv_forward.3} parent=5 // pred_region
        %s140 = ssub.s32 %s16, 1
        // Predicated region
        $region13: #{basic_conv_forward.3} parent=11 // pred_check
          %p141 = pneg %p77
        $region14: #{basic_conv_forward.3} parent=11 // pred_check_branch
          %143 = sbr.rel (%p141) target = $region16
        $region15: #{basic_conv_forward.3} parent=11 // pred_region
          %s145 = ssub.s32 16, 16
          %146 = vsyncadd [#allocation6], %s145
          %s148 = sshll.u32 [#allocation5], 4
          %s149 = int_to_ptr.vmem [resolvable:$true] %s148
          %151 = dma.hbm_to_vmem [thread:$0]  %s1, 16, %s149, [#allocation6]
        $region16: #{basic_conv_forward.3} parent=11 // pred_fallthru
          _
        // Predicated region
        $region17: #{basic_conv_forward.3} parent=11 // pred_check
          %p152 = pneg %p98
        $region18: #{basic_conv_forward.3} parent=11 // pred_check_branch
          %154 = sbr.rel (%p152) target = $region20
        $region19: #{basic_conv_forward.3} parent=11 // pred_region
          %s156 = ssub.s32 16, 16
          %157 = vsyncadd [#allocation6], %s156
          %s159 = sshll.u32 [#allocation7], 4
          %s160 = int_to_ptr.vmem [resolvable:$true] %s159
          %162 = dma.hbm_to_vmem [thread:$0]  %s2, 16, %s160, [#allocation6]
        $region20: #{basic_conv_forward.3} parent=11 // pred_fallthru
          _
      $region12: #{basic_conv_forward.3} parent=5 // pred_fallthru
        _
      %p163 = scmp.lt.s32.totalorder %s16, 2
      // Predicated region
      $region21: #{basic_conv_forward.3} parent=5 // pred_check
        %p164 = pneg %p163
      $region22: #{basic_conv_forward.3} parent=5 // pred_check_branch
        %166 = sbr.rel (%p164) target = $region24
      $region23: #{basic_conv_forward.3} parent=5 // pred_region
        // Predicated region
        $region25: #{basic_conv_forward.3} parent=23 // pred_check
          %p167 = pneg %p50
        $region26: #{basic_conv_forward.3} parent=23 // pred_check_branch
          %169 = sbr.rel (%p167) target = $region28
        $region27: #{basic_conv_forward.3} parent=23 // pred_region
          %s170 = sand.u32 %s40, 1
          %s171 = scalar_lea.sflag [#allocation3], %s170
          %s172 = sand.u32 %s40, 1
          %s173 = smul.addr %s172, 128
          %s174 = scalar_lea.vmem [#allocation2], %s173
          %s175 = smul.u32 32, %s24
          %s177 = ssub.s32 2048, 2048
          %178 = vsyncadd %s171, %s177
          %s179 = smul.addr %s23, 32
          %s180 = sadd.s32 %s175, %s179
          %s181 = smul.addr %s180, 64
          %s182 = scalar_lea.hbm %s0, %s181
          %s183 = sshll.u32 %s174, 4
          %s184 = int_to_ptr.vmem [resolvable:$true] %s183
          %189 = dma.hbm_to_vmem [thread:$0]  %s182, 2048, %s184, %s171, 64, 64, 4
        $region28: #{basic_conv_forward.3} parent=23 // pred_fallthru
          _
      $region24: #{basic_conv_forward.3} parent=5 // pred_fallthru
        _
      %p190 = scmp.le.s32.totalorder 1, %s16
      %p191 = scmp.lt.s32.totalorder %s16, 3
      %p192 = pnand %p190, %p191
      %p193 = pneg %p192
      // Predicated region
      $region29: #{basic_conv_forward.3} parent=5 // pred_check
        _
      $region30: #{basic_conv_forward.3} parent=5 // pred_check_branch
        %195 = sbr.rel (%p192) target = $region32
      $region31: #{basic_conv_forward.3} parent=5 // pred_region
        %s196 = ssub.s32 %s16, 1
        %s197 = sand.u32 %s43, 1
        %s198 = scalar_lea.sflag [#allocation3], %s197
        %s199 = sand.u32 %s43, 1
        %s200 = smul.addr %s199, 128
        %s201 = scalar_lea.vmem [#allocation2], %s200
        // Predicated region
        $region33: #{basic_conv_forward.3} parent=31 // pred_check
          %p202 = pneg %p56
        $region34: #{basic_conv_forward.3} parent=31 // pred_check_branch
          %204 = sbr.rel (%p202) target = $region36
        $region35: #{basic_conv_forward.3} parent=31 // pred_region
          %205 = dma.done %s198, 2048
        $region36: #{basic_conv_forward.3} parent=31 // pred_fallthru
          _
        // Predicated region
        $region37: #{basic_conv_forward.3} parent=31 // pred_check
          %p206 = pneg %p77
        $region38: #{basic_conv_forward.3} parent=31 // pred_check_branch
          %208 = sbr.rel (%p206) target = $region40
        $region39: #{basic_conv_forward.3} parent=31 // pred_region
          %209 = dma.done [#allocation6], 16
        $region40: #{basic_conv_forward.3} parent=31 // pred_fallthru
          _
        // Predicated region
        $region41: #{basic_conv_forward.3} parent=31 // pred_check
          %p210 = pneg %p98
        $region42: #{basic_conv_forward.3} parent=31 // pred_check_branch
          %212 = sbr.rel (%p210) target = $region44
        $region43: #{basic_conv_forward.3} parent=31 // pred_region
          %213 = dma.done [#allocation6], 16
        $region44: #{basic_conv_forward.3} parent=31 // pred_fallthru
          _
        %s214 = sand.u32 %s43, 1
        %s215 = scalar_lea.sflag [#allocation3], %s214
        %s216 = sand.u32 %s43, 1
        %s217 = smul.addr %s216, 128
        %s218 = scalar_lea.vmem [#allocation2], %s217
        %p219 = pneg %p56
        %p220 = pneg %p53
        %p221 = pneg %p77
        %p222 = pneg %p74
        %p223 = pneg %p98
        %p224 = pneg %p95
        %p225 = pneg %p126
        %p226 = pneg %p123
        %s227 = sand.u32 %s113, 1
        %s228 = scalar_lea.sflag [#allocation4], %s227
        %s229 = sand.u32 %s113, 1
        %s230 = smul.addr %s229, 256
        %s231 = scalar_lea.vmem [#allocation8], %s230
        %s232 = smul.u32 32, %s26
        %s233 = smul.u32 32, %s26
        %v234 = vld [vmem:[%s201] sm:$0xf]
        %v235 = vld [vmem:[%s201 + $0x4] sm:$0xf]
        %v236 = vld [vmem:[%s201 + $0x8] sm:$0xf]
        %v237 = vld [vmem:[%s201 + $0xc] sm:$0xf]
        %v238 = vld [vmem:[%s201 + $0x10] sm:$0xf]
        %v239 = vld [vmem:[%s201 + $0x14] sm:$0xf]
        %v240 = vld [vmem:[%s201 + $0x18] sm:$0xf]
        %v241 = vld [vmem:[%s201 + $0x1c] sm:$0xf]
        %v242 = vld [vmem:[%s201 + $0x20] sm:$0xf]
        %v243 = vld [vmem:[%s201 + $0x24] sm:$0xf]
        %v244 = vld [vmem:[%s201 + $0x28] sm:$0xf]
        %v245 = vld [vmem:[%s201 + $0x2c] sm:$0xf]
        %v246 = vld [vmem:[%s201 + $0x30] sm:$0xf]
        %v247 = vld [vmem:[%s201 + $0x34] sm:$0xf]
        %v248 = vld [vmem:[%s201 + $0x38] sm:$0xf]
        %v249 = vld [vmem:[%s201 + $0x3c] sm:$0xf]
        %v250 = vld [vmem:[%s201 + $0x40] sm:$0xf]
        %v251 = vld [vmem:[%s201 + $0x44] sm:$0xf]
        %v252 = vld [vmem:[%s201 + $0x48] sm:$0xf]
        %v253 = vld [vmem:[%s201 + $0x4c] sm:$0xf]
        %v254 = vld [vmem:[%s201 + $0x50] sm:$0xf]
        %v255 = vld [vmem:[%s201 + $0x54] sm:$0xf]
        %v256 = vld [vmem:[%s201 + $0x58] sm:$0xf]
        %v257 = vld [vmem:[%s201 + $0x5c] sm:$0xf]
        %v258 = vld [vmem:[%s201 + $0x60] sm:$0xf]
        %v259 = vld [vmem:[%s201 + $0x64] sm:$0xf]
        %v260 = vld [vmem:[%s201 + $0x68] sm:$0xf]
        %v261 = vld [vmem:[%s201 + $0x6c] sm:$0xf]
        %v262 = vld [vmem:[%s201 + $0x70] sm:$0xf]
        %v263 = vld [vmem:[%s201 + $0x74] sm:$0xf]
        %v264 = vld [vmem:[%s201 + $0x78] sm:$0xf]
        %v265 = vld [vmem:[%s201 + $0x7c] sm:$0xf]
        %v266 = vunpack.c.l.bf16 %v234
        %v267 = vunpack.c.l.bf16 %v235
        %v268 = vunpack.c.l.bf16 %v236
        %v269 = vunpack.c.l.bf16 %v237
        %v270 = vunpack.c.l.bf16 %v238
        %v271 = vunpack.c.l.bf16 %v239
        %v272 = vunpack.c.l.bf16 %v240
        %v273 = vunpack.c.l.bf16 %v241
        %v274 = vunpack.c.l.bf16 %v242
        %v275 = vunpack.c.l.bf16 %v243
        %v276 = vunpack.c.l.bf16 %v244
        %v277 = vunpack.c.l.bf16 %v245
        %v278 = vunpack.c.l.bf16 %v246
        %v279 = vunpack.c.l.bf16 %v247
        %v280 = vunpack.c.l.bf16 %v248
        %v281 = vunpack.c.l.bf16 %v249
        %v282 = vunpack.c.l.bf16 %v250
        %v283 = vunpack.c.l.bf16 %v251
        %v284 = vunpack.c.l.bf16 %v252
        %v285 = vunpack.c.l.bf16 %v253
        %v286 = vunpack.c.l.bf16 %v254
        %v287 = vunpack.c.l.bf16 %v255
        %v288 = vunpack.c.l.bf16 %v256
        %v289 = vunpack.c.l.bf16 %v257
        %v290 = vunpack.c.l.bf16 %v258
        %v291 = vunpack.c.l.bf16 %v259
        %v292 = vunpack.c.l.bf16 %v260
        %v293 = vunpack.c.l.bf16 %v261
        %v294 = vunpack.c.l.bf16 %v262
        %v295 = vunpack.c.l.bf16 %v263
        %v296 = vunpack.c.l.bf16 %v264
        %v297 = vunpack.c.l.bf16 %v265
        %v298 = vld [vmem:[#allocation5] sm:$0x1]
        %v300 = vlaneseq
        %v301 = vshrl.u32 %v300, 7
        %v302 = vsub.s32 0, %v301
        %v303 = vrot.slane %v298, %v302
        %v305 = vmul.f32 %v266, %v303
        %v306 = vmul.f32 %v267, %v303
        %v307 = vmul.f32 %v268, %v303
        %v308 = vmul.f32 %v269, %v303
        %v309 = vmul.f32 %v270, %v303
        %v310 = vmul.f32 %v271, %v303
        %v311 = vmul.f32 %v272, %v303
        %v312 = vmul.f32 %v273, %v303
        %v313 = vmul.f32 %v274, %v303
        %v314 = vmul.f32 %v275, %v303
        %v315 = vmul.f32 %v276, %v303
        %v316 = vmul.f32 %v277, %v303
        %v317 = vmul.f32 %v278, %v303
        %v318 = vmul.f32 %v279, %v303
        %v319 = vmul.f32 %v280, %v303
        %v320 = vmul.f32 %v281, %v303
        %v321 = vmul.f32 %v282, %v303
        %v322 = vmul.f32 %v283, %v303
        %v323 = vmul.f32 %v284, %v303
        %v324 = vmul.f32 %v285, %v303
        %v325 = vmul.f32 %v286, %v303
        %v326 = vmul.f32 %v287, %v303
        %v327 = vmul.f32 %v288, %v303
        %v328 = vmul.f32 %v289, %v303
        %v329 = vmul.f32 %v290, %v303
        %v330 = vmul.f32 %v291, %v303
        %v331 = vmul.f32 %v292, %v303
        %v332 = vmul.f32 %v293, %v303
        %v333 = vmul.f32 %v294, %v303
        %v334 = vmul.f32 %v295, %v303
        %v335 = vmul.f32 %v296, %v303
        %v336 = vmul.f32 %v297, %v303
        %v337 = vld [vmem:[#allocation7] sm:$0x1]
        %v339 = vlaneseq
        %v340 = vshrl.u32 %v339, 7
        %v341 = vsub.s32 0, %v340
        %v342 = vrot.slane %v337, %v341
        %v344 = vadd.f32 %v305, %v342
        %v345 = vadd.f32 %v306, %v342
        %v346 = vadd.f32 %v307, %v342
        %v347 = vadd.f32 %v308, %v342
        %v348 = vadd.f32 %v309, %v342
        %v349 = vadd.f32 %v310, %v342
        %v350 = vadd.f32 %v311, %v342
        %v351 = vadd.f32 %v312, %v342
        %v352 = vadd.f32 %v313, %v342
        %v353 = vadd.f32 %v314, %v342
        %v354 = vadd.f32 %v315, %v342
        %v355 = vadd.f32 %v316, %v342
        %v356 = vadd.f32 %v317, %v342
        %v357 = vadd.f32 %v318, %v342
        %v358 = vadd.f32 %v319, %v342
        %v359 = vadd.f32 %v320, %v342
        %v360 = vadd.f32 %v321, %v342
        %v361 = vadd.f32 %v322, %v342
        %v362 = vadd.f32 %v323, %v342
        %v363 = vadd.f32 %v324, %v342
        %v364 = vadd.f32 %v325, %v342
        %v365 = vadd.f32 %v326, %v342
        %v366 = vadd.f32 %v327, %v342
        %v367 = vadd.f32 %v328, %v342
        %v368 = vadd.f32 %v329, %v342
        %v369 = vadd.f32 %v330, %v342
        %v370 = vadd.f32 %v331, %v342
        %v371 = vadd.f32 %v332, %v342
        %v372 = vadd.f32 %v333, %v342
        %v373 = vadd.f32 %v334, %v342
        %v374 = vadd.f32 %v335, %v342
        %v375 = vadd.f32 %v336, %v342
        %v376 = vmax.f32 %v344, 0.0
        %v377 = vmax.f32 %v345, 0.0
        %v378 = vmax.f32 %v346, 0.0
        %v379 = vmax.f32 %v347, 0.0
        %v380 = vmax.f32 %v348, 0.0
        %v381 = vmax.f32 %v349, 0.0
        %v382 = vmax.f32 %v350, 0.0
        %v383 = vmax.f32 %v351, 0.0
        %v384 = vmax.f32 %v352, 0.0
        %v385 = vmax.f32 %v353, 0.0
        %v386 = vmax.f32 %v354, 0.0
        %v387 = vmax.f32 %v355, 0.0
        %v388 = vmax.f32 %v356, 0.0
        %v389 = vmax.f32 %v357, 0.0
        %v390 = vmax.f32 %v358, 0.0
        %v391 = vmax.f32 %v359, 0.0
        %v392 = vmax.f32 %v360, 0.0
        %v393 = vmax.f32 %v361, 0.0
        %v394 = vmax.f32 %v362, 0.0
        %v395 = vmax.f32 %v363, 0.0
        %v396 = vmax.f32 %v364, 0.0
        %v397 = vmax.f32 %v365, 0.0
        %v398 = vmax.f32 %v366, 0.0
        %v399 = vmax.f32 %v367, 0.0
        %v400 = vmax.f32 %v368, 0.0
        %v401 = vmax.f32 %v369, 0.0
        %v402 = vmax.f32 %v370, 0.0
        %v403 = vmax.f32 %v371, 0.0
        %v404 = vmax.f32 %v372, 0.0
        %v405 = vmax.f32 %v373, 0.0
        %v406 = vmax.f32 %v374, 0.0
        %v407 = vmax.f32 %v375, 0.0
        %408 = vst [vmem:[%s231] sm:$0xff] %v376
        %409 = vst [vmem:[%s231 + $0x8] sm:$0xff] %v377
        %410 = vst [vmem:[%s231 + $0x10] sm:$0xff] %v378
        %411 = vst [vmem:[%s231 + $0x18] sm:$0xff] %v379
        %412 = vst [vmem:[%s231 + $0x20] sm:$0xff] %v380
        %413 = vst [vmem:[%s231 + $0x28] sm:$0xff] %v381
        %414 = vst [vmem:[%s231 + $0x30] sm:$0xff] %v382
        %415 = vst [vmem:[%s231 + $0x38] sm:$0xff] %v383
        %416 = vst [vmem:[%s231 + $0x40] sm:$0xff] %v384
        %417 = vst [vmem:[%s231 + $0x48] sm:$0xff] %v385
        %418 = vst [vmem:[%s231 + $0x50] sm:$0xff] %v386
        %419 = vst [vmem:[%s231 + $0x58] sm:$0xff] %v387
        %420 = vst [vmem:[%s231 + $0x60] sm:$0xff] %v388
        %421 = vst [vmem:[%s231 + $0x68] sm:$0xff] %v389
        %422 = vst [vmem:[%s231 + $0x70] sm:$0xff] %v390
        %423 = vst [vmem:[%s231 + $0x78] sm:$0xff] %v391
        %424 = vst [vmem:[%s231 + $0x80] sm:$0xff] %v392
        %425 = vst [vmem:[%s231 + $0x88] sm:$0xff] %v393
        %426 = vst [vmem:[%s231 + $0x90] sm:$0xff] %v394
        %427 = vst [vmem:[%s231 + $0x98] sm:$0xff] %v395
        %428 = vst [vmem:[%s231 + $0xa0] sm:$0xff] %v396
        %429 = vst [vmem:[%s231 + $0xa8] sm:$0xff] %v397
        %430 = vst [vmem:[%s231 + $0xb0] sm:$0xff] %v398
        %431 = vst [vmem:[%s231 + $0xb8] sm:$0xff] %v399
        %432 = vst [vmem:[%s231 + $0xc0] sm:$0xff] %v400
        %433 = vst [vmem:[%s231 + $0xc8] sm:$0xff] %v401
        %434 = vst [vmem:[%s231 + $0xd0] sm:$0xff] %v402
        %435 = vst [vmem:[%s231 + $0xd8] sm:$0xff] %v403
        %436 = vst [vmem:[%s231 + $0xe0] sm:$0xff] %v404
        %437 = vst [vmem:[%s231 + $0xe8] sm:$0xff] %v405
        %438 = vst [vmem:[%s231 + $0xf0] sm:$0xff] %v406
        %439 = vst [vmem:[%s231 + $0xf8] sm:$0xff] %v407
        %s440 = sand.u32 %s113, 1
        %s441 = scalar_lea.sflag [#allocation4], %s440
        %s442 = sand.u32 %s113, 1
        %s443 = smul.addr %s442, 256
        %s444 = scalar_lea.vmem [#allocation8], %s443
        // Predicated region
        $region45: #{basic_conv_forward.3} parent=31 // pred_check
          %p445 = pneg %p123
        $region46: #{basic_conv_forward.3} parent=31 // pred_check_branch
          %447 = sbr.rel (%p445) target = $region48
        $region47: #{basic_conv_forward.3} parent=31 // pred_region
          %s448 = smul.u32 32, %s26
          %s450 = ssub.s32 4096, 4096
          %451 = vsyncadd %s441, %s450
          %s452 = smul.addr %s25, 32
          %s453 = sadd.s32 %s448, %s452
          %s454 = smul.addr %s453, 128
          %s455 = scalar_lea.hbm %s3, %s454
          %s456 = sshll.u32 %s444, 4
          %s457 = int_to_ptr.vmem [resolvable:$true] %s456
          %462 = dma.vmem_to_hbm [thread:$0]  %s457, 4096, %s455, %s441, 128, 128, 8
        $region48: #{basic_conv_forward.3} parent=31 // pred_fallthru
          _
      $region32: #{basic_conv_forward.3} parent=5 // pred_fallthru
        _
      %p463 = scmp.le.s32.totalorder 2, %s16
      // Predicated region
      $region49: #{basic_conv_forward.3} parent=5 // pred_check
        %p464 = pneg %p463
      $region50: #{basic_conv_forward.3} parent=5 // pred_check_branch
        %466 = sbr.rel (%p464) target = $region52
      $region51: #{basic_conv_forward.3} parent=5 // pred_region
        %s467 = ssub.s32 %s16, 2
        // Predicated region
        $region53: #{basic_conv_forward.3} parent=51 // pred_check
          %p468 = pneg %p129
        $region54: #{basic_conv_forward.3} parent=51 // pred_check_branch
          %470 = sbr.rel (%p468) target = $region56
        $region55: #{basic_conv_forward.3} parent=51 // pred_region
          %s471 = sand.u32 %s114, 1
          %s472 = scalar_lea.sflag [#allocation4], %s471
          %s473 = sand.u32 %s114, 1
          %s474 = smul.addr %s473, 256
          %s475 = scalar_lea.vmem [#allocation8], %s474
          %476 = dma.done %s472, 4096
        $region56: #{basic_conv_forward.3} parent=51 // pred_fallthru
          _
      $region52: #{basic_conv_forward.3} parent=5 // pred_fallthru
        _
    $region6: #{basic_conv_forward.3} parent=1 // loop_footer
      %s20 = sadd.s32 1, %s16
    $region7: #{basic_conv_forward.3} parent=1 // loop_footer_branch
      %15 = sbr.rel target = $region3
    $region8: #{basic_conv_forward.3} parent=1 // loop_exit
      _
    %477 = vsyncpa [#allocation3], 1
    %s478 = scalar_lea.sflag [#allocation3], 1
    %479 = vsyncpa %s478, 1
    %480 = vsyncpa [#allocation6], 1
    %481 = vsyncpa [#allocation4], 1
    %s482 = scalar_lea.sflag [#allocation4], 1
    %483 = vsyncpa %s482, 1

// kernel: basic_conv_forward.2
$region0: #{basic_conv_forward.2}
  #allocation0 [shape = 'u32[]', space=smem, size = 0x4, offset = 0x4, fixed_abs, tag = 'smem constant byte address 0x4 - core index']
  #allocation1 [shape = 'u32[144,128]{1,0:T(1,128)}', space=vmem, size = 0x12000, scoped, tag = 'internal scratch']
  %s0 = inlined_call_operand.hbm [shape: bf16[2,18,18,8], index: 0, kind: input, shape index: {}]
  %s1 = inlined_call_operand.hbm [shape: bf16[9,8,128], index: 1, kind: input, shape index: {}]
  %s2 = inlined_call_operand.hbm [shape: bf16[2,256,128], index: 2, kind: output, shape index: {0}]
  %s3 = inlined_call_operand.hbm [shape: f32[2,1,128], index: 3, kind: output, shape index: {1}]
  %s4 = inlined_call_operand.hbm [shape: f32[2,1,128], index: 4, kind: output, shape index: {2}]
  %5 = xla_tuple %s2, %s3, %s4
  %s6 = sld [smem:[#allocation0]]
  $region65: #{basic_conv_forward.2} parent=0
    _
  %s8 = ssub.s32 1, %s6
  %s9 = scalar_select 0, %s8, %s6
  $region1: #{basic_conv_forward.2} parent=0
    #allocation2 [shape = 'u8[221184]{0}', space=vmem, size = 0x36000, scoped, tag = 'input window, operand 0']
    #allocation3 [shape = 's32[2]{0}', space=sflag, size = 0x8, scoped, tag = 'scoped memory for basic_conv_forward.2']
    #allocation4 [shape = 's32[2]{0}', space=sflag, size = 0x8, scoped, tag = 'scoped memory for basic_conv_forward.2']
    #allocation5 [shape = 'u8[18432]{0}', space=vmem, size = 0x4800, scoped, tag = 'input window, operand 1, single buffered']
    #allocation6 [shape = 's32[1]{0}', space=sflag, size = 0x4, scoped, tag = 'scoped memory for basic_conv_forward.2']
    #allocation7 [shape = 'u8[131072]{0}', space=vmem, size = 0x20000, scoped, tag = 'output window, operand 0']
    #allocation8 [shape = 'u8[1024]{0}', space=vmem, size = 0x400, scoped, tag = 'output window, operand 1']
    #allocation9 [shape = 's32[2]{0}', space=sflag, size = 0x8, scoped, tag = 'scoped memory for basic_conv_forward.2']
    #allocation10 [shape = 'u8[1024]{0}', space=vmem, size = 0x400, scoped, tag = 'output window, operand 2']
    %10 = vsyncpa [#allocation3], 0
    %s11 = scalar_lea.sflag [#allocation3], 1
    %12 = vsyncpa %s11, 0
    %13 = vsyncpa [#allocation6], 0
    %14 = vsyncpa [#allocation4], 0
    %s15 = scalar_lea.sflag [#allocation4], 1
    %16 = vsyncpa %s15, 0
    %17 = vsyncpa [#allocation9], 0
    %s18 = scalar_lea.sflag [#allocation9], 1
    %19 = vsyncpa %s18, 0
    loop: start=0, step=1, limit=4
    $region2: #{basic_conv_forward.2} parent=1 // loop_pre_header
      _
    $region3: #{basic_conv_forward.2} parent=1 // loop_header
      %s21 = sphi 0, %s25
      %p22 = scmp.ge.s32.totalorder %s21, 4
      %s31 = sphi 0, %s33
      %s34 = sphi 0, %s31
      %s35 = sphi 0, %s34
      %s51 = sphi 0, %s35
      %s55 = sphi 0, %s55
      %s57 = sphi 0, %s55
      %s58 = sphi 0, %s57
      %s72 = sphi 0, %s58
      %s78 = sphi 0, %s80
      %s81 = sphi 0, %s78
      %s82 = sphi 0, %s81
      %s98 = sphi 0, %s82
      %s104 = sphi 0, %s106
      %s107 = sphi 0, %s104
      %s108 = sphi 0, %s107
      %s124 = sphi 0, %s108
      %s130 = sphi 0, %s132
      %s133 = sphi 0, %s130
      %s134 = sphi 0, %s133
      %s150 = sphi 0, %s134
    $region4: #{basic_conv_forward.2} parent=1 // loop_header_branch
      %24 = sbr.rel (%p22) target = $region8
    $region5: #{basic_conv_forward.2} parent=1 // loop_body
      %s26 = ssub.s32 %s21, 1
      %s27 = ssub.s32 %s21, 2
      %s28 = sadd.s32 %s21, 1
      %s29 = ssub.s32 %s21, %s28
      %p30 = scmp.eq.s32.totalorder %s29, 0
      %s32 = sadd.s32 %s31, 1
      %s33 = scalar_select %p30, %s31, %s32
      %p36 = pneg %p30
      %p37 = scmp.eq.s32.totalorder %s21, 1
      %p38 = por %p36, %p37
      %p39 = scmp.ne.s32.totalorder %s31, %s34
      %p40 = scmp.eq.s32.totalorder %s21, 0
      %p41 = por %p39, %p40
      %p42 = scmp.ne.s32.totalorder %s31, %s34
      %p43 = scmp.eq.s32.totalorder %s26, 1
      %p44 = por %p42, %p43
      %p45 = scmp.ne.s32.totalorder %s34, %s35
      %p46 = scmp.eq.s32.totalorder %s26, 0
      %p47 = por %p45, %p46
      %p48 = scmp.ne.s32.totalorder %s34, %s35
      %p49 = scmp.eq.s32.totalorder %s27, 1
      %p50 = por %p48, %p49
      %p52 = scmp.ne.s32.totalorder %s35, %s51
      %p53 = scmp.eq.s32.totalorder %s27, 0
      %p54 = por %p52, %p53
      %s56 = sadd.s32 %s55, 1
      %p59 = scmp.eq.s32.totalorder %s21, 1
      %p60 = scmp.ne.s32.totalorder %s55, %s57
      %p61 = scmp.eq.s32.totalorder %s21, 0
      %p62 = por %p60, %p61
      %p63 = scmp.ne.s32.totalorder %s55, %s57
      %p64 = scmp.eq.s32.totalorder %s26, 1
      %p65 = por %p63, %p64
      %p66 = scmp.ne.s32.totalorder %s57, %s58
      %p67 = scmp.eq.s32.totalorder %s26, 0
      %p68 = por %p66, %p67
      %p69 = scmp.ne.s32.totalorder %s57, %s58
      %p70 = scmp.eq.s32.totalorder %s27, 1
      %p71 = por %p69, %p70
      %p73 = scmp.ne.s32.totalorder %s58, %s72
      %p74 = scmp.eq.s32.totalorder %s27, 0
      %p75 = por %p73, %p74
      %s76 = ssub.s32 %s21, %s28
      %p77 = scmp.eq.s32.totalorder %s76, 0
      %s79 = sadd.s32 %s78, 1
      %s80 = scalar_select %p77, %s78, %s79
      %p83 = pneg %p77
      %p84 = scmp.eq.s32.totalorder %s21, 1
      %p85 = por %p83, %p84
      %p86 = scmp.ne.s32.totalorder %s78, %s81
      %p87 = scmp.eq.s32.totalorder %s21, 0
      %p88 = por %p86, %p87
      %p89 = scmp.ne.s32.totalorder %s78, %s81
      %p90 = scmp.eq.s32.totalorder %s26, 1
      %p91 = por %p89, %p90
      %p92 = scmp.ne.s32.totalorder %s81, %s82
      %p93 = scmp.eq.s32.totalorder %s26, 0
      %p94 = por %p92, %p93
      %p95 = scmp.ne.s32.totalorder %s81, %s82
      %p96 = scmp.eq.s32.totalorder %s27, 1
      %p97 = por %p95, %p96
      %p99 = scmp.ne.s32.totalorder %s82, %s98
      %p100 = scmp.eq.s32.totalorder %s27, 0
      %p101 = por %p99, %p100
      %s102 = ssub.s32 %s21, %s28
      %p103 = scmp.eq.s32.totalorder %s102, 0
      %s105 = sadd.s32 %s104, 1
      %s106 = scalar_select %p103, %s104, %s105
      %p109 = pneg %p103
      %p110 = scmp.eq.s32.totalorder %s21, 1
      %p111 = por %p109, %p110
      %p112 = scmp.ne.s32.totalorder %s104, %s107
      %p113 = scmp.eq.s32.totalorder %s21, 0
      %p114 = por %p112, %p113
      %p115 = scmp.ne.s32.totalorder %s104, %s107
      %p116 = scmp.eq.s32.totalorder %s26, 1
      %p117 = por %p115, %p116
      %p118 = scmp.ne.s32.totalorder %s107, %s108
      %p119 = scmp.eq.s32.totalorder %s26, 0
      %p120 = por %p118, %p119
      %p121 = scmp.ne.s32.totalorder %s107, %s108
      %p122 = scmp.eq.s32.totalorder %s27, 1
      %p123 = por %p121, %p122
      %p125 = scmp.ne.s32.totalorder %s108, %s124
      %p126 = scmp.eq.s32.totalorder %s27, 0
      %p127 = por %p125, %p126
      %s128 = ssub.s32 %s21, %s28
      %p129 = scmp.eq.s32.totalorder %s128, 0
      %s131 = sadd.s32 %s130, 1
      %s132 = scalar_select %p129, %s130, %s131
      %p135 = pneg %p129
      %p136 = scmp.eq.s32.totalorder %s21, 1
      %p137 = por %p135, %p136
      %p138 = scmp.ne.s32.totalorder %s130, %s133
      %p139 = scmp.eq.s32.totalorder %s21, 0
      %p140 = por %p138, %p139
      %p141 = scmp.ne.s32.totalorder %s130, %s133
      %p142 = scmp.eq.s32.totalorder %s26, 1
      %p143 = por %p141, %p142
      %p144 = scmp.ne.s32.totalorder %s133, %s134
      %p145 = scmp.eq.s32.totalorder %s26, 0
      %p146 = por %p144, %p145
      %p147 = scmp.ne.s32.totalorder %s133, %s134
      %p148 = scmp.eq.s32.totalorder %s27, 1
      %p149 = por %p147, %p148
      %p151 = scmp.ne.s32.totalorder %s134, %s150
      %p152 = scmp.eq.s32.totalorder %s27, 0
      %p153 = por %p151, %p152
      %p154 = scmp.le.s32.totalorder 1, %s21
      %p155 = scmp.lt.s32.totalorder %s21, 3
      %p156 = pnand %p154, %p155
      %p157 = pneg %p156
      // Predicated region
      $region9: #{basic_conv_forward.2} parent=5 // pred_check
        _
      $region10: #{basic_conv_forward.2} parent=5 // pred_check_branch
        %159 = sbr.rel (%p156) target = $region12
      $region11: #{basic_conv_forward.2} parent=5 // pred_region
        %s160 = ssub.s32 %s21, 1
        // Predicated region
        $region13: #{basic_conv_forward.2} parent=11 // pred_check
          %p161 = pneg %p68
        $region14: #{basic_conv_forward.2} parent=11 // pred_check_branch
          %163 = sbr.rel (%p161) target = $region16
        $region15: #{basic_conv_forward.2} parent=11 // pred_region
          %s165 = ssub.s32 576, 576
          %166 = vsyncadd [#allocation6], %s165
          %s167 = sshll.u32 [#allocation5], 4
          %s168 = int_to_ptr.vmem [resolvable:$true] %s167
          %173 = dma.hbm_to_vmem [thread:$0]  %s1, 576, %s168, [#allocation6], 64, 64, 4
        $region16: #{basic_conv_forward.2} parent=11 // pred_fallthru
          _
      $region12: #{basic_conv_forward.2} parent=5 // pred_fallthru
        _
      %p174 = scmp.lt.s32.totalorder %s21, 2
      // Predicated region
      $region17: #{basic_conv_forward.2} parent=5 // pred_check
        %p175 = pneg %p174
      $region18: #{basic_conv_forward.2} parent=5 // pred_check_branch
        %177 = sbr.rel (%p175) target = $region20
      $region19: #{basic_conv_forward.2} parent=5 // pred_region
        // Predicated region
        $region21: #{basic_conv_forward.2} parent=19 // pred_check
          %p178 = pneg %p41
        $region22: #{basic_conv_forward.2} parent=19 // pred_check_branch
          %180 = sbr.rel (%p178) target = $region24
        $region23: #{basic_conv_forward.2} parent=19 // pred_region
          %s181 = sand.u32 %s31, 1
          %s182 = scalar_lea.sflag [#allocation3], %s181
          %s183 = sand.u32 %s31, 1
          %s184 = smul.addr %s183, 216
          %s185 = scalar_lea.vmem [#allocation2], %s184
          %s187 = ssub.s32 3456, 3456
          %188 = vsyncadd %s182, %s187
          %s189 = smul.addr %s21, 54
          %s190 = smul.addr %s189, 64
          %s191 = scalar_lea.hbm %s0, %s190
          %s192 = sshll.u32 %s185, 4
          %s193 = int_to_ptr.vmem [resolvable:$true] %s192
          %198 = dma.hbm_to_vmem [thread:$0]  %s191, 3456, %s193, %s182, 64, 64, 4
        $region24: #{basic_conv_forward.2} parent=19 // pred_fallthru
          _
      $region20: #{basic_conv_forward.2} parent=5 // pred_fallthru
        _
      %p199 = scmp.le.s32.totalorder 1, %s21
      %p200 = scmp.lt.s32.totalorder %s21, 3
      %p201 = pnand %p199, %p200
      %p202 = pneg %p201
      // Predicated region
      $region25: #{basic_conv_forward.2} parent=5 // pred_check
        _
      $region26: #{basic_conv_forward.2} parent=5 // pred_check_branch
        %204 = sbr.rel (%p201) target = $region28
      $region27: #{basic_conv_forward.2} parent=5 // pred_region
        %s205 = ssub.s32 %s21, 1
        %s206 = sand.u32 %s34, 1
        %s207 = scalar_lea.sflag [#allocation3], %s206
        %s208 = sand.u32 %s34, 1
        %s209 = smul.addr %s208, 216
        %s210 = scalar_lea.vmem [#allocation2], %s209
        // Predicated region
        $region29: #{basic_conv_forward.2} parent=27 // pred_check
          %p211 = pneg %p47
        $region30: #{basic_conv_forward.2} parent=27 // pred_check_branch
          %213 = sbr.rel (%p211) target = $region32
        $region31: #{basic_conv_forward.2} parent=27 // pred_region
          %214 = dma.done %s207, 3456
        $region32: #{basic_conv_forward.2} parent=27 // pred_fallthru
          _
        // Predicated region
        $region33: #{basic_conv_forward.2} parent=27 // pred_check
          %p215 = pneg %p68
        $region34: #{basic_conv_forward.2} parent=27 // pred_check_branch
          %217 = sbr.rel (%p215) target = $region36
        $region35: #{basic_conv_forward.2} parent=27 // pred_region
          %218 = dma.done [#allocation6], 576
        $region36: #{basic_conv_forward.2} parent=27 // pred_fallthru
          _
        %s219 = sand.u32 %s34, 1
        %s220 = scalar_lea.sflag [#allocation3], %s219
        %s221 = sand.u32 %s34, 1
        %s222 = smul.addr %s221, 216
        %s223 = scalar_lea.vmem [#allocation2], %s222
        %p224 = pneg %p47
        %p225 = pneg %p44
        %p226 = pneg %p68
        %p227 = pneg %p65
        %p228 = pneg %p94
        %p229 = pneg %p91
        %s230 = sand.u32 %s81, 1
        %s231 = scalar_lea.sflag [#allocation4], %s230
        %s232 = sand.u32 %s81, 1
        %s233 = smul.addr %s232, 128
        %s234 = scalar_lea.vmem [#allocation7], %s233
        %p235 = pneg %p120
        %p236 = pneg %p117
        %s237 = sand.u32 %s26, 1
        %s238 = scalar_lea.sflag [#allocation9], %s237
        %s239 = sand.u32 %s107, 1
        %s240 = scalar_lea.vmem [#allocation8], %s239
        %p241 = pneg %p146
        %p242 = pneg %p143
        %s243 = sand.u32 %s26, 1
        %s244 = scalar_lea.sflag [#allocation9], %s243
        %s245 = sand.u32 %s133, 1
        %s246 = scalar_lea.vmem [#allocation10], %s245
        %v248 = vld [vmem:[%s210] sm:$0xf]
        %v249 = vld [vmem:[%s210 + $0x4] sm:$0xf]
        %v250 = vld [vmem:[%s210 + $0xc] sm:$0xf]
        %v251 = vld [vmem:[%s210 + $0x10] sm:$0xf]
        %v252 = vld [vmem:[%s210 + $0x18] sm:$0xf]
        %v253 = vld [vmem:[%s210 + $0x1c] sm:$0xf]
        %v254 = vld [vmem:[%s210 + $0x24] sm:$0xf]
        %v255 = vld [vmem:[%s210 + $0x28] sm:$0xf]
        %v256 = vld [vmem:[%s210 + $0x30] sm:$0xf]
        %v257 = vld [vmem:[%s210 + $0x34] sm:$0xf]
        %v258 = vld [vmem:[%s210 + $0x3c] sm:$0xf]
        %v259 = vld [vmem:[%s210 + $0x40] sm:$0xf]
        %v260 = vld [vmem:[%s210 + $0x48] sm:$0xf]
        %v261 = vld [vmem:[%s210 + $0x4c] sm:$0xf]
        %v262 = vld [vmem:[%s210 + $0x54] sm:$0xf]
        %v263 = vld [vmem:[%s210 + $0x58] sm:$0xf]
        %v264 = vld [vmem:[%s210 + $0x60] sm:$0xf]
        %v265 = vld [vmem:[%s210 + $0x64] sm:$0xf]
        %v266 = vld [vmem:[%s210 + $0x6c] sm:$0xf]
        %v267 = vld [vmem:[%s210 + $0x70] sm:$0xf]
        %v268 = vld [vmem:[%s210 + $0x78] sm:$0xf]
        %v269 = vld [vmem:[%s210 + $0x7c] sm:$0xf]
        %v270 = vld [vmem:[%s210 + $0x84] sm:$0xf]
        %v271 = vld [vmem:[%s210 + $0x88] sm:$0xf]
        %v272 = vld [vmem:[%s210 + $0x90] sm:$0xf]
        %v273 = vld [vmem:[%s210 + $0x94] sm:$0xf]
        %v274 = vld [vmem:[%s210 + $0x9c] sm:$0xf]
        %v275 = vld [vmem:[%s210 + $0xa0] sm:$0xf]
        %v276 = vld [vmem:[%s210 + $0xa8] sm:$0xf]
        %v277 = vld [vmem:[%s210 + $0xac] sm:$0xf]
        %v278 = vld [vmem:[%s210 + $0xb4] sm:$0xf]
        %v279 = vld [vmem:[%s210 + $0xb8] sm:$0xf]
        %v280 = vld [vmem:[#allocation5] sm:$0xf]
        %v281 = vld [vmem:[%s210 + $0x8] sm:$0x1]
        %v282 = vld [vmem:[%s210 + $0x14] sm:$0x1]
        %v283 = vld [vmem:[%s210 + $0x20] sm:$0x1]
        %v284 = vld [vmem:[%s210 + $0x2c] sm:$0x1]
        %v285 = vld [vmem:[%s210 + $0x38] sm:$0x1]
        %v286 = vld [vmem:[%s210 + $0x44] sm:$0x1]
        %v287 = vld [vmem:[%s210 + $0x50] sm:$0x1]
        %v288 = vld [vmem:[%s210 + $0x5c] sm:$0x1]
        %v289 = vld [vmem:[%s210 + $0x68] sm:$0x1]
        %v290 = vld [vmem:[%s210 + $0x74] sm:$0x1]
        %v291 = vld [vmem:[%s210 + $0x80] sm:$0x1]
        %v292 = vld [vmem:[%s210 + $0x8c] sm:$0x1]
        %v293 = vld [vmem:[%s210 + $0x98] sm:$0x1]
        %v294 = vld [vmem:[%s210 + $0xa4] sm:$0x1]
        %v295 = vld [vmem:[%s210 + $0xb0] sm:$0x1]
        %v296 = vld [vmem:[%s210 + $0xbc] sm:$0x1]
        %vm297 = vsmask.f32 3328
        %vm298 = vsmask.f32 7440
        %vm299 = vmor %vm297, %vm298
        %v301 = vshrl.u32 %v248, 16
        %v303 = vrot.slane %v301, 4
        %v304 = vshll.u32 %v248, 16
        %v306 = vrot.slane %v304, 5
        %v307 = vor.u32 %v303, %v306
        %v308 = vrot.slane %v307, 4
        %v310 = vshll.u32 %v249, 16
        %v312 = vrot.slane %v310, 5
        %v313 = vsel %vm299, %v308, %v312
        %v314 = vshrl.u32 %v249, 16
        %v316 = vrot.slane %v314, 4
        %v317 = vor.u32 %v316, %v312
        %v318 = vrot.slane %v317, 4
        %v320 = vshll.u32 %v281, 16
        %v322 = vrot.slane %v320, 5
        %v323 = vsel %vm299, %v318, %v322
        %v325 = vshrl.u32 %v250, 16
        %v327 = vrot.slane %v325, 4
        %v328 = vshll.u32 %v250, 16
        %v330 = vrot.slane %v328, 5
        %v331 = vor.u32 %v327, %v330
        %v332 = vrot.slane %v331, 4
        %v334 = vshll.u32 %v251, 16
        %v336 = vrot.slane %v334, 5
        %v337 = vsel %vm299, %v332, %v336
        %v338 = vshrl.u32 %v251, 16
        %v340 = vrot.slane %v338, 4
        %v341 = vor.u32 %v340, %v336
        %v342 = vrot.slane %v341, 4
        %v344 = vshll.u32 %v282, 16
        %v346 = vrot.slane %v344, 5
        %v347 = vsel %vm299, %v342, %v346
        %v349 = vshrl.u32 %v252, 16
        %v351 = vrot.slane %v349, 4
        %v352 = vshll.u32 %v252, 16
        %v354 = vrot.slane %v352, 5
        %v355 = vor.u32 %v351, %v354
        %v356 = vrot.slane %v355, 4
        %v358 = vshll.u32 %v253, 16
        %v360 = vrot.slane %v358, 5
        %v361 = vsel %vm299, %v356, %v360
        %v362 = vshrl.u32 %v253, 16
        %v364 = vrot.slane %v362, 4
        %v365 = vor.u32 %v364, %v360
        %v366 = vrot.slane %v365, 4
        %v368 = vshll.u32 %v283, 16
        %v370 = vrot.slane %v368, 5
        %v371 = vsel %vm299, %v366, %v370
        %v373 = vshrl.u32 %v254, 16
        %v375 = vrot.slane %v373, 4
        %v376 = vshll.u32 %v254, 16
        %v378 = vrot.slane %v376, 5
        %v379 = vor.u32 %v375, %v378
        %v380 = vrot.slane %v379, 4
        %v382 = vshll.u32 %v255, 16
        %v384 = vrot.slane %v382, 5
        %v385 = vsel %vm299, %v380, %v384
        %v386 = vshrl.u32 %v255, 16
        %v388 = vrot.slane %v386, 4
        %v389 = vor.u32 %v388, %v384
        %v390 = vrot.slane %v389, 4
        %v392 = vshll.u32 %v284, 16
        %v394 = vrot.slane %v392, 5
        %v395 = vsel %vm299, %v390, %v394
        %v397 = vshrl.u32 %v256, 16
        %v399 = vrot.slane %v397, 4
        %v400 = vshll.u32 %v256, 16
        %v402 = vrot.slane %v400, 5
        %v403 = vor.u32 %v399, %v402
        %v404 = vrot.slane %v403, 4
        %v406 = vshll.u32 %v257, 16
        %v408 = vrot.slane %v406, 5
        %v409 = vsel %vm299, %v404, %v408
        %v410 = vshrl.u32 %v257, 16
        %v412 = vrot.slane %v410, 4
        %v413 = vor.u32 %v412, %v408
        %v414 = vrot.slane %v413, 4
        %v416 = vshll.u32 %v285, 16
        %v418 = vrot.slane %v416, 5
        %v419 = vsel %vm299, %v414, %v418
        %v421 = vshrl.u32 %v258, 16
        %v423 = vrot.slane %v421, 4
        %v424 = vshll.u32 %v258, 16
        %v426 = vrot.slane %v424, 5
        %v427 = vor.u32 %v423, %v426
        %v428 = vrot.slane %v427, 4
        %v430 = vshll.u32 %v259, 16
        %v432 = vrot.slane %v430, 5
        %v433 = vsel %vm299, %v428, %v432
        %v434 = vshrl.u32 %v259, 16
        %v436 = vrot.slane %v434, 4
        %v437 = vor.u32 %v436, %v432
        %v438 = vrot.slane %v437, 4
        %v440 = vshll.u32 %v286, 16
        %v442 = vrot.slane %v440, 5
        %v443 = vsel %vm299, %v438, %v442
        %v445 = vshrl.u32 %v260, 16
        %v447 = vrot.slane %v445, 4
        %v448 = vshll.u32 %v260, 16
        %v450 = vrot.slane %v448, 5
        %v451 = vor.u32 %v447, %v450
        %v452 = vrot.slane %v451, 4
        %v454 = vshll.u32 %v261, 16
        %v456 = vrot.slane %v454, 5
        %v457 = vsel %vm299, %v452, %v456
        %v458 = vshrl.u32 %v261, 16
        %v460 = vrot.slane %v458, 4
        %v461 = vor.u32 %v460, %v456
        %v462 = vrot.slane %v461, 4
        %v464 = vshll.u32 %v287, 16
        %v466 = vrot.slane %v464, 5
        %v467 = vsel %vm299, %v462, %v466
        %v469 = vshrl.u32 %v262, 16
        %v471 = vrot.slane %v469, 4
        %v472 = vshll.u32 %v262, 16
        %v474 = vrot.slane %v472, 5
        %v475 = vor.u32 %v471, %v474
        %v476 = vrot.slane %v475, 4
        %v478 = vshll.u32 %v263, 16
        %v480 = vrot.slane %v478, 5
        %v481 = vsel %vm299, %v476, %v480
        %v482 = vshrl.u32 %v263, 16
        %v484 = vrot.slane %v482, 4
        %v485 = vor.u32 %v484, %v480
        %v486 = vrot.slane %v485, 4
        %v488 = vshll.u32 %v288, 16
        %v490 = vrot.slane %v488, 5
        %v491 = vsel %vm299, %v486, %v490
        %v493 = vshrl.u32 %v264, 16
        %v495 = vrot.slane %v493, 4
        %v496 = vshll.u32 %v264, 16
        %v498 = vrot.slane %v496, 5
        %v499 = vor.u32 %v495, %v498
        %v500 = vrot.slane %v499, 4
        %v502 = vshll.u32 %v265, 16
        %v504 = vrot.slane %v502, 5
        %v505 = vsel %vm299, %v500, %v504
        %v506 = vshrl.u32 %v265, 16
        %v508 = vrot.slane %v506, 4
        %v509 = vor.u32 %v508, %v504
        %v510 = vrot.slane %v509, 4
        %v512 = vshll.u32 %v289, 16
        %v514 = vrot.slane %v512, 5
        %v515 = vsel %vm299, %v510, %v514
        %v517 = vshrl.u32 %v266, 16
        %v519 = vrot.slane %v517, 4
        %v520 = vshll.u32 %v266, 16
        %v522 = vrot.slane %v520, 5
        %v523 = vor.u32 %v519, %v522
        %v524 = vrot.slane %v523, 4
        %v526 = vshll.u32 %v267, 16
        %v528 = vrot.slane %v526, 5
        %v529 = vsel %vm299, %v524, %v528
        %v530 = vshrl.u32 %v267, 16
        %v532 = vrot.slane %v530, 4
        %v533 = vor.u32 %v532, %v528
        %v534 = vrot.slane %v533, 4
        %v536 = vshll.u32 %v290, 16
        %v538 = vrot.slane %v536, 5
        %v539 = vsel %vm299, %v534, %v538
        %v541 = vshrl.u32 %v268, 16
        %v543 = vrot.slane %v541, 4
        %v544 = vshll.u32 %v268, 16
        %v546 = vrot.slane %v544, 5
        %v547 = vor.u32 %v543, %v546
        %v548 = vrot.slane %v547, 4
        %v550 = vshll.u32 %v269, 16
        %v552 = vrot.slane %v550, 5
        %v553 = vsel %vm299, %v548, %v552
        %v554 = vshrl.u32 %v269, 16
        %v556 = vrot.slane %v554, 4
        %v557 = vor.u32 %v556, %v552
        %v558 = vrot.slane %v557, 4
        %v560 = vshll.u32 %v291, 16
        %v562 = vrot.slane %v560, 5
        %v563 = vsel %vm299, %v558, %v562
        %v565 = vshrl.u32 %v270, 16
        %v567 = vrot.slane %v565, 4
        %v568 = vshll.u32 %v270, 16
        %v570 = vrot.slane %v568, 5
        %v571 = vor.u32 %v567, %v570
        %v572 = vrot.slane %v571, 4
        %v574 = vshll.u32 %v271, 16
        %v576 = vrot.slane %v574, 5
        %v577 = vsel %vm299, %v572, %v576
        %v578 = vshrl.u32 %v271, 16
        %v580 = vrot.slane %v578, 4
        %v581 = vor.u32 %v580, %v576
        %v582 = vrot.slane %v581, 4
        %v584 = vshll.u32 %v292, 16
        %v586 = vrot.slane %v584, 5
        %v587 = vsel %vm299, %v582, %v586
        %v589 = vshrl.u32 %v272, 16
        %v591 = vrot.slane %v589, 4
        %v592 = vshll.u32 %v272, 16
        %v594 = vrot.slane %v592, 5
        %v595 = vor.u32 %v591, %v594
        %v596 = vrot.slane %v595, 4
        %v598 = vshll.u32 %v273, 16
        %v600 = vrot.slane %v598, 5
        %v601 = vsel %vm299, %v596, %v600
        %v602 = vshrl.u32 %v273, 16
        %v604 = vrot.slane %v602, 4
        %v605 = vor.u32 %v604, %v600
        %v606 = vrot.slane %v605, 4
        %v608 = vshll.u32 %v293, 16
        %v610 = vrot.slane %v608, 5
        %v611 = vsel %vm299, %v606, %v610
        %v613 = vshrl.u32 %v274, 16
        %v615 = vrot.slane %v613, 4
        %v616 = vshll.u32 %v274, 16
        %v618 = vrot.slane %v616, 5
        %v619 = vor.u32 %v615, %v618
        %v620 = vrot.slane %v619, 4
        %v622 = vshll.u32 %v275, 16
        %v624 = vrot.slane %v622, 5
        %v625 = vsel %vm299, %v620, %v624
        %v626 = vshrl.u32 %v275, 16
        %v628 = vrot.slane %v626, 4
        %v629 = vor.u32 %v628, %v624
        %v630 = vrot.slane %v629, 4
        %v632 = vshll.u32 %v294, 16
        %v634 = vrot.slane %v632, 5
        %v635 = vsel %vm299, %v630, %v634
        %v637 = vshrl.u32 %v276, 16
        %v639 = vrot.slane %v637, 4
        %v640 = vshll.u32 %v276, 16
        %v642 = vrot.slane %v640, 5
        %v643 = vor.u32 %v639, %v642
        %v644 = vrot.slane %v643, 4
        %v646 = vshll.u32 %v277, 16
        %v648 = vrot.slane %v646, 5
        %v649 = vsel %vm299, %v644, %v648
        %v650 = vshrl.u32 %v277, 16
        %v652 = vrot.slane %v650, 4
        %v653 = vor.u32 %v652, %v648
        %v654 = vrot.slane %v653, 4
        %v656 = vshll.u32 %v295, 16
        %v658 = vrot.slane %v656, 5
        %v659 = vsel %vm299, %v654, %v658
        %v661 = vshrl.u32 %v278, 16
        %v663 = vrot.slane %v661, 4
        %v664 = vshll.u32 %v278, 16
        %v666 = vrot.slane %v664, 5
        %v667 = vor.u32 %v663, %v666
        %v668 = vrot.slane %v667, 4
        %v670 = vshll.u32 %v279, 16
        %v672 = vrot.slane %v670, 5
        %v673 = vsel %vm299, %v668, %v672
        %v674 = vshrl.u32 %v279, 16
        %v676 = vrot.slane %v674, 4
        %v677 = vor.u32 %v676, %v672
        %v678 = vrot.slane %v677, 4
        %v680 = vshll.u32 %v296, 16
        %v682 = vrot.slane %v680, 5
        %v683 = vsel %vm299, %v678, %v682
        %s684 = scalar_lea.vmem [#allocation5], 4
        %v685 = vld [vmem:[%s684] sm:$0xf]
        %v686 = vunpack.c.l.b16 %v313
        %v687 = vunpack.c.l.b16 %v323
        %v688 = vunpack.c.l.b16 %v337
        %v689 = vunpack.c.l.b16 %v347
        %v690 = vunpack.c.l.b16 %v361
        %v691 = vunpack.c.l.b16 %v371
        %v692 = vunpack.c.l.b16 %v385
        %v693 = vunpack.c.l.b16 %v395
        %v694 = vunpack.c.l.b16 %v409
        %v695 = vunpack.c.l.b16 %v419
        %v696 = vunpack.c.l.b16 %v433
        %v697 = vunpack.c.l.b16 %v443
        %v698 = vunpack.c.l.b16 %v457
        %v699 = vunpack.c.l.b16 %v467
        %v700 = vunpack.c.l.b16 %v481
        %v701 = vunpack.c.l.b16 %v491
        %v702 = vunpack.c.l.b16 %v505
        %v703 = vunpack.c.l.b16 %v515
        %v704 = vunpack.c.l.b16 %v529
        %v705 = vunpack.c.l.b16 %v539
        %v706 = vunpack.c.l.b16 %v553
        %v707 = vunpack.c.l.b16 %v563
        %v708 = vunpack.c.l.b16 %v577
        %v709 = vunpack.c.l.b16 %v587
        %v710 = vunpack.c.l.b16 %v601
        %v711 = vunpack.c.l.b16 %v611
        %v712 = vunpack.c.l.b16 %v625
        %v713 = vunpack.c.l.b16 %v635
        %v714 = vunpack.c.l.b16 %v649
        %v715 = vunpack.c.l.b16 %v659
        %v716 = vunpack.c.l.b16 %v673
        %v717 = vunpack.c.l.b16 %v683
        %v718 = vpack.c.b16 %v687, %v686
        %v719 = vpack.c.b16 %v689, %v688
        %v720 = vpack.c.b16 %v691, %v690
        %v721 = vpack.c.b16 %v693, %v692
        %v722 = vpack.c.b16 %v695, %v694
        %v723 = vpack.c.b16 %v697, %v696
        %v724 = vpack.c.b16 %v699, %v698
        %v725 = vpack.c.b16 %v701, %v700
        %v726 = vpack.c.b16 %v703, %v702
        %v727 = vpack.c.b16 %v705, %v704
        %v728 = vpack.c.b16 %v707, %v706
        %v729 = vpack.c.b16 %v709, %v708
        %v730 = vpack.c.b16 %v711, %v710
        %v731 = vpack.c.b16 %v713, %v712
        %v732 = vpack.c.b16 %v715, %v714
        %v733 = vpack.c.b16 %v717, %v716
        %vm734 = vcmask 64512
        %v736 = vsel %vm734, %v718, 0
        %v739 = vsel %vm734, %v719, 0
        %v742 = vsel %vm734, %v720, 0
        %v745 = vsel %vm734, %v721, 0
        %v748 = vsel %vm734, %v722, 0
        %v751 = vsel %vm734, %v723, 0
        %v754 = vsel %vm734, %v724, 0
        %v757 = vsel %vm734, %v725, 0
        %v760 = vsel %vm734, %v726, 0
        %v763 = vsel %vm734, %v727, 0
        %v766 = vsel %vm734, %v728, 0
        %v769 = vsel %vm734, %v729, 0
        %v772 = vsel %vm734, %v730, 0
        %v775 = vsel %vm734, %v731, 0
        %v778 = vsel %vm734, %v732, 0
        %v781 = vsel %vm734, %v733, 0
        %vm783 = vcmask 1043456
        %v785 = vsel %vm783, %v685, 0
        %787 = vmatprep.subr.bf16.mxu0 0
        %788 = vmatpush1.bf16.msra.mxu0 %v785
        %789 = vmatprep.subr.bf16.mxu0 0
        %790 = vmatpush1.bf16.msra.mxu0 0
        %791 = vmatprep.subr.bf16.mxu0 0
        %792 = vmatpush1.bf16.msra.mxu0 0
        %793 = vmatprep.subr.bf16.mxu0 0
        %794 = vmatpush1.bf16.msra.mxu0 0
        %795 = vmatprep.subr.bf16.mxu0 0
        %796 = vmatpush1.bf16.msra.mxu0 0
        %797 = vmatprep.subr.bf16.mxu0 0
        %798 = vmatpush1.bf16.msra.mxu0 0
        %799 = vmatprep.subr.bf16.mxu0 0
        %800 = vmatpush1.bf16.msra.mxu0 0
        %801 = vmatprep.subr.bf16.mxu0 0
        %802 = vmatpush1.bf16.msra.mxu0 0
        %803 = vmatprep.subr.bf16.mxu0 0
        %804 = vmatpush1.bf16.msra.mxu0 0
        %805 = vmatprep.subr.bf16.mxu0 0
        %806 = vmatpush1.bf16.msra.mxu0 0
        %807 = vmatprep.subr.bf16.mxu0 0
        %808 = vmatpush1.bf16.msra.mxu0 0
        %809 = vmatprep.subr.bf16.mxu0 0
        %810 = vmatpush1.bf16.msra.mxu0 0
        %811 = vmatprep.subr.bf16.mxu0 0
        %812 = vmatpush1.bf16.msra.mxu0 0
        %813 = vmatprep.subr.bf16.mxu0 0
        %814 = vmatpush1.bf16.msra.mxu0 0
        %815 = vmatprep.subr.bf16.mxu0 0
        %816 = vmatpush1.bf16.msra.mxu0 0
        %817 = vmatprep.subr.bf16.mxu0 0
        %818 = vmatpush1.bf16.msra.mxu0 0
        %819 = vmatprep.mubr.bf16.mxu0 0
        %820 = vmatmul.mubr.bf16.gmra.mrb[0].mxu0 %v736
        %v821 = vpop.f32.mrb[0].mxu0
        %v822 = vadd.f32 0.0, %v821
        %v823 = vpop.f32.mrb[0].mxu0
        %v824 = vpop.f32.mrb[0].mxu0
        %v825 = vadd.f32 0.0, %v824
        %v826 = vpop.f32.mrb[0].mxu0
        %827 = vmatprep.mubr.bf16.mxu0 0
        %828 = vmatmul.mubr.bf16.gmra.mrb[0].mxu0 %v739
        %v829 = vpop.f32.mrb[0].mxu0
        %v830 = vadd.f32 0.0, %v829
        %v831 = vpop.f32.mrb[0].mxu0
        %v832 = vpop.f32.mrb[0].mxu0
        %v833 = vadd.f32 0.0, %v832
        %v834 = vpop.f32.mrb[0].mxu0
        %835 = vmatprep.mubr.bf16.mxu0 0
        %836 = vmatmul.mubr.bf16.gmra.mrb[0].mxu0 %v742
        %v837 = vpop.f32.mrb[0].mxu0
        %v838 = vadd.f32 0.0, %v837
        %v839 = vpop.f32.mrb[0].mxu0
        %v840 = vpop.f32.mrb[0].mxu0
        %v841 = vadd.f32 0.0, %v840
        %v842 = vpop.f32.mrb[0].mxu0
        %843 = vmatprep.mubr.bf16.mxu0 0
        %844 = vmatmul.mubr.bf16.gmra.mrb[0].mxu0 %v745
        %v845 = vpop.f32.mrb[0].mxu0
        %v846 = vadd.f32 0.0, %v845
        %v847 = vpop.f32.mrb[0].mxu0
        %v848 = vpop.f32.mrb[0].mxu0
        %v849 = vadd.f32 0.0, %v848
        %v850 = vpop.f32.mrb[0].mxu0
        %851 = vmatprep.mubr.bf16.mxu0 0
        %852 = vmatmul.mubr.bf16.gmra.mrb[0].mxu0 %v748
        %v853 = vpop.f32.mrb[0].mxu0
        %v854 = vadd.f32 0.0, %v853
        %v855 = vpop.f32.mrb[0].mxu0
        %v856 = vpop.f32.mrb[0].mxu0
        %v857 = vadd.f32 0.0, %v856
        %v858 = vpop.f32.mrb[0].mxu0
        %859 = vmatprep.mubr.bf16.mxu0 0
        %860 = vmatmul.mubr.bf16.gmra.mrb[0].mxu0 %v751
        %v861 = vpop.f32.mrb[0].mxu0
        %v862 = vadd.f32 0.0, %v861
        %v863 = vpop.f32.mrb[0].mxu0
        %v864 = vpop.f32.mrb[0].mxu0
        %v865 = vadd.f32 0.0, %v864
        %v866 = vpop.f32.mrb[0].mxu0
        %867 = vmatprep.mubr.bf16.mxu0 0
        %868 = vmatmul.mubr.bf16.gmra.mrb[0].mxu0 %v754
        %v869 = vpop.f32.mrb[0].mxu0
        %v870 = vadd.f32 0.0, %v869
        %v871 = vpop.f32.mrb[0].mxu0
        %v872 = vpop.f32.mrb[0].mxu0
        %v873 = vadd.f32 0.0, %v872
        %v874 = vpop.f32.mrb[0].mxu0
        %875 = vmatprep.mubr.bf16.mxu0 0
        %876 = vmatmul.mubr.bf16.gmra.mrb[0].mxu0 %v757
        %v877 = vpop.f32.mrb[0].mxu0
        %v878 = vadd.f32 0.0, %v877
        %v879 = vpop.f32.mrb[0].mxu0
        %v880 = vpop.f32.mrb[0].mxu0
        %v881 = vadd.f32 0.0, %v880
        %v882 = vpop.f32.mrb[0].mxu0
        %883 = vmatprep.mubr.bf16.mxu0 0
        %884 = vmatmul.mubr.bf16.gmra.mrb[0].mxu0 %v760
        %v885 = vpop.f32.mrb[0].mxu0
        %v886 = vadd.f32 0.0, %v885
        %v887 = vpop.f32.mrb[0].mxu0
        %v888 = vpop.f32.mrb[0].mxu0
        %v889 = vadd.f32 0.0, %v888
        %v890 = vpop.f32.mrb[0].mxu0
        %891 = vmatprep.mubr.bf16.mxu0 0
        %892 = vmatmul.mubr.bf16.gmra.mrb[0].mxu0 %v763
        %v893 = vpop.f32.mrb[0].mxu0
        %v894 = vadd.f32 0.0, %v893
        %v895 = vpop.f32.mrb[0].mxu0
        %v896 = vpop.f32.mrb[0].mxu0
        %v897 = vadd.f32 0.0, %v896
        %v898 = vpop.f32.mrb[0].mxu0
        %899 = vmatprep.mubr.bf16.mxu0 0
        %900 = vmatmul.mubr.bf16.gmra.mrb[0].mxu0 %v766
        %v901 = vpop.f32.mrb[0].mxu0
        %v902 = vadd.f32 0.0, %v901
        %v903 = vpop.f32.mrb[0].mxu0
        %v904 = vpop.f32.mrb[0].mxu0
        %v905 = vadd.f32 0.0, %v904
        %v906 = vpop.f32.mrb[0].mxu0
        %907 = vmatprep.mubr.bf16.mxu0 0
        %908 = vmatmul.mubr.bf16.gmra.mrb[0].mxu0 %v769
        %v909 = vpop.f32.mrb[0].mxu0
        %v910 = vadd.f32 0.0, %v909
        %v911 = vpop.f32.mrb[0].mxu0
        %v912 = vpop.f32.mrb[0].mxu0
        %v913 = vadd.f32 0.0, %v912
        %v914 = vpop.f32.mrb[0].mxu0
        %915 = vmatprep.mubr.bf16.mxu0 0
        %916 = vmatmul.mubr.bf16.gmra.mrb[0].mxu0 %v772
        %v917 = vpop.f32.mrb[0].mxu0
        %v918 = vadd.f32 0.0, %v917
        %v919 = vpop.f32.mrb[0].mxu0
        %v920 = vpop.f32.mrb[0].mxu0
        %v921 = vadd.f32 0.0, %v920
        %v922 = vpop.f32.mrb[0].mxu0
        %923 = vmatprep.mubr.bf16.mxu0 0
        %924 = vmatmul.mubr.bf16.gmra.mrb[0].mxu0 %v775
        %v925 = vpop.f32.mrb[0].mxu0
        %v926 = vadd.f32 0.0, %v925
        %v927 = vpop.f32.mrb[0].mxu0
        %v928 = vpop.f32.mrb[0].mxu0
        %v929 = vadd.f32 0.0, %v928
        %v930 = vpop.f32.mrb[0].mxu0
        %931 = vmatprep.mubr.bf16.mxu0 0
        %932 = vmatmul.mubr.bf16.gmra.mrb[0].mxu0 %v778
        %v933 = vpop.f32.mrb[0].mxu0
        %v934 = vadd.f32 0.0, %v933
        %v935 = vpop.f32.mrb[0].mxu0
        %v936 = vpop.f32.mrb[0].mxu0
        %v937 = vadd.f32 0.0, %v936
        %v938 = vpop.f32.mrb[0].mxu0
        %939 = vmatprep.mubr.bf16.mxu0 0
        %940 = vmatmul.mubr.bf16.gmra.mrb[0].mxu0 %v781
        %v941 = vpop.f32.mrb[0].mxu0
        %v942 = vadd.f32 0.0, %v941
        %v943 = vpop.f32.mrb[0].mxu0
        %v944 = vpop.f32.mrb[0].mxu0
        %v945 = vadd.f32 0.0, %v944
        %v946 = vpop.f32.mrb[0].mxu0
        %947 = vdwg.mxu0
        %v980 = vunpack.c.l.b16 %v248
        %v981 = vunpack.c.l.b16 %v249
        %v982 = vunpack.c.l.b16 %v250
        %v983 = vunpack.c.l.b16 %v251
        %v984 = vunpack.c.l.b16 %v252
        %v985 = vunpack.c.l.b16 %v253
        %v986 = vunpack.c.l.b16 %v254
        %v987 = vunpack.c.l.b16 %v255
        %v988 = vunpack.c.l.b16 %v256
        %v989 = vunpack.c.l.b16 %v257
        %v990 = vunpack.c.l.b16 %v258
        %v991 = vunpack.c.l.b16 %v259
        %v992 = vunpack.c.l.b16 %v260
        %v993 = vunpack.c.l.b16 %v261
        %v994 = vunpack.c.l.b16 %v262
        %v995 = vunpack.c.l.b16 %v263
        %v996 = vunpack.c.l.b16 %v264
        %v997 = vunpack.c.l.b16 %v265
        %v998 = vunpack.c.l.b16 %v266
        %v999 = vunpack.c.l.b16 %v267
        %v1000 = vunpack.c.l.b16 %v268
        %v1001 = vunpack.c.l.b16 %v269
        %v1002 = vunpack.c.l.b16 %v270
        %v1003 = vunpack.c.l.b16 %v271
        %v1004 = vunpack.c.l.b16 %v272
        %v1005 = vunpack.c.l.b16 %v273
        %v1006 = vunpack.c.l.b16 %v274
        %v1007 = vunpack.c.l.b16 %v275
        %v1008 = vunpack.c.l.b16 %v276
        %v1009 = vunpack.c.l.b16 %v277
        %v1010 = vunpack.c.l.b16 %v278
        %v1011 = vunpack.c.l.b16 %v279
        %v1012 = vpack.c.b16 %v981, %v980
        %v1013 = vpack.c.b16 %v983, %v982
        %v1014 = vpack.c.b16 %v985, %v984
        %v1015 = vpack.c.b16 %v987, %v986
        %v1016 = vpack.c.b16 %v989, %v988
        %v1017 = vpack.c.b16 %v991, %v990
        %v1018 = vpack.c.b16 %v993, %v992
        %v1019 = vpack.c.b16 %v995, %v994
        %v1020 = vpack.c.b16 %v997, %v996
        %v1021 = vpack.c.b16 %v999, %v998
        %v1022 = vpack.c.b16 %v1001, %v1000
        %v1023 = vpack.c.b16 %v1003, %v1002
        %v1024 = vpack.c.b16 %v1005, %v1004
        %v1025 = vpack.c.b16 %v1007, %v1006
        %v1026 = vpack.c.b16 %v1009, %v1008
        %v1027 = vpack.c.b16 %v1011, %v1010
        %v1029 = vsel %vm734, %v1012, 0
        %v1032 = vsel %vm734, %v1013, 0
        %v1035 = vsel %vm734, %v1014, 0
        %v1038 = vsel %vm734, %v1015, 0
        %v1041 = vsel %vm734, %v1016, 0
        %v1044 = vsel %vm734, %v1017, 0
        %v1047 = vsel %vm734, %v1018, 0
        %v1050 = vsel %vm734, %v1019, 0
        %v1053 = vsel %vm734, %v1020, 0
        %v1056 = vsel %vm734, %v1021, 0
        %v1059 = vsel %vm734, %v1022, 0
        %v1062 = vsel %vm734, %v1023, 0
        %v1065 = vsel %vm734, %v1024, 0
        %v1068 = vsel %vm734, %v1025, 0
        %v1071 = vsel %vm734, %v1026, 0
        %v1074 = vsel %vm734, %v1027, 0
        %v1077 = vsel %vm783, %v280, 0
        %1079 = vmatprep.subr.bf16.mxu0 0
        %1080 = vmatpush1.bf16.msra.mxu0 %v1077
        %1081 = vmatprep.subr.bf16.mxu0 0
        %1082 = vmatpush1.bf16.msra.mxu0 0
        %1083 = vmatprep.subr.bf16.mxu0 0
        %1084 = vmatpush1.bf16.msra.mxu0 0
        %1085 = vmatprep.subr.bf16.mxu0 0
        %1086 = vmatpush1.bf16.msra.mxu0 0
        %1087 = vmatprep.subr.bf16.mxu0 0
        %1088 = vmatpush1.bf16.msra.mxu0 0
        %1089 = vmatprep.subr.bf16.mxu0 0
        %1090 = vmatpush1.bf16.msra.mxu0 0
        %1091 = vmatprep.subr.bf16.mxu0 0
        %1092 = vmatpush1.bf16.msra.mxu0 0
        %1093 = vmatprep.subr.bf16.mxu0 0
        %1094 = vmatpush1.bf16.msra.mxu0 0
        %1095 = vmatprep.subr.bf16.mxu0 0
        %1096 = vmatpush1.bf16.msra.mxu0 0
        %1097 = vmatprep.subr.bf16.mxu0 0
        %1098 = vmatpush1.bf16.msra.mxu0 0
        %1099 = vmatprep.subr.bf16.mxu0 0
        %1100 = vmatpush1.bf16.msra.mxu0 0
        %1101 = vmatprep.subr.bf16.mxu0 0
        %1102 = vmatpush1.bf16.msra.mxu0 0
        %1103 = vmatprep.subr.bf16.mxu0 0
        %1104 = vmatpush1.bf16.msra.mxu0 0
        %1105 = vmatprep.subr.bf16.mxu0 0
        %1106 = vmatpush1.bf16.msra.mxu0 0
        %1107 = vmatprep.subr.bf16.mxu0 0
        %1108 = vmatpush1.bf16.msra.mxu0 0
        %1109 = vmatprep.subr.bf16.mxu0 0
        %1110 = vmatpush1.bf16.msra.mxu0 0
        %1111 = vmatprep.mubr.bf16.mxu0 0
        %1112 = vmatmul.mubr.bf16.gmra.mrb[0].mxu0 %v1029
        %v1113 = vpop.f32.mrb[0].mxu0
        %v1114 = vadd.f32 %v822, %v1113
        %v1115 = vpop.f32.mrb[0].mxu0
        %v1116 = vpop.f32.mrb[0].mxu0
        %v1117 = vadd.f32 %v825, %v1116
        %v1118 = vpop.f32.mrb[0].mxu0
        %1119 = vmatprep.mubr.bf16.mxu0 0
        %1120 = vmatmul.mubr.bf16.gmra.mrb[0].mxu0 %v1032
        %v1121 = vpop.f32.mrb[0].mxu0
        %v1122 = vadd.f32 %v830, %v1121
        %v1123 = vpop.f32.mrb[0].mxu0
        %v1124 = vpop.f32.mrb[0].mxu0
        %v1125 = vadd.f32 %v833, %v1124
        %v1126 = vpop.f32.mrb[0].mxu0
        %1127 = vmatprep.mubr.bf16.mxu0 0
        %1128 = vmatmul.mubr.bf16.gmra.mrb[0].mxu0 %v1035
        %v1129 = vpop.f32.mrb[0].mxu0
        %v1130 = vadd.f32 %v838, %v1129
        %v1131 = vpop.f32.mrb[0].mxu0
        %v1132 = vpop.f32.mrb[0].mxu0
        %v1133 = vadd.f32 %v841, %v1132
        %v1134 = vpop.f32.mrb[0].mxu0
        %1135 = vmatprep.mubr.bf16.mxu0 0
        %1136 = vmatmul.mubr.bf16.gmra.mrb[0].mxu0 %v1038
        %v1137 = vpop.f32.mrb[0].mxu0
        %v1138 = vadd.f32 %v846, %v1137
        %v1139 = vpop.f32.mrb[0].mxu0
        %v1140 = vpop.f32.mrb[0].mxu0
        %v1141 = vadd.f32 %v849, %v1140
        %v1142 = vpop.f32.mrb[0].mxu0
        %1143 = vmatprep.mubr.bf16.mxu0 0
        %1144 = vmatmul.mubr.bf16.gmra.mrb[0].mxu0 %v1041
        %v1145 = vpop.f32.mrb[0].mxu0
        %v1146 = vadd.f32 %v854, %v1145
        %v1147 = vpop.f32.mrb[0].mxu0
        %v1148 = vpop.f32.mrb[0].mxu0
        %v1149 = vadd.f32 %v857, %v1148
        %v1150 = vpop.f32.mrb[0].mxu0
        %1151 = vmatprep.mubr.bf16.mxu0 0
        %1152 = vmatmul.mubr.bf16.gmra.mrb[0].mxu0 %v1044
        %v1153 = vpop.f32.mrb[0].mxu0
        %v1154 = vadd.f32 %v862, %v1153
        %v1155 = vpop.f32.mrb[0].mxu0
        %v1156 = vpop.f32.mrb[0].mxu0
        %v1157 = vadd.f32 %v865, %v1156
        %v1158 = vpop.f32.mrb[0].mxu0
        %1159 = vmatprep.mubr.bf16.mxu0 0
        %1160 = vmatmul.mubr.bf16.gmra.mrb[0].mxu0 %v1047
        %v1161 = vpop.f32.mrb[0].mxu0
        %v1162 = vadd.f32 %v870, %v1161
        %v1163 = vpop.f32.mrb[0].mxu0
        %v1164 = vpop.f32.mrb[0].mxu0
        %v1165 = vadd.f32 %v873, %v1164
        %v1166 = vpop.f32.mrb[0].mxu0
        %1167 = vmatprep.mubr.bf16.mxu0 0
        %1168 = vmatmul.mubr.bf16.gmra.mrb[0].mxu0 %v1050
        %v1169 = vpop.f32.mrb[0].mxu0
        %v1170 = vadd.f32 %v878, %v1169
        %v1171 = vpop.f32.mrb[0].mxu0
        %v1172 = vpop.f32.mrb[0].mxu0
        %v1173 = vadd.f32 %v881, %v1172
        %v1174 = vpop.f32.mrb[0].mxu0
        %1175 = vmatprep.mubr.bf16.mxu0 0
        %1176 = vmatmul.mubr.bf16.gmra.mrb[0].mxu0 %v1053
        %v1177 = vpop.f32.mrb[0].mxu0
        %v1178 = vadd.f32 %v886, %v1177
        %v1179 = vpop.f32.mrb[0].mxu0
        %v1180 = vpop.f32.mrb[0].mxu0
        %v1181 = vadd.f32 %v889, %v1180
        %v1182 = vpop.f32.mrb[0].mxu0
        %1183 = vmatprep.mubr.bf16.mxu0 0
        %1184 = vmatmul.mubr.bf16.gmra.mrb[0].mxu0 %v1056
        %v1185 = vpop.f32.mrb[0].mxu0
        %v1186 = vadd.f32 %v894, %v1185
        %v1187 = vpop.f32.mrb[0].mxu0
        %v1188 = vpop.f32.mrb[0].mxu0
        %v1189 = vadd.f32 %v897, %v1188
        %v1190 = vpop.f32.mrb[0].mxu0
        %1191 = vmatprep.mubr.bf16.mxu0 0
        %1192 = vmatmul.mubr.bf16.gmra.mrb[0].mxu0 %v1059
        %v1193 = vpop.f32.mrb[0].mxu0
        %v1194 = vadd.f32 %v902, %v1193
        %v1195 = vpop.f32.mrb[0].mxu0
        %v1196 = vpop.f32.mrb[0].mxu0
        %v1197 = vadd.f32 %v905, %v1196
        %v1198 = vpop.f32.mrb[0].mxu0
        %1199 = vmatprep.mubr.bf16.mxu0 0
        %1200 = vmatmul.mubr.bf16.gmra.mrb[0].mxu0 %v1062
        %v1201 = vpop.f32.mrb[0].mxu0
        %v1202 = vadd.f32 %v910, %v1201
        %v1203 = vpop.f32.mrb[0].mxu0
        %v1204 = vpop.f32.mrb[0].mxu0
        %v1205 = vadd.f32 %v913, %v1204
        %v1206 = vpop.f32.mrb[0].mxu0
        %1207 = vmatprep.mubr.bf16.mxu0 0
        %1208 = vmatmul.mubr.bf16.gmra.mrb[0].mxu0 %v1065
        %v1209 = vpop.f32.mrb[0].mxu0
        %v1210 = vadd.f32 %v918, %v1209
        %v1211 = vpop.f32.mrb[0].mxu0
        %v1212 = vpop.f32.mrb[0].mxu0
        %v1213 = vadd.f32 %v921, %v1212
        %v1214 = vpop.f32.mrb[0].mxu0
        %1215 = vmatprep.mubr.bf16.mxu0 0
        %1216 = vmatmul.mubr.bf16.gmra.mrb[0].mxu0 %v1068
        %v1217 = vpop.f32.mrb[0].mxu0
        %v1218 = vadd.f32 %v926, %v1217
        %v1219 = vpop.f32.mrb[0].mxu0
        %v1220 = vpop.f32.mrb[0].mxu0
        %v1221 = vadd.f32 %v929, %v1220
        %v1222 = vpop.f32.mrb[0].mxu0
        %1223 = vmatprep.mubr.bf16.mxu0 0
        %1224 = vmatmul.mubr.bf16.gmra.mrb[0].mxu0 %v1071
        %v1225 = vpop.f32.mrb[0].mxu0
        %v1226 = vadd.f32 %v934, %v1225
        %v1227 = vpop.f32.mrb[0].mxu0
        %v1228 = vpop.f32.mrb[0].mxu0
        %v1229 = vadd.f32 %v937, %v1228
        %v1230 = vpop.f32.mrb[0].mxu0
        %1231 = vmatprep.mubr.bf16.mxu0 0
        %1232 = vmatmul.mubr.bf16.gmra.mrb[0].mxu0 %v1074
        %v1233 = vpop.f32.mrb[0].mxu0
        %v1234 = vadd.f32 %v942, %v1233
        %v1235 = vpop.f32.mrb[0].mxu0
        %v1236 = vpop.f32.mrb[0].mxu0
        %v1237 = vadd.f32 %v945, %v1236
        %v1238 = vpop.f32.mrb[0].mxu0
        %1239 = vdwg.mxu0
        %v1240 = vld [vmem:[%s210] sm:$0xe]
        %v1241 = vld [vmem:[%s210 + $0xc] sm:$0xe]
        %v1242 = vld [vmem:[%s210 + $0x18] sm:$0xe]
        %v1243 = vld [vmem:[%s210 + $0x24] sm:$0xe]
        %v1244 = vld [vmem:[%s210 + $0x30] sm:$0xe]
        %v1245 = vld [vmem:[%s210 + $0x3c] sm:$0xe]
        %v1246 = vld [vmem:[%s210 + $0x48] sm:$0xe]
        %v1247 = vld [vmem:[%s210 + $0x54] sm:$0xe]
        %v1248 = vld [vmem:[%s210 + $0x60] sm:$0xe]
        %v1249 = vld [vmem:[%s210 + $0x6c] sm:$0xe]
        %v1250 = vld [vmem:[%s210 + $0x78] sm:$0xe]
        %v1251 = vld [vmem:[%s210 + $0x84] sm:$0xe]
        %v1252 = vld [vmem:[%s210 + $0x90] sm:$0xe]
        %v1253 = vld [vmem:[%s210 + $0x9c] sm:$0xe]
        %v1254 = vld [vmem:[%s210 + $0xa8] sm:$0xe]
        %v1255 = vld [vmem:[%s210 + $0xb4] sm:$0xe]
        %vm1288 = vcmask 1042432
        %vm1289 = vcmask 1046532
        %vm1290 = vmor %vm1288, %vm1289
        %v1291 = vrot.slane %v1240, 5
        %v1292 = vrot.slane %v1291, 4
        %v1293 = vrot.slane %v249, 5
        %v1294 = vsel %vm1290, %v1292, %v1293
        %v1295 = vrot.slane %v1293, 4
        %v1296 = vrot.slane %v281, 5
        %v1297 = vsel %vm1290, %v1295, %v1296
        %v1298 = vrot.slane %v1241, 5
        %v1299 = vrot.slane %v1298, 4
        %v1300 = vrot.slane %v251, 5
        %v1301 = vsel %vm1290, %v1299, %v1300
        %v1302 = vrot.slane %v1300, 4
        %v1303 = vrot.slane %v282, 5
        %v1304 = vsel %vm1290, %v1302, %v1303
        %v1305 = vrot.slane %v1242, 5
        %v1306 = vrot.slane %v1305, 4
        %v1307 = vrot.slane %v253, 5
        %v1308 = vsel %vm1290, %v1306, %v1307
        %v1309 = vrot.slane %v1307, 4
        %v1310 = vrot.slane %v283, 5
        %v1311 = vsel %vm1290, %v1309, %v1310
        %v1312 = vrot.slane %v1243, 5
        %v1313 = vrot.slane %v1312, 4
        %v1314 = vrot.slane %v255, 5
        %v1315 = vsel %vm1290, %v1313, %v1314
        %v1316 = vrot.slane %v1314, 4
        %v1317 = vrot.slane %v284, 5
        %v1318 = vsel %vm1290, %v1316, %v1317
        %v1319 = vrot.slane %v1244, 5
        %v1320 = vrot.slane %v1319, 4
        %v1321 = vrot.slane %v257, 5
        %v1322 = vsel %vm1290, %v1320, %v1321
        %v1323 = vrot.slane %v1321, 4
        %v1324 = vrot.slane %v285, 5
        %v1325 = vsel %vm1290, %v1323, %v1324
        %v1326 = vrot.slane %v1245, 5
        %v1327 = vrot.slane %v1326, 4
        %v1328 = vrot.slane %v259, 5
        %v1329 = vsel %vm1290, %v1327, %v1328
        %v1330 = vrot.slane %v1328, 4
        %v1331 = vrot.slane %v286, 5
        %v1332 = vsel %vm1290, %v1330, %v1331
        %v1333 = vrot.slane %v1246, 5
        %v1334 = vrot.slane %v1333, 4
        %v1335 = vrot.slane %v261, 5
        %v1336 = vsel %vm1290, %v1334, %v1335
        %v1337 = vrot.slane %v1335, 4
        %v1338 = vrot.slane %v287, 5
        %v1339 = vsel %vm1290, %v1337, %v1338
        %v1340 = vrot.slane %v1247, 5
        %v1341 = vrot.slane %v1340, 4
        %v1342 = vrot.slane %v263, 5
        %v1343 = vsel %vm1290, %v1341, %v1342
        %v1344 = vrot.slane %v1342, 4
        %v1345 = vrot.slane %v288, 5
        %v1346 = vsel %vm1290, %v1344, %v1345
        %v1347 = vrot.slane %v1248, 5
        %v1348 = vrot.slane %v1347, 4
        %v1349 = vrot.slane %v265, 5
        %v1350 = vsel %vm1290, %v1348, %v1349
        %v1351 = vrot.slane %v1349, 4
        %v1352 = vrot.slane %v289, 5
        %v1353 = vsel %vm1290, %v1351, %v1352
        %v1354 = vrot.slane %v1249, 5
        %v1355 = vrot.slane %v1354, 4
        %v1356 = vrot.slane %v267, 5
        %v1357 = vsel %vm1290, %v1355, %v1356
        %v1358 = vrot.slane %v1356, 4
        %v1359 = vrot.slane %v290, 5
        %v1360 = vsel %vm1290, %v1358, %v1359
        %v1361 = vrot.slane %v1250, 5
        %v1362 = vrot.slane %v1361, 4
        %v1363 = vrot.slane %v269, 5
        %v1364 = vsel %vm1290, %v1362, %v1363
        %v1365 = vrot.slane %v1363, 4
        %v1366 = vrot.slane %v291, 5
        %v1367 = vsel %vm1290, %v1365, %v1366
        %v1368 = vrot.slane %v1251, 5
        %v1369 = vrot.slane %v1368, 4
        %v1370 = vrot.slane %v271, 5
        %v1371 = vsel %vm1290, %v1369, %v1370
        %v1372 = vrot.slane %v1370, 4
        %v1373 = vrot.slane %v292, 5
        %v1374 = vsel %vm1290, %v1372, %v1373
        %v1375 = vrot.slane %v1252, 5
        %v1376 = vrot.slane %v1375, 4
        %v1377 = vrot.slane %v273, 5
        %v1378 = vsel %vm1290, %v1376, %v1377
        %v1379 = vrot.slane %v1377, 4
        %v1380 = vrot.slane %v293, 5
        %v1381 = vsel %vm1290, %v1379, %v1380
        %v1382 = vrot.slane %v1253, 5
        %v1383 = vrot.slane %v1382, 4
        %v1384 = vrot.slane %v275, 5
        %v1385 = vsel %vm1290, %v1383, %v1384
        %v1386 = vrot.slane %v1384, 4
        %v1387 = vrot.slane %v294, 5
        %v1388 = vsel %vm1290, %v1386, %v1387
        %v1389 = vrot.slane %v1254, 5
        %v1390 = vrot.slane %v1389, 4
        %v1391 = vrot.slane %v277, 5
        %v1392 = vsel %vm1290, %v1390, %v1391
        %v1393 = vrot.slane %v1391, 4
        %v1394 = vrot.slane %v295, 5
        %v1395 = vsel %vm1290, %v1393, %v1394
        %v1396 = vrot.slane %v1255, 5
        %v1397 = vrot.slane %v1396, 4
        %v1398 = vrot.slane %v279, 5
        %v1399 = vsel %vm1290, %v1397, %v1398
        %v1400 = vrot.slane %v1398, 4
        %v1401 = vrot.slane %v296, 5
        %v1402 = vsel %vm1290, %v1400, %v1401
        %s1403 = scalar_lea.vmem [#allocation5], 8
        %v1404 = vld [vmem:[%s1403] sm:$0xf]
        %v1405 = vunpack.c.l.b16 %v1294
        %v1406 = vunpack.c.l.b16 %v1297
        %v1407 = vunpack.c.l.b16 %v1301
        %v1408 = vunpack.c.l.b16 %v1304
        %v1409 = vunpack.c.l.b16 %v1308
        %v1410 = vunpack.c.l.b16 %v1311
        %v1411 = vunpack.c.l.b16 %v1315
        %v1412 = vunpack.c.l.b16 %v1318
        %v1413 = vunpack.c.l.b16 %v1322
        %v1414 = vunpack.c.l.b16 %v1325
        %v1415 = vunpack.c.l.b16 %v1329
        %v1416 = vunpack.c.l.b16 %v1332
        %v1417 = vunpack.c.l.b16 %v1336
        %v1418 = vunpack.c.l.b16 %v1339
        %v1419 = vunpack.c.l.b16 %v1343
        %v1420 = vunpack.c.l.b16 %v1346
        %v1421 = vunpack.c.l.b16 %v1350
        %v1422 = vunpack.c.l.b16 %v1353
        %v1423 = vunpack.c.l.b16 %v1357
        %v1424 = vunpack.c.l.b16 %v1360
        %v1425 = vunpack.c.l.b16 %v1364
        %v1426 = vunpack.c.l.b16 %v1367
        %v1427 = vunpack.c.l.b16 %v1371
        %v1428 = vunpack.c.l.b16 %v1374
        %v1429 = vunpack.c.l.b16 %v1378
        %v1430 = vunpack.c.l.b16 %v1381
        %v1431 = vunpack.c.l.b16 %v1385
        %v1432 = vunpack.c.l.b16 %v1388
        %v1433 = vunpack.c.l.b16 %v1392
        %v1434 = vunpack.c.l.b16 %v1395
        %v1435 = vunpack.c.l.b16 %v1399
        %v1436 = vunpack.c.l.b16 %v1402
        %v1437 = vpack.c.b16 %v1406, %v1405
        %v1438 = vpack.c.b16 %v1408, %v1407
        %v1439 = vpack.c.b16 %v1410, %v1409
        %v1440 = vpack.c.b16 %v1412, %v1411
        %v1441 = vpack.c.b16 %v1414, %v1413
        %v1442 = vpack.c.b16 %v1416, %v1415
        %v1443 = vpack.c.b16 %v1418, %v1417
        %v1444 = vpack.c.b16 %v1420, %v1419
        %v1445 = vpack.c.b16 %v1422, %v1421
        %v1446 = vpack.c.b16 %v1424, %v1423
        %v1447 = vpack.c.b16 %v1426, %v1425
        %v1448 = vpack.c.b16 %v1428, %v1427
        %v1449 = vpack.c.b16 %v1430, %v1429
        %v1450 = vpack.c.b16 %v1432, %v1431
        %v1451 = vpack.c.b16 %v1434, %v1433
        %v1452 = vpack.c.b16 %v1436, %v1435
        %v1454 = vsel %vm734, %v1437, 0
        %v1457 = vsel %vm734, %v1438, 0
        %v1460 = vsel %vm734, %v1439, 0
        %v1463 = vsel %vm734, %v1440, 0
        %v1466 = vsel %vm734, %v1441, 0
        %v1469 = vsel %vm734, %v1442, 0
        %v1472 = vsel %vm734, %v1443, 0
        %v1475 = vsel %vm734, %v1444, 0
        %v1478 = vsel %vm734, %v1445, 0
        %v1481 = vsel %vm734, %v1446, 0
        %v1484 = vsel %vm734, %v1447, 0
        %v1487 = vsel %vm734, %v1448, 0
        %v1490 = vsel %vm734, %v1449, 0
        %v1493 = vsel %vm734, %v1450, 0
        %v1496 = vsel %vm734, %v1451, 0
        %v1499 = vsel %vm734, %v1452, 0
        %v1502 = vsel %vm783, %v1404, 0
        %1504 = vmatprep.subr.bf16.mxu0 0
        %1505 = vmatpush1.bf16.msra.mxu0 %v1502
        %1506 = vmatprep.subr.bf16.mxu0 0
        %1507 = vmatpush1.bf16.msra.mxu0 0
        %1508 = vmatprep.subr.bf16.mxu0 0
        %1509 = vmatpush1.bf16.msra.mxu0 0
        %1510 = vmatprep.subr.bf16.mxu0 0
        %1511 = vmatpush1.bf16.msra.mxu0 0
        %1512 = vmatprep.subr.bf16.mxu0 0
        %1513 = vmatpush1.bf16.msra.mxu0 0
        %1514 = vmatprep.subr.bf16.mxu0 0
        %1515 = vmatpush1.bf16.msra.mxu0 0
        %1516 = vmatprep.subr.bf16.mxu0 0
        %1517 = vmatpush1.bf16.msra.mxu0 0
        %1518 = vmatprep.subr.bf16.mxu0 0
        %1519 = vmatpush1.bf16.msra.mxu0 0
        %1520 = vmatprep.subr.bf16.mxu0 0
        %1521 = vmatpush1.bf16.msra.mxu0 0
        %1522 = vmatprep.subr.bf16.mxu0 0
        %1523 = vmatpush1.bf16.msra.mxu0 0
        %1524 = vmatprep.subr.bf16.mxu0 0
        %1525 = vmatpush1.bf16.msra.mxu0 0
        %1526 = vmatprep.subr.bf16.mxu0 0
        %1527 = vmatpush1.bf16.msra.mxu0 0
        %1528 = vmatprep.subr.bf16.mxu0 0
        %1529 = vmatpush1.bf16.msra.mxu0 0
        %1530 = vmatprep.subr.bf16.mxu0 0
        %1531 = vmatpush1.bf16.msra.mxu0 0
        %1532 = vmatprep.subr.bf16.mxu0 0
        %1533 = vmatpush1.bf16.msra.mxu0 0
        %1534 = vmatprep.subr.bf16.mxu0 0
        %1535 = vmatpush1.bf16.msra.mxu0 0
        %1536 = vmatprep.mubr.bf16.mxu0 0
        %1537 = vmatmul.mubr.bf16.gmra.mrb[0].mxu0 %v1454
        %v1538 = vpop.f32.mrb[0].mxu0
        %v1539 = vadd.f32 0.0, %v1538
        %v1540 = vpop.f32.mrb[0].mxu0
        %v1541 = vpop.f32.mrb[0].mxu0
        %v1542 = vadd.f32 0.0, %v1541
        %v1543 = vpop.f32.mrb[0].mxu0
        %1544 = vmatprep.mubr.bf16.mxu0 0
        %1545 = vmatmul.mubr.bf16.gmra.mrb[0].mxu0 %v1457
        %v1546 = vpop.f32.mrb[0].mxu0
        %v1547 = vadd.f32 0.0, %v1546
        %v1548 = vpop.f32.mrb[0].mxu0
        %v1549 = vpop.f32.mrb[0].mxu0
        %v1550 = vadd.f32 0.0, %v1549
        %v1551 = vpop.f32.mrb[0].mxu0
        %1552 = vmatprep.mubr.bf16.mxu0 0
        %1553 = vmatmul.mubr.bf16.gmra.mrb[0].mxu0 %v1460
        %v1554 = vpop.f32.mrb[0].mxu0
        %v1555 = vadd.f32 0.0, %v1554
        %v1556 = vpop.f32.mrb[0].mxu0
        %v1557 = vpop.f32.mrb[0].mxu0
        %v1558 = vadd.f32 0.0, %v1557
        %v1559 = vpop.f32.mrb[0].mxu0
        %1560 = vmatprep.mubr.bf16.mxu0 0
        %1561 = vmatmul.mubr.bf16.gmra.mrb[0].mxu0 %v1463
        %v1562 = vpop.f32.mrb[0].mxu0
        %v1563 = vadd.f32 0.0, %v1562
        %v1564 = vpop.f32.mrb[0].mxu0
        %v1565 = vpop.f32.mrb[0].mxu0
        %v1566 = vadd.f32 0.0, %v1565
        %v1567 = vpop.f32.mrb[0].mxu0
        %1568 = vmatprep.mubr.bf16.mxu0 0
        %1569 = vmatmul.mubr.bf16.gmra.mrb[0].mxu0 %v1466
        %v1570 = vpop.f32.mrb[0].mxu0
        %v1571 = vadd.f32 0.0, %v1570
        %v1572 = vpop.f32.mrb[0].mxu0
        %v1573 = vpop.f32.mrb[0].mxu0
        %v1574 = vadd.f32 0.0, %v1573
        %v1575 = vpop.f32.mrb[0].mxu0
        %1576 = vmatprep.mubr.bf16.mxu0 0
        %1577 = vmatmul.mubr.bf16.gmra.mrb[0].mxu0 %v1469
        %v1578 = vpop.f32.mrb[0].mxu0
        %v1579 = vadd.f32 0.0, %v1578
        %v1580 = vpop.f32.mrb[0].mxu0
        %v1581 = vpop.f32.mrb[0].mxu0
        %v1582 = vadd.f32 0.0, %v1581
        %v1583 = vpop.f32.mrb[0].mxu0
        %1584 = vmatprep.mubr.bf16.mxu0 0
        %1585 = vmatmul.mubr.bf16.gmra.mrb[0].mxu0 %v1472
        %v1586 = vpop.f32.mrb[0].mxu0
        %v1587 = vadd.f32 0.0, %v1586
        %v1588 = vpop.f32.mrb[0].mxu0
        %v1589 = vpop.f32.mrb[0].mxu0
        %v1590 = vadd.f32 0.0, %v1589
        %v1591 = vpop.f32.mrb[0].mxu0
        %1592 = vmatprep.mubr.bf16.mxu0 0
        %1593 = vmatmul.mubr.bf16.gmra.mrb[0].mxu0 %v1475
        %v1594 = vpop.f32.mrb[0].mxu0
        %v1595 = vadd.f32 0.0, %v1594
        %v1596 = vpop.f32.mrb[0].mxu0
        %v1597 = vpop.f32.mrb[0].mxu0
        %v1598 = vadd.f32 0.0, %v1597
        %v1599 = vpop.f32.mrb[0].mxu0
        %1600 = vmatprep.mubr.bf16.mxu0 0
        %1601 = vmatmul.mubr.bf16.gmra.mrb[0].mxu0 %v1478
        %v1602 = vpop.f32.mrb[0].mxu0
        %v1603 = vadd.f32 0.0, %v1602
        %v1604 = vpop.f32.mrb[0].mxu0
        %v1605 = vpop.f32.mrb[0].mxu0
        %v1606 = vadd.f32 0.0, %v1605
        %v1607 = vpop.f32.mrb[0].mxu0
        %1608 = vmatprep.mubr.bf16.mxu0 0
        %1609 = vmatmul.mubr.bf16.gmra.mrb[0].mxu0 %v1481
        %v1610 = vpop.f32.mrb[0].mxu0
        %v1611 = vadd.f32 0.0, %v1610
        %v1612 = vpop.f32.mrb[0].mxu0
        %v1613 = vpop.f32.mrb[0].mxu0
        %v1614 = vadd.f32 0.0, %v1613
        %v1615 = vpop.f32.mrb[0].mxu0
        %1616 = vmatprep.mubr.bf16.mxu0 0
        %1617 = vmatmul.mubr.bf16.gmra.mrb[0].mxu0 %v1484
        %v1618 = vpop.f32.mrb[0].mxu0
        %v1619 = vadd.f32 0.0, %v1618
        %v1620 = vpop.f32.mrb[0].mxu0
        %v1621 = vpop.f32.mrb[0].mxu0
        %v1622 = vadd.f32 0.0, %v1621
        %v1623 = vpop.f32.mrb[0].mxu0
        %1624 = vmatprep.mubr.bf16.mxu0 0
        %1625 = vmatmul.mubr.bf16.gmra.mrb[0].mxu0 %v1487
        %v1626 = vpop.f32.mrb[0].mxu0
        %v1627 = vadd.f32 0.0, %v1626
        %v1628 = vpop.f32.mrb[0].mxu0
        %v1629 = vpop.f32.mrb[0].mxu0
        %v1630 = vadd.f32 0.0, %v1629
        %v1631 = vpop.f32.mrb[0].mxu0
        %1632 = vmatprep.mubr.bf16.mxu0 0
        %1633 = vmatmul.mubr.bf16.gmra.mrb[0].mxu0 %v1490
        %v1634 = vpop.f32.mrb[0].mxu0
        %v1635 = vadd.f32 0.0, %v1634
        %v1636 = vpop.f32.mrb[0].mxu0
        %v1637 = vpop.f32.mrb[0].mxu0
        %v1638 = vadd.f32 0.0, %v1637
        %v1639 = vpop.f32.mrb[0].mxu0
        %1640 = vmatprep.mubr.bf16.mxu0 0
        %1641 = vmatmul.mubr.bf16.gmra.mrb[0].mxu0 %v1493
        %v1642 = vpop.f32.mrb[0].mxu0
        %v1643 = vadd.f32 0.0, %v1642
        %v1644 = vpop.f32.mrb[0].mxu0
        %v1645 = vpop.f32.mrb[0].mxu0
        %v1646 = vadd.f32 0.0, %v1645
        %v1647 = vpop.f32.mrb[0].mxu0
        %1648 = vmatprep.mubr.bf16.mxu0 0
        %1649 = vmatmul.mubr.bf16.gmra.mrb[0].mxu0 %v1496
        %v1650 = vpop.f32.mrb[0].mxu0
        %v1651 = vadd.f32 0.0, %v1650
        %v1652 = vpop.f32.mrb[0].mxu0
        %v1653 = vpop.f32.mrb[0].mxu0
        %v1654 = vadd.f32 0.0, %v1653
        %v1655 = vpop.f32.mrb[0].mxu0
        %1656 = vmatprep.mubr.bf16.mxu0 0
        %1657 = vmatmul.mubr.bf16.gmra.mrb[0].mxu0 %v1499
        %v1658 = vpop.f32.mrb[0].mxu0
        %v1659 = vadd.f32 0.0, %v1658
        %v1660 = vpop.f32.mrb[0].mxu0
        %v1661 = vpop.f32.mrb[0].mxu0
        %v1662 = vadd.f32 0.0, %v1661
        %v1663 = vpop.f32.mrb[0].mxu0
        %1664 = vdwg.mxu0
        %v1665 = vadd.f32 %v1114, %v1539
        %v1666 = vadd.f32 %v1117, %v1542
        %v1667 = vadd.f32 %v1122, %v1547
        %v1668 = vadd.f32 %v1125, %v1550
        %v1669 = vadd.f32 %v1130, %v1555
        %v1670 = vadd.f32 %v1133, %v1558
        %v1671 = vadd.f32 %v1138, %v1563
        %v1672 = vadd.f32 %v1141, %v1566
        %v1673 = vadd.f32 %v1146, %v1571
        %v1674 = vadd.f32 %v1149, %v1574
        %v1675 = vadd.f32 %v1154, %v1579
        %v1676 = vadd.f32 %v1157, %v1582
        %v1677 = vadd.f32 %v1162, %v1587
        %v1678 = vadd.f32 %v1165, %v1590
        %v1679 = vadd.f32 %v1170, %v1595
        %v1680 = vadd.f32 %v1173, %v1598
        %v1681 = vadd.f32 %v1178, %v1603
        %v1682 = vadd.f32 %v1181, %v1606
        %v1683 = vadd.f32 %v1186, %v1611
        %v1684 = vadd.f32 %v1189, %v1614
        %v1685 = vadd.f32 %v1194, %v1619
        %v1686 = vadd.f32 %v1197, %v1622
        %v1687 = vadd.f32 %v1202, %v1627
        %v1688 = vadd.f32 %v1205, %v1630
        %v1689 = vadd.f32 %v1210, %v1635
        %v1690 = vadd.f32 %v1213, %v1638
        %v1691 = vadd.f32 %v1218, %v1643
        %v1692 = vadd.f32 %v1221, %v1646
        %v1693 = vadd.f32 %v1226, %v1651
        %v1694 = vadd.f32 %v1229, %v1654
        %v1695 = vadd.f32 %v1234, %v1659
        %v1696 = vadd.f32 %v1237, %v1662
        %s1697 = scalar_lea.vmem %s210, 12 [#allocation2]
        %v1698 = vld [vmem:[%s1697] sm:$0xf]
        %v1699 = vld [vmem:[%s1697 + $0x4] sm:$0xf]
        %v1700 = vld [vmem:[%s1697 + $0xc] sm:$0xf]
        %v1701 = vld [vmem:[%s1697 + $0x10] sm:$0xf]
        %v1702 = vld [vmem:[%s1697 + $0x18] sm:$0xf]
        %v1703 = vld [vmem:[%s1697 + $0x1c] sm:$0xf]
        %v1704 = vld [vmem:[%s1697 + $0x24] sm:$0xf]
        %v1705 = vld [vmem:[%s1697 + $0x28] sm:$0xf]
        %v1706 = vld [vmem:[%s1697 + $0x30] sm:$0xf]
        %v1707 = vld [vmem:[%s1697 + $0x34] sm:$0xf]
        %v1708 = vld [vmem:[%s1697 + $0x3c] sm:$0xf]
        %v1709 = vld [vmem:[%s1697 + $0x40] sm:$0xf]
        %v1710 = vld [vmem:[%s1697 + $0x48] sm:$0xf]
        %v1711 = vld [vmem:[%s1697 + $0x4c] sm:$0xf]
        %v1712 = vld [vmem:[%s1697 + $0x54] sm:$0xf]
        %v1713 = vld [vmem:[%s1697 + $0x58] sm:$0xf]
        %v1714 = vld [vmem:[%s1697 + $0x60] sm:$0xf]
        %v1715 = vld [vmem:[%s1697 + $0x64] sm:$0xf]
        %v1716 = vld [vmem:[%s1697 + $0x6c] sm:$0xf]
        %v1717 = vld [vmem:[%s1697 + $0x70] sm:$0xf]
        %v1718 = vld [vmem:[%s1697 + $0x78] sm:$0xf]
        %v1719 = vld [vmem:[%s1697 + $0x7c] sm:$0xf]
        %v1720 = vld [vmem:[%s1697 + $0x84] sm:$0xf]
        %v1721 = vld [vmem:[%s1697 + $0x88] sm:$0xf]
        %v1722 = vld [vmem:[%s1697 + $0x90] sm:$0xf]
        %v1723 = vld [vmem:[%s1697 + $0x94] sm:$0xf]
        %v1724 = vld [vmem:[%s1697 + $0x9c] sm:$0xf]
        %v1725 = vld [vmem:[%s1697 + $0xa0] sm:$0xf]
        %v1726 = vld [vmem:[%s1697 + $0xa8] sm:$0xf]
        %v1727 = vld [vmem:[%s1697 + $0xac] sm:$0xf]
        %v1728 = vld [vmem:[%s1697 + $0xb4] sm:$0xf]
        %v1729 = vld [vmem:[%s1697 + $0xb8] sm:$0xf]
        %s1730 = scalar_lea.vmem [#allocation5], 12
        %v1731 = vld [vmem:[%s1730] sm:$0xf]
        %v1764 = vunpack.c.l.b16 %v1698
        %v1765 = vunpack.c.l.b16 %v1699
        %v1766 = vunpack.c.l.b16 %v1700
        %v1767 = vunpack.c.l.b16 %v1701
        %v1768 = vunpack.c.l.b16 %v1702
        %v1769 = vunpack.c.l.b16 %v1703
        %v1770 = vunpack.c.l.b16 %v1704
        %v1771 = vunpack.c.l.b16 %v1705
        %v1772 = vunpack.c.l.b16 %v1706
        %v1773 = vunpack.c.l.b16 %v1707
        %v1774 = vunpack.c.l.b16 %v1708
        %v1775 = vunpack.c.l.b16 %v1709
        %v1776 = vunpack.c.l.b16 %v1710
        %v1777 = vunpack.c.l.b16 %v1711
        %v1778 = vunpack.c.l.b16 %v1712
        %v1779 = vunpack.c.l.b16 %v1713
        %v1780 = vunpack.c.l.b16 %v1714
        %v1781 = vunpack.c.l.b16 %v1715
        %v1782 = vunpack.c.l.b16 %v1716
        %v1783 = vunpack.c.l.b16 %v1717
        %v1784 = vunpack.c.l.b16 %v1718
        %v1785 = vunpack.c.l.b16 %v1719
        %v1786 = vunpack.c.l.b16 %v1720
        %v1787 = vunpack.c.l.b16 %v1721
        %v1788 = vunpack.c.l.b16 %v1722
        %v1789 = vunpack.c.l.b16 %v1723
        %v1790 = vunpack.c.l.b16 %v1724
        %v1791 = vunpack.c.l.b16 %v1725
        %v1792 = vunpack.c.l.b16 %v1726
        %v1793 = vunpack.c.l.b16 %v1727
        %v1794 = vunpack.c.l.b16 %v1728
        %v1795 = vunpack.c.l.b16 %v1729
        %v1796 = vpack.c.b16 %v1765, %v1764
        %v1797 = vpack.c.b16 %v1767, %v1766
        %v1798 = vpack.c.b16 %v1769, %v1768
        %v1799 = vpack.c.b16 %v1771, %v1770
        %v1800 = vpack.c.b16 %v1773, %v1772
        %v1801 = vpack.c.b16 %v1775, %v1774
        %v1802 = vpack.c.b16 %v1777, %v1776
        %v1803 = vpack.c.b16 %v1779, %v1778
        %v1804 = vpack.c.b16 %v1781, %v1780
        %v1805 = vpack.c.b16 %v1783, %v1782
        %v1806 = vpack.c.b16 %v1785, %v1784
        %v1807 = vpack.c.b16 %v1787, %v1786
        %v1808 = vpack.c.b16 %v1789, %v1788
        %v1809 = vpack.c.b16 %v1791, %v1790
        %v1810 = vpack.c.b16 %v1793, %v1792
        %v1811 = vpack.c.b16 %v1795, %v1794
        %v1813 = vsel %vm734, %v1796, 0
        %v1816 = vsel %vm734, %v1797, 0
        %v1819 = vsel %vm734, %v1798, 0
        %v1822 = vsel %vm734, %v1799, 0
        %v1825 = vsel %vm734, %v1800, 0
        %v1828 = vsel %vm734, %v1801, 0
        %v1831 = vsel %vm734, %v1802, 0
        %v1834 = vsel %vm734, %v1803, 0
        %v1837 = vsel %vm734, %v1804, 0
        %v1840 = vsel %vm734, %v1805, 0
        %v1843 = vsel %vm734, %v1806, 0
        %v1846 = vsel %vm734, %v1807, 0
        %v1849 = vsel %vm734, %v1808, 0
        %v1852 = vsel %vm734, %v1809, 0
        %v1855 = vsel %vm734, %v1810, 0
        %v1858 = vsel %vm734, %v1811, 0
        %v1861 = vsel %vm783, %v1731, 0
        %1863 = vmatprep.subr.bf16.mxu0 0
        %1864 = vmatpush1.bf16.msra.mxu0 %v1861
        %1865 = vmatprep.subr.bf16.mxu0 0
        %1866 = vmatpush1.bf16.msra.mxu0 0
        %1867 = vmatprep.subr.bf16.mxu0 0
        %1868 = vmatpush1.bf16.msra.mxu0 0
        %1869 = vmatprep.subr.bf16.mxu0 0
        %1870 = vmatpush1.bf16.msra.mxu0 0
        %1871 = vmatprep.subr.bf16.mxu0 0
        %1872 = vmatpush1.bf16.msra.mxu0 0
        %1873 = vmatprep.subr.bf16.mxu0 0
        %1874 = vmatpush1.bf16.msra.mxu0 0
        %1875 = vmatprep.subr.bf16.mxu0 0
        %1876 = vmatpush1.bf16.msra.mxu0 0
        %1877 = vmatprep.subr.bf16.mxu0 0
        %1878 = vmatpush1.bf16.msra.mxu0 0
        %1879 = vmatprep.subr.bf16.mxu0 0
        %1880 = vmatpush1.bf16.msra.mxu0 0
        %1881 = vmatprep.subr.bf16.mxu0 0
        %1882 = vmatpush1.bf16.msra.mxu0 0
        %1883 = vmatprep.subr.bf16.mxu0 0
        %1884 = vmatpush1.bf16.msra.mxu0 0
        %1885 = vmatprep.subr.bf16.mxu0 0
        %1886 = vmatpush1.bf16.msra.mxu0 0
        %1887 = vmatprep.subr.bf16.mxu0 0
        %1888 = vmatpush1.bf16.msra.mxu0 0
        %1889 = vmatprep.subr.bf16.mxu0 0
        %1890 = vmatpush1.bf16.msra.mxu0 0
        %1891 = vmatprep.subr.bf16.mxu0 0
        %1892 = vmatpush1.bf16.msra.mxu0 0
        %1893 = vmatprep.subr.bf16.mxu0 0
        %1894 = vmatpush1.bf16.msra.mxu0 0
        %1895 = vmatprep.mubr.bf16.mxu0 0
        %1896 = vmatmul.mubr.bf16.gmra.mrb[0].mxu0 %v1813
        %v1897 = vpop.f32.mrb[0].mxu0
        %v1898 = vadd.f32 0.0, %v1897
        %v1899 = vpop.f32.mrb[0].mxu0
        %v1900 = vpop.f32.mrb[0].mxu0
        %v1901 = vadd.f32 0.0, %v1900
        %v1902 = vpop.f32.mrb[0].mxu0
        %1903 = vmatprep.mubr.bf16.mxu0 0
        %1904 = vmatmul.mubr.bf16.gmra.mrb[0].mxu0 %v1816
        %v1905 = vpop.f32.mrb[0].mxu0
        %v1906 = vadd.f32 0.0, %v1905
        %v1907 = vpop.f32.mrb[0].mxu0
        %v1908 = vpop.f32.mrb[0].mxu0
        %v1909 = vadd.f32 0.0, %v1908
        %v1910 = vpop.f32.mrb[0].mxu0
        %1911 = vmatprep.mubr.bf16.mxu0 0
        %1912 = vmatmul.mubr.bf16.gmra.mrb[0].mxu0 %v1819
        %v1913 = vpop.f32.mrb[0].mxu0
        %v1914 = vadd.f32 0.0, %v1913
        %v1915 = vpop.f32.mrb[0].mxu0
        %v1916 = vpop.f32.mrb[0].mxu0
        %v1917 = vadd.f32 0.0, %v1916
        %v1918 = vpop.f32.mrb[0].mxu0
        %1919 = vmatprep.mubr.bf16.mxu0 0
        %1920 = vmatmul.mubr.bf16.gmra.mrb[0].mxu0 %v1822
        %v1921 = vpop.f32.mrb[0].mxu0
        %v1922 = vadd.f32 0.0, %v1921
        %v1923 = vpop.f32.mrb[0].mxu0
        %v1924 = vpop.f32.mrb[0].mxu0
        %v1925 = vadd.f32 0.0, %v1924
        %v1926 = vpop.f32.mrb[0].mxu0
        %1927 = vmatprep.mubr.bf16.mxu0 0
        %1928 = vmatmul.mubr.bf16.gmra.mrb[0].mxu0 %v1825
        %v1929 = vpop.f32.mrb[0].mxu0
        %v1930 = vadd.f32 0.0, %v1929
        %v1931 = vpop.f32.mrb[0].mxu0
        %v1932 = vpop.f32.mrb[0].mxu0
        %v1933 = vadd.f32 0.0, %v1932
        %v1934 = vpop.f32.mrb[0].mxu0
        %1935 = vmatprep.mubr.bf16.mxu0 0
        %1936 = vmatmul.mubr.bf16.gmra.mrb[0].mxu0 %v1828
        %v1937 = vpop.f32.mrb[0].mxu0
        %v1938 = vadd.f32 0.0, %v1937
        %v1939 = vpop.f32.mrb[0].mxu0
        %v1940 = vpop.f32.mrb[0].mxu0
        %v1941 = vadd.f32 0.0, %v1940
        %v1942 = vpop.f32.mrb[0].mxu0
        %1943 = vmatprep.mubr.bf16.mxu0 0
        %1944 = vmatmul.mubr.bf16.gmra.mrb[0].mxu0 %v1831
        %v1945 = vpop.f32.mrb[0].mxu0
        %v1946 = vadd.f32 0.0, %v1945
        %v1947 = vpop.f32.mrb[0].mxu0
        %v1948 = vpop.f32.mrb[0].mxu0
        %v1949 = vadd.f32 0.0, %v1948
        %v1950 = vpop.f32.mrb[0].mxu0
        %1951 = vmatprep.mubr.bf16.mxu0 0
        %1952 = vmatmul.mubr.bf16.gmra.mrb[0].mxu0 %v1834
        %v1953 = vpop.f32.mrb[0].mxu0
        %v1954 = vadd.f32 0.0, %v1953
        %v1955 = vpop.f32.mrb[0].mxu0
        %v1956 = vpop.f32.mrb[0].mxu0
        %v1957 = vadd.f32 0.0, %v1956
        %v1958 = vpop.f32.mrb[0].mxu0
        %1959 = vmatprep.mubr.bf16.mxu0 0
        %1960 = vmatmul.mubr.bf16.gmra.mrb[0].mxu0 %v1837
        %v1961 = vpop.f32.mrb[0].mxu0
        %v1962 = vadd.f32 0.0, %v1961
        %v1963 = vpop.f32.mrb[0].mxu0
        %v1964 = vpop.f32.mrb[0].mxu0
        %v1965 = vadd.f32 0.0, %v1964
        %v1966 = vpop.f32.mrb[0].mxu0
        %1967 = vmatprep.mubr.bf16.mxu0 0
        %1968 = vmatmul.mubr.bf16.gmra.mrb[0].mxu0 %v1840
        %v1969 = vpop.f32.mrb[0].mxu0
        %v1970 = vadd.f32 0.0, %v1969
        %v1971 = vpop.f32.mrb[0].mxu0
        %v1972 = vpop.f32.mrb[0].mxu0
        %v1973 = vadd.f32 0.0, %v1972
        %v1974 = vpop.f32.mrb[0].mxu0
        %1975 = vmatprep.mubr.bf16.mxu0 0
        %1976 = vmatmul.mubr.bf16.gmra.mrb[0].mxu0 %v1843
        %v1977 = vpop.f32.mrb[0].mxu0
        %v1978 = vadd.f32 0.0, %v1977
        %v1979 = vpop.f32.mrb[0].mxu0
        %v1980 = vpop.f32.mrb[0].mxu0
        %v1981 = vadd.f32 0.0, %v1980
        %v1982 = vpop.f32.mrb[0].mxu0
        %1983 = vmatprep.mubr.bf16.mxu0 0
        %1984 = vmatmul.mubr.bf16.gmra.mrb[0].mxu0 %v1846
        %v1985 = vpop.f32.mrb[0].mxu0
        %v1986 = vadd.f32 0.0, %v1985
        %v1987 = vpop.f32.mrb[0].mxu0
        %v1988 = vpop.f32.mrb[0].mxu0
        %v1989 = vadd.f32 0.0, %v1988
        %v1990 = vpop.f32.mrb[0].mxu0
        %1991 = vmatprep.mubr.bf16.mxu0 0
        %1992 = vmatmul.mubr.bf16.gmra.mrb[0].mxu0 %v1849
        %v1993 = vpop.f32.mrb[0].mxu0
        %v1994 = vadd.f32 0.0, %v1993
        %v1995 = vpop.f32.mrb[0].mxu0
        %v1996 = vpop.f32.mrb[0].mxu0
        %v1997 = vadd.f32 0.0, %v1996
        %v1998 = vpop.f32.mrb[0].mxu0
        %1999 = vmatprep.mubr.bf16.mxu0 0
        %2000 = vmatmul.mubr.bf16.gmra.mrb[0].mxu0 %v1852
        %v2001 = vpop.f32.mrb[0].mxu0
        %v2002 = vadd.f32 0.0, %v2001
        %v2003 = vpop.f32.mrb[0].mxu0
        %v2004 = vpop.f32.mrb[0].mxu0
        %v2005 = vadd.f32 0.0, %v2004
        %v2006 = vpop.f32.mrb[0].mxu0
        %2007 = vmatprep.mubr.bf16.mxu0 0
        %2008 = vmatmul.mubr.bf16.gmra.mrb[0].mxu0 %v1855
        %v2009 = vpop.f32.mrb[0].mxu0
        %v2010 = vadd.f32 0.0, %v2009
        %v2011 = vpop.f32.mrb[0].mxu0
        %v2012 = vpop.f32.mrb[0].mxu0
        %v2013 = vadd.f32 0.0, %v2012
        %v2014 = vpop.f32.mrb[0].mxu0
        %2015 = vmatprep.mubr.bf16.mxu0 0
        %2016 = vmatmul.mubr.bf16.gmra.mrb[0].mxu0 %v1858
        %v2017 = vpop.f32.mrb[0].mxu0
        %v2018 = vadd.f32 0.0, %v2017
        %v2019 = vpop.f32.mrb[0].mxu0
        %v2020 = vpop.f32.mrb[0].mxu0
        %v2021 = vadd.f32 0.0, %v2020
        %v2022 = vpop.f32.mrb[0].mxu0
        %2023 = vdwg.mxu0
        %v2024 = vadd.f32 %v1665, %v1898
        %v2025 = vadd.f32 %v1666, %v1901
        %v2026 = vadd.f32 %v1667, %v1906
        %v2027 = vadd.f32 %v1668, %v1909
        %v2028 = vadd.f32 %v1669, %v1914
        %v2029 = vadd.f32 %v1670, %v1917
        %v2030 = vadd.f32 %v1671, %v1922
        %v2031 = vadd.f32 %v1672, %v1925
        %v2032 = vadd.f32 %v1673, %v1930
        %v2033 = vadd.f32 %v1674, %v1933
        %v2034 = vadd.f32 %v1675, %v1938
        %v2035 = vadd.f32 %v1676, %v1941
        %v2036 = vadd.f32 %v1677, %v1946
        %v2037 = vadd.f32 %v1678, %v1949
        %v2038 = vadd.f32 %v1679, %v1954
        %v2039 = vadd.f32 %v1680, %v1957
        %v2040 = vadd.f32 %v1681, %v1962
        %v2041 = vadd.f32 %v1682, %v1965
        %v2042 = vadd.f32 %v1683, %v1970
        %v2043 = vadd.f32 %v1684, %v1973
        %v2044 = vadd.f32 %v1685, %v1978
        %v2045 = vadd.f32 %v1686, %v1981
        %v2046 = vadd.f32 %v1687, %v1986
        %v2047 = vadd.f32 %v1688, %v1989
        %v2048 = vadd.f32 %v1689, %v1994
        %v2049 = vadd.f32 %v1690, %v1997
        %v2050 = vadd.f32 %v1691, %v2002
        %v2051 = vadd.f32 %v1692, %v2005
        %v2052 = vadd.f32 %v1693, %v2010
        %v2053 = vadd.f32 %v1694, %v2013
        %v2054 = vadd.f32 %v1695, %v2018
        %v2055 = vadd.f32 %v1696, %v2021
        %v2056 = vld [vmem:[%s1697] sm:$0xf]
        %v2057 = vld [vmem:[%s1697 + $0x4] sm:$0xf]
        %v2058 = vld [vmem:[%s1697 + $0x8] sm:$0x1]
        %v2059 = vld [vmem:[%s1697 + $0xc] sm:$0xf]
        %v2060 = vld [vmem:[%s1697 + $0x10] sm:$0xf]
        %v2061 = vld [vmem:[%s1697 + $0x14] sm:$0x1]
        %v2062 = vld [vmem:[%s1697 + $0x18] sm:$0xf]
        %v2063 = vld [vmem:[%s1697 + $0x1c] sm:$0xf]
        %v2064 = vld [vmem:[%s1697 + $0x20] sm:$0x1]
        %v2065 = vld [vmem:[%s1697 + $0x24] sm:$0xf]
        %v2066 = vld [vmem:[%s1697 + $0x28] sm:$0xf]
        %v2067 = vld [vmem:[%s1697 + $0x2c] sm:$0x1]
        %v2068 = vld [vmem:[%s1697 + $0x30] sm:$0xf]
        %v2069 = vld [vmem:[%s1697 + $0x34] sm:$0xf]
        %v2070 = vld [vmem:[%s1697 + $0x38] sm:$0x1]
        %v2071 = vld [vmem:[%s1697 + $0x3c] sm:$0xf]
        %v2072 = vld [vmem:[%s1697 + $0x40] sm:$0xf]
        %v2073 = vld [vmem:[%s1697 + $0x44] sm:$0x1]
        %v2074 = vld [vmem:[%s1697 + $0x48] sm:$0xf]
        %v2075 = vld [vmem:[%s1697 + $0x4c] sm:$0xf]
        %v2076 = vld [vmem:[%s1697 + $0x50] sm:$0x1]
        %v2077 = vld [vmem:[%s1697 + $0x54] sm:$0xf]
        %v2078 = vld [vmem:[%s1697 + $0x58] sm:$0xf]
        %v2079 = vld [vmem:[%s1697 + $0x5c] sm:$0x1]
        %v2080 = vld [vmem:[%s1697 + $0x60] sm:$0xf]
        %v2081 = vld [vmem:[%s1697 + $0x64] sm:$0xf]
        %v2082 = vld [vmem:[%s1697 + $0x68] sm:$0x1]
        %v2083 = vld [vmem:[%s1697 + $0x6c] sm:$0xf]
        %v2084 = vld [vmem:[%s1697 + $0x70] sm:$0xf]
        %v2085 = vld [vmem:[%s1697 + $0x74] sm:$0x1]
        %v2086 = vld [vmem:[%s1697 + $0x78] sm:$0xf]
        %v2087 = vld [vmem:[%s1697 + $0x7c] sm:$0xf]
        %v2088 = vld [vmem:[%s1697 + $0x80] sm:$0x1]
        %v2089 = vld [vmem:[%s1697 + $0x84] sm:$0xf]
        %v2090 = vld [vmem:[%s1697 + $0x88] sm:$0xf]
        %v2091 = vld [vmem:[%s1697 + $0x8c] sm:$0x1]
        %v2092 = vld [vmem:[%s1697 + $0x90] sm:$0xf]
        %v2093 = vld [vmem:[%s1697 + $0x94] sm:$0xf]
        %v2094 = vld [vmem:[%s1697 + $0x98] sm:$0x1]
        %v2095 = vld [vmem:[%s1697 + $0x9c] sm:$0xf]
        %v2096 = vld [vmem:[%s1697 + $0xa0] sm:$0xf]
        %v2097 = vld [vmem:[%s1697 + $0xa4] sm:$0x1]
        %v2098 = vld [vmem:[%s1697 + $0xa8] sm:$0xf]
        %v2099 = vld [vmem:[%s1697 + $0xac] sm:$0xf]
        %v2100 = vld [vmem:[%s1697 + $0xb0] sm:$0x1]
        %v2101 = vld [vmem:[%s1697 + $0xb4] sm:$0xf]
        %v2102 = vld [vmem:[%s1697 + $0xb8] sm:$0xf]
        %v2103 = vld [vmem:[%s1697 + $0xbc] sm:$0x1]
        %v2105 = vshrl.u32 %v2056, 16
        %v2107 = vrot.slane %v2105, 4
        %v2108 = vshll.u32 %v2056, 16
        %v2110 = vrot.slane %v2108, 5
        %v2111 = vor.u32 %v2107, %v2110
        %v2112 = vrot.slane %v2111, 4
        %v2114 = vshll.u32 %v2057, 16
        %v2116 = vrot.slane %v2114, 5
        %v2117 = vsel %vm299, %v2112, %v2116
        %v2118 = vshrl.u32 %v2057, 16
        %v2120 = vrot.slane %v2118, 4
        %v2121 = vor.u32 %v2120, %v2116
        %v2122 = vrot.slane %v2121, 4
        %v2124 = vshll.u32 %v2058, 16
        %v2126 = vrot.slane %v2124, 5
        %v2127 = vsel %vm299, %v2122, %v2126
        %v2129 = vshrl.u32 %v2059, 16
        %v2131 = vrot.slane %v2129, 4
        %v2132 = vshll.u32 %v2059, 16
        %v2134 = vrot.slane %v2132, 5
        %v2135 = vor.u32 %v2131, %v2134
        %v2136 = vrot.slane %v2135, 4
        %v2138 = vshll.u32 %v2060, 16
        %v2140 = vrot.slane %v2138, 5
        %v2141 = vsel %vm299, %v2136, %v2140
        %v2142 = vshrl.u32 %v2060, 16
        %v2144 = vrot.slane %v2142, 4
        %v2145 = vor.u32 %v2144, %v2140
        %v2146 = vrot.slane %v2145, 4
        %v2148 = vshll.u32 %v2061, 16
        %v2150 = vrot.slane %v2148, 5
        %v2151 = vsel %vm299, %v2146, %v2150
        %v2153 = vshrl.u32 %v2062, 16
        %v2155 = vrot.slane %v2153, 4
        %v2156 = vshll.u32 %v2062, 16
        %v2158 = vrot.slane %v2156, 5
        %v2159 = vor.u32 %v2155, %v2158
        %v2160 = vrot.slane %v2159, 4
        %v2162 = vshll.u32 %v2063, 16
        %v2164 = vrot.slane %v2162, 5
        %v2165 = vsel %vm299, %v2160, %v2164
        %v2166 = vshrl.u32 %v2063, 16
        %v2168 = vrot.slane %v2166, 4
        %v2169 = vor.u32 %v2168, %v2164
        %v2170 = vrot.slane %v2169, 4
        %v2172 = vshll.u32 %v2064, 16
        %v2174 = vrot.slane %v2172, 5
        %v2175 = vsel %vm299, %v2170, %v2174
        %v2177 = vshrl.u32 %v2065, 16
        %v2179 = vrot.slane %v2177, 4
        %v2180 = vshll.u32 %v2065, 16
        %v2182 = vrot.slane %v2180, 5
        %v2183 = vor.u32 %v2179, %v2182
        %v2184 = vrot.slane %v2183, 4
        %v2186 = vshll.u32 %v2066, 16
        %v2188 = vrot.slane %v2186, 5
        %v2189 = vsel %vm299, %v2184, %v2188
        %v2190 = vshrl.u32 %v2066, 16
        %v2192 = vrot.slane %v2190, 4
        %v2193 = vor.u32 %v2192, %v2188
        %v2194 = vrot.slane %v2193, 4
        %v2196 = vshll.u32 %v2067, 16
        %v2198 = vrot.slane %v2196, 5
        %v2199 = vsel %vm299, %v2194, %v2198
        %v2201 = vshrl.u32 %v2068, 16
        %v2203 = vrot.slane %v2201, 4
        %v2204 = vshll.u32 %v2068, 16
        %v2206 = vrot.slane %v2204, 5
        %v2207 = vor.u32 %v2203, %v2206
        %v2208 = vrot.slane %v2207, 4
        %v2210 = vshll.u32 %v2069, 16
        %v2212 = vrot.slane %v2210, 5
        %v2213 = vsel %vm299, %v2208, %v2212
        %v2214 = vshrl.u32 %v2069, 16
        %v2216 = vrot.slane %v2214, 4
        %v2217 = vor.u32 %v2216, %v2212
        %v2218 = vrot.slane %v2217, 4
        %v2220 = vshll.u32 %v2070, 16
        %v2222 = vrot.slane %v2220, 5
        %v2223 = vsel %vm299, %v2218, %v2222
        %v2225 = vshrl.u32 %v2071, 16
        %v2227 = vrot.slane %v2225, 4
        %v2228 = vshll.u32 %v2071, 16
        %v2230 = vrot.slane %v2228, 5
        %v2231 = vor.u32 %v2227, %v2230
        %v2232 = vrot.slane %v2231, 4
        %v2234 = vshll.u32 %v2072, 16
        %v2236 = vrot.slane %v2234, 5
        %v2237 = vsel %vm299, %v2232, %v2236
        %v2238 = vshrl.u32 %v2072, 16
        %v2240 = vrot.slane %v2238, 4
        %v2241 = vor.u32 %v2240, %v2236
        %v2242 = vrot.slane %v2241, 4
        %v2244 = vshll.u32 %v2073, 16
        %v2246 = vrot.slane %v2244, 5
        %v2247 = vsel %vm299, %v2242, %v2246
        %v2249 = vshrl.u32 %v2074, 16
        %v2251 = vrot.slane %v2249, 4
        %v2252 = vshll.u32 %v2074, 16
        %v2254 = vrot.slane %v2252, 5
        %v2255 = vor.u32 %v2251, %v2254
        %v2256 = vrot.slane %v2255, 4
        %v2258 = vshll.u32 %v2075, 16
        %v2260 = vrot.slane %v2258, 5
        %v2261 = vsel %vm299, %v2256, %v2260
        %v2262 = vshrl.u32 %v2075, 16
        %v2264 = vrot.slane %v2262, 4
        %v2265 = vor.u32 %v2264, %v2260
        %v2266 = vrot.slane %v2265, 4
        %v2268 = vshll.u32 %v2076, 16
        %v2270 = vrot.slane %v2268, 5
        %v2271 = vsel %vm299, %v2266, %v2270
        %v2273 = vshrl.u32 %v2077, 16
        %v2275 = vrot.slane %v2273, 4
        %v2276 = vshll.u32 %v2077, 16
        %v2278 = vrot.slane %v2276, 5
        %v2279 = vor.u32 %v2275, %v2278
        %v2280 = vrot.slane %v2279, 4
        %v2282 = vshll.u32 %v2078, 16
        %v2284 = vrot.slane %v2282, 5
        %v2285 = vsel %vm299, %v2280, %v2284
        %v2286 = vshrl.u32 %v2078, 16
        %v2288 = vrot.slane %v2286, 4
        %v2289 = vor.u32 %v2288, %v2284
        %v2290 = vrot.slane %v2289, 4
        %v2292 = vshll.u32 %v2079, 16
        %v2294 = vrot.slane %v2292, 5
        %v2295 = vsel %vm299, %v2290, %v2294
        %v2297 = vshrl.u32 %v2080, 16
        %v2299 = vrot.slane %v2297, 4
        %v2300 = vshll.u32 %v2080, 16
        %v2302 = vrot.slane %v2300, 5
        %v2303 = vor.u32 %v2299, %v2302
        %v2304 = vrot.slane %v2303, 4
        %v2306 = vshll.u32 %v2081, 16
        %v2308 = vrot.slane %v2306, 5
        %v2309 = vsel %vm299, %v2304, %v2308
        %v2310 = vshrl.u32 %v2081, 16
        %v2312 = vrot.slane %v2310, 4
        %v2313 = vor.u32 %v2312, %v2308
        %v2314 = vrot.slane %v2313, 4
        %v2316 = vshll.u32 %v2082, 16
        %v2318 = vrot.slane %v2316, 5
        %v2319 = vsel %vm299, %v2314, %v2318
        %v2321 = vshrl.u32 %v2083, 16
        %v2323 = vrot.slane %v2321, 4
        %v2324 = vshll.u32 %v2083, 16
        %v2326 = vrot.slane %v2324, 5
        %v2327 = vor.u32 %v2323, %v2326
        %v2328 = vrot.slane %v2327, 4
        %v2330 = vshll.u32 %v2084, 16
        %v2332 = vrot.slane %v2330, 5
        %v2333 = vsel %vm299, %v2328, %v2332
        %v2334 = vshrl.u32 %v2084, 16
        %v2336 = vrot.slane %v2334, 4
        %v2337 = vor.u32 %v2336, %v2332
        %v2338 = vrot.slane %v2337, 4
        %v2340 = vshll.u32 %v2085, 16
        %v2342 = vrot.slane %v2340, 5
        %v2343 = vsel %vm299, %v2338, %v2342
        %v2345 = vshrl.u32 %v2086, 16
        %v2347 = vrot.slane %v2345, 4
        %v2348 = vshll.u32 %v2086, 16
        %v2350 = vrot.slane %v2348, 5
        %v2351 = vor.u32 %v2347, %v2350
        %v2352 = vrot.slane %v2351, 4
        %v2354 = vshll.u32 %v2087, 16
        %v2356 = vrot.slane %v2354, 5
        %v2357 = vsel %vm299, %v2352, %v2356
        %v2358 = vshrl.u32 %v2087, 16
        %v2360 = vrot.slane %v2358, 4
        %v2361 = vor.u32 %v2360, %v2356
        %v2362 = vrot.slane %v2361, 4
        %v2364 = vshll.u32 %v2088, 16
        %v2366 = vrot.slane %v2364, 5
        %v2367 = vsel %vm299, %v2362, %v2366
        %v2369 = vshrl.u32 %v2089, 16
        %v2371 = vrot.slane %v2369, 4
        %v2372 = vshll.u32 %v2089, 16
        %v2374 = vrot.slane %v2372, 5
        %v2375 = vor.u32 %v2371, %v2374
        %v2376 = vrot.slane %v2375, 4
        %v2378 = vshll.u32 %v2090, 16
        %v2380 = vrot.slane %v2378, 5
        %v2381 = vsel %vm299, %v2376, %v2380
        %v2382 = vshrl.u32 %v2090, 16
        %v2384 = vrot.slane %v2382, 4
        %v2385 = vor.u32 %v2384, %v2380
        %v2386 = vrot.slane %v2385, 4
        %v2388 = vshll.u32 %v2091, 16
        %v2390 = vrot.slane %v2388, 5
        %v2391 = vsel %vm299, %v2386, %v2390
        %v2393 = vshrl.u32 %v2092, 16
        %v2395 = vrot.slane %v2393, 4
        %v2396 = vshll.u32 %v2092, 16
        %v2398 = vrot.slane %v2396, 5
        %v2399 = vor.u32 %v2395, %v2398
        %v2400 = vrot.slane %v2399, 4
        %v2402 = vshll.u32 %v2093, 16
        %v2404 = vrot.slane %v2402, 5
        %v2405 = vsel %vm299, %v2400, %v2404
        %v2406 = vshrl.u32 %v2093, 16
        %v2408 = vrot.slane %v2406, 4
        %v2409 = vor.u32 %v2408, %v2404
        %v2410 = vrot.slane %v2409, 4
        %v2412 = vshll.u32 %v2094, 16
        %v2414 = vrot.slane %v2412, 5
        %v2415 = vsel %vm299, %v2410, %v2414
        %v2417 = vshrl.u32 %v2095, 16
        %v2419 = vrot.slane %v2417, 4
        %v2420 = vshll.u32 %v2095, 16
        %v2422 = vrot.slane %v2420, 5
        %v2423 = vor.u32 %v2419, %v2422
        %v2424 = vrot.slane %v2423, 4
        %v2426 = vshll.u32 %v2096, 16
        %v2428 = vrot.slane %v2426, 5
        %v2429 = vsel %vm299, %v2424, %v2428
        %v2430 = vshrl.u32 %v2096, 16
        %v2432 = vrot.slane %v2430, 4
        %v2433 = vor.u32 %v2432, %v2428
        %v2434 = vrot.slane %v2433, 4
        %v2436 = vshll.u32 %v2097, 16
        %v2438 = vrot.slane %v2436, 5
        %v2439 = vsel %vm299, %v2434, %v2438
        %v2441 = vshrl.u32 %v2098, 16
        %v2443 = vrot.slane %v2441, 4
        %v2444 = vshll.u32 %v2098, 16
        %v2446 = vrot.slane %v2444, 5
        %v2447 = vor.u32 %v2443, %v2446
        %v2448 = vrot.slane %v2447, 4
        %v2450 = vshll.u32 %v2099, 16
        %v2452 = vrot.slane %v2450, 5
        %v2453 = vsel %vm299, %v2448, %v2452
        %v2454 = vshrl.u32 %v2099, 16
        %v2456 = vrot.slane %v2454, 4
        %v2457 = vor.u32 %v2456, %v2452
        %v2458 = vrot.slane %v2457, 4
        %v2460 = vshll.u32 %v2100, 16
        %v2462 = vrot.slane %v2460, 5
        %v2463 = vsel %vm299, %v2458, %v2462
        %v2465 = vshrl.u32 %v2101, 16
        %v2467 = vrot.slane %v2465, 4
        %v2468 = vshll.u32 %v2101, 16
        %v2470 = vrot.slane %v2468, 5
        %v2471 = vor.u32 %v2467, %v2470
        %v2472 = vrot.slane %v2471, 4
        %v2474 = vshll.u32 %v2102, 16
        %v2476 = vrot.slane %v2474, 5
        %v2477 = vsel %vm299, %v2472, %v2476
        %v2478 = vshrl.u32 %v2102, 16
        %v2480 = vrot.slane %v2478, 4
        %v2481 = vor.u32 %v2480, %v2476
        %v2482 = vrot.slane %v2481, 4
        %v2484 = vshll.u32 %v2103, 16
        %v2486 = vrot.slane %v2484, 5
        %v2487 = vsel %vm299, %v2482, %v2486
        %s2488 = scalar_lea.vmem [#allocation5], 16
        %v2489 = vld [vmem:[%s2488] sm:$0xf]
        %v2490 = vunpack.c.l.b16 %v2117
        %v2491 = vunpack.c.l.b16 %v2127
        %v2492 = vunpack.c.l.b16 %v2141
        %v2493 = vunpack.c.l.b16 %v2151
        %v2494 = vunpack.c.l.b16 %v2165
        %v2495 = vunpack.c.l.b16 %v2175
        %v2496 = vunpack.c.l.b16 %v2189
        %v2497 = vunpack.c.l.b16 %v2199
        %v2498 = vunpack.c.l.b16 %v2213
        %v2499 = vunpack.c.l.b16 %v2223
        %v2500 = vunpack.c.l.b16 %v2237
        %v2501 = vunpack.c.l.b16 %v2247
        %v2502 = vunpack.c.l.b16 %v2261
        %v2503 = vunpack.c.l.b16 %v2271
        %v2504 = vunpack.c.l.b16 %v2285
        %v2505 = vunpack.c.l.b16 %v2295
        %v2506 = vunpack.c.l.b16 %v2309
        %v2507 = vunpack.c.l.b16 %v2319
        %v2508 = vunpack.c.l.b16 %v2333
        %v2509 = vunpack.c.l.b16 %v2343
        %v2510 = vunpack.c.l.b16 %v2357
        %v2511 = vunpack.c.l.b16 %v2367
        %v2512 = vunpack.c.l.b16 %v2381
        %v2513 = vunpack.c.l.b16 %v2391
        %v2514 = vunpack.c.l.b16 %v2405
        %v2515 = vunpack.c.l.b16 %v2415
        %v2516 = vunpack.c.l.b16 %v2429
        %v2517 = vunpack.c.l.b16 %v2439
        %v2518 = vunpack.c.l.b16 %v2453
        %v2519 = vunpack.c.l.b16 %v2463
        %v2520 = vunpack.c.l.b16 %v2477
        %v2521 = vunpack.c.l.b16 %v2487
        %v2522 = vpack.c.b16 %v2491, %v2490
        %v2523 = vpack.c.b16 %v2493, %v2492
        %v2524 = vpack.c.b16 %v2495, %v2494
        %v2525 = vpack.c.b16 %v2497, %v2496
        %v2526 = vpack.c.b16 %v2499, %v2498
        %v2527 = vpack.c.b16 %v2501, %v2500
        %v2528 = vpack.c.b16 %v2503, %v2502
        %v2529 = vpack.c.b16 %v2505, %v2504
        %v2530 = vpack.c.b16 %v2507, %v2506
        %v2531 = vpack.c.b16 %v2509, %v2508
        %v2532 = vpack.c.b16 %v2511, %v2510
        %v2533 = vpack.c.b16 %v2513, %v2512
        %v2534 = vpack.c.b16 %v2515, %v2514
        %v2535 = vpack.c.b16 %v2517, %v2516
        %v2536 = vpack.c.b16 %v2519, %v2518
        %v2537 = vpack.c.b16 %v2521, %v2520
        %v2539 = vsel %vm734, %v2522, 0
        %v2542 = vsel %vm734, %v2523, 0
        %v2545 = vsel %vm734, %v2524, 0
        %v2548 = vsel %vm734, %v2525, 0
        %v2551 = vsel %vm734, %v2526, 0
        %v2554 = vsel %vm734, %v2527, 0
        %v2557 = vsel %vm734, %v2528, 0
        %v2560 = vsel %vm734, %v2529, 0
        %v2563 = vsel %vm734, %v2530, 0
        %v2566 = vsel %vm734, %v2531, 0
        %v2569 = vsel %vm734, %v2532, 0
        %v2572 = vsel %vm734, %v2533, 0
        %v2575 = vsel %vm734, %v2534, 0
        %v2578 = vsel %vm734, %v2535, 0
        %v2581 = vsel %vm734, %v2536, 0
        %v2584 = vsel %vm734, %v2537, 0
        %v2587 = vsel %vm783, %v2489, 0
        %2589 = vmatprep.subr.bf16.mxu0 0
        %2590 = vmatpush1.bf16.msra.mxu0 %v2587
        %2591 = vmatprep.subr.bf16.mxu0 0
        %2592 = vmatpush1.bf16.msra.mxu0 0
        %2593 = vmatprep.subr.bf16.mxu0 0
        %2594 = vmatpush1.bf16.msra.mxu0 0
        %2595 = vmatprep.subr.bf16.mxu0 0
        %2596 = vmatpush1.bf16.msra.mxu0 0
        %2597 = vmatprep.subr.bf16.mxu0 0
        %2598 = vmatpush1.bf16.msra.mxu0 0
        %2599 = vmatprep.subr.bf16.mxu0 0
        %2600 = vmatpush1.bf16.msra.mxu0 0
        %2601 = vmatprep.subr.bf16.mxu0 0
        %2602 = vmatpush1.bf16.msra.mxu0 0
        %2603 = vmatprep.subr.bf16.mxu0 0
        %2604 = vmatpush1.bf16.msra.mxu0 0
        %2605 = vmatprep.subr.bf16.mxu0 0
        %2606 = vmatpush1.bf16.msra.mxu0 0
        %2607 = vmatprep.subr.bf16.mxu0 0
        %2608 = vmatpush1.bf16.msra.mxu0 0
        %2609 = vmatprep.subr.bf16.mxu0 0
        %2610 = vmatpush1.bf16.msra.mxu0 0
        %2611 = vmatprep.subr.bf16.mxu0 0
        %2612 = vmatpush1.bf16.msra.mxu0 0
        %2613 = vmatprep.subr.bf16.mxu0 0
        %2614 = vmatpush1.bf16.msra.mxu0 0
        %2615 = vmatprep.subr.bf16.mxu0 0
        %2616 = vmatpush1.bf16.msra.mxu0 0
        %2617 = vmatprep.subr.bf16.mxu0 0
        %2618 = vmatpush1.bf16.msra.mxu0 0
        %2619 = vmatprep.subr.bf16.mxu0 0
        %2620 = vmatpush1.bf16.msra.mxu0 0
        %2621 = vmatprep.mubr.bf16.mxu0 0
        %2622 = vmatmul.mubr.bf16.gmra.mrb[0].mxu0 %v2539
        %v2623 = vpop.f32.mrb[0].mxu0
        %v2624 = vadd.f32 0.0, %v2623
        %v2625 = vpop.f32.mrb[0].mxu0
        %v2626 = vpop.f32.mrb[0].mxu0
        %v2627 = vadd.f32 0.0, %v2626
        %v2628 = vpop.f32.mrb[0].mxu0
        %2629 = vmatprep.mubr.bf16.mxu0 0
        %2630 = vmatmul.mubr.bf16.gmra.mrb[0].mxu0 %v2542
        %v2631 = vpop.f32.mrb[0].mxu0
        %v2632 = vadd.f32 0.0, %v2631
        %v2633 = vpop.f32.mrb[0].mxu0
        %v2634 = vpop.f32.mrb[0].mxu0
        %v2635 = vadd.f32 0.0, %v2634
        %v2636 = vpop.f32.mrb[0].mxu0
        %2637 = vmatprep.mubr.bf16.mxu0 0
        %2638 = vmatmul.mubr.bf16.gmra.mrb[0].mxu0 %v2545
        %v2639 = vpop.f32.mrb[0].mxu0
        %v2640 = vadd.f32 0.0, %v2639
        %v2641 = vpop.f32.mrb[0].mxu0
        %v2642 = vpop.f32.mrb[0].mxu0
        %v2643 = vadd.f32 0.0, %v2642
        %v2644 = vpop.f32.mrb[0].mxu0
        %2645 = vmatprep.mubr.bf16.mxu0 0
        %2646 = vmatmul.mubr.bf16.gmra.mrb[0].mxu0 %v2548
        %v2647 = vpop.f32.mrb[0].mxu0
        %v2648 = vadd.f32 0.0, %v2647
        %v2649 = vpop.f32.mrb[0].mxu0
        %v2650 = vpop.f32.mrb[0].mxu0
        %v2651 = vadd.f32 0.0, %v2650
        %v2652 = vpop.f32.mrb[0].mxu0
        %2653 = vmatprep.mubr.bf16.mxu0 0
        %2654 = vmatmul.mubr.bf16.gmra.mrb[0].mxu0 %v2551
        %v2655 = vpop.f32.mrb[0].mxu0
        %v2656 = vadd.f32 0.0, %v2655
        %v2657 = vpop.f32.mrb[0].mxu0
        %v2658 = vpop.f32.mrb[0].mxu0
        %v2659 = vadd.f32 0.0, %v2658
        %v2660 = vpop.f32.mrb[0].mxu0
        %2661 = vmatprep.mubr.bf16.mxu0 0
        %2662 = vmatmul.mubr.bf16.gmra.mrb[0].mxu0 %v2554
        %v2663 = vpop.f32.mrb[0].mxu0
        %v2664 = vadd.f32 0.0, %v2663
        %v2665 = vpop.f32.mrb[0].mxu0
        %v2666 = vpop.f32.mrb[0].mxu0
        %v2667 = vadd.f32 0.0, %v2666
        %v2668 = vpop.f32.mrb[0].mxu0
        %2669 = vmatprep.mubr.bf16.mxu0 0
        %2670 = vmatmul.mubr.bf16.gmra.mrb[0].mxu0 %v2557
        %v2671 = vpop.f32.mrb[0].mxu0
        %v2672 = vadd.f32 0.0, %v2671
        %v2673 = vpop.f32.mrb[0].mxu0
        %v2674 = vpop.f32.mrb[0].mxu0
        %v2675 = vadd.f32 0.0, %v2674
        %v2676 = vpop.f32.mrb[0].mxu0
        %2677 = vmatprep.mubr.bf16.mxu0 0
        %2678 = vmatmul.mubr.bf16.gmra.mrb[0].mxu0 %v2560
        %v2679 = vpop.f32.mrb[0].mxu0
        %v2680 = vadd.f32 0.0, %v2679
        %v2681 = vpop.f32.mrb[0].mxu0
        %v2682 = vpop.f32.mrb[0].mxu0
        %v2683 = vadd.f32 0.0, %v2682
        %v2684 = vpop.f32.mrb[0].mxu0
        %2685 = vmatprep.mubr.bf16.mxu0 0
        %2686 = vmatmul.mubr.bf16.gmra.mrb[0].mxu0 %v2563
        %v2687 = vpop.f32.mrb[0].mxu0
        %v2688 = vadd.f32 0.0, %v2687
        %v2689 = vpop.f32.mrb[0].mxu0
        %v2690 = vpop.f32.mrb[0].mxu0
        %v2691 = vadd.f32 0.0, %v2690
        %v2692 = vpop.f32.mrb[0].mxu0
        %2693 = vmatprep.mubr.bf16.mxu0 0
        %2694 = vmatmul.mubr.bf16.gmra.mrb[0].mxu0 %v2566
        %v2695 = vpop.f32.mrb[0].mxu0
        %v2696 = vadd.f32 0.0, %v2695
        %v2697 = vpop.f32.mrb[0].mxu0
        %v2698 = vpop.f32.mrb[0].mxu0
        %v2699 = vadd.f32 0.0, %v2698
        %v2700 = vpop.f32.mrb[0].mxu0
        %2701 = vmatprep.mubr.bf16.mxu0 0
        %2702 = vmatmul.mubr.bf16.gmra.mrb[0].mxu0 %v2569
        %v2703 = vpop.f32.mrb[0].mxu0
        %v2704 = vadd.f32 0.0, %v2703
        %v2705 = vpop.f32.mrb[0].mxu0
        %v2706 = vpop.f32.mrb[0].mxu0
        %v2707 = vadd.f32 0.0, %v2706
        %v2708 = vpop.f32.mrb[0].mxu0
        %2709 = vmatprep.mubr.bf16.mxu0 0
        %2710 = vmatmul.mubr.bf16.gmra.mrb[0].mxu0 %v2572
        %v2711 = vpop.f32.mrb[0].mxu0
        %v2712 = vadd.f32 0.0, %v2711
        %v2713 = vpop.f32.mrb[0].mxu0
        %v2714 = vpop.f32.mrb[0].mxu0
        %v2715 = vadd.f32 0.0, %v2714
        %v2716 = vpop.f32.mrb[0].mxu0
        %2717 = vmatprep.mubr.bf16.mxu0 0
        %2718 = vmatmul.mubr.bf16.gmra.mrb[0].mxu0 %v2575
        %v2719 = vpop.f32.mrb[0].mxu0
        %v2720 = vadd.f32 0.0, %v2719
        %v2721 = vpop.f32.mrb[0].mxu0
        %v2722 = vpop.f32.mrb[0].mxu0
        %v2723 = vadd.f32 0.0, %v2722
        %v2724 = vpop.f32.mrb[0].mxu0
        %2725 = vmatprep.mubr.bf16.mxu0 0
        %2726 = vmatmul.mubr.bf16.gmra.mrb[0].mxu0 %v2578
        %v2727 = vpop.f32.mrb[0].mxu0
        %v2728 = vadd.f32 0.0, %v2727
        %v2729 = vpop.f32.mrb[0].mxu0
        %v2730 = vpop.f32.mrb[0].mxu0
        %v2731 = vadd.f32 0.0, %v2730
        %v2732 = vpop.f32.mrb[0].mxu0
        %2733 = vmatprep.mubr.bf16.mxu0 0
        %2734 = vmatmul.mubr.bf16.gmra.mrb[0].mxu0 %v2581
        %v2735 = vpop.f32.mrb[0].mxu0
        %v2736 = vadd.f32 0.0, %v2735
        %v2737 = vpop.f32.mrb[0].mxu0
        %v2738 = vpop.f32.mrb[0].mxu0
        %v2739 = vadd.f32 0.0, %v2738
        %v2740 = vpop.f32.mrb[0].mxu0
        %2741 = vmatprep.mubr.bf16.mxu0 0
        %2742 = vmatmul.mubr.bf16.gmra.mrb[0].mxu0 %v2584
        %v2743 = vpop.f32.mrb[0].mxu0
        %v2744 = vadd.f32 0.0, %v2743
        %v2745 = vpop.f32.mrb[0].mxu0
        %v2746 = vpop.f32.mrb[0].mxu0
        %v2747 = vadd.f32 0.0, %v2746
        %v2748 = vpop.f32.mrb[0].mxu0
        %2749 = vdwg.mxu0
        %v2750 = vadd.f32 %v2024, %v2624
        %v2751 = vadd.f32 %v2025, %v2627
        %v2752 = vadd.f32 %v2026, %v2632
        %v2753 = vadd.f32 %v2027, %v2635
        %v2754 = vadd.f32 %v2028, %v2640
        %v2755 = vadd.f32 %v2029, %v2643
        %v2756 = vadd.f32 %v2030, %v2648
        %v2757 = vadd.f32 %v2031, %v2651
        %v2758 = vadd.f32 %v2032, %v2656
        %v2759 = vadd.f32 %v2033, %v2659
        %v2760 = vadd.f32 %v2034, %v2664
        %v2761 = vadd.f32 %v2035, %v2667
        %v2762 = vadd.f32 %v2036, %v2672
        %v2763 = vadd.f32 %v2037, %v2675
        %v2764 = vadd.f32 %v2038, %v2680
        %v2765 = vadd.f32 %v2039, %v2683
        %v2766 = vadd.f32 %v2040, %v2688
        %v2767 = vadd.f32 %v2041, %v2691
        %v2768 = vadd.f32 %v2042, %v2696
        %v2769 = vadd.f32 %v2043, %v2699
        %v2770 = vadd.f32 %v2044, %v2704
        %v2771 = vadd.f32 %v2045, %v2707
        %v2772 = vadd.f32 %v2046, %v2712
        %v2773 = vadd.f32 %v2047, %v2715
        %v2774 = vadd.f32 %v2048, %v2720
        %v2775 = vadd.f32 %v2049, %v2723
        %v2776 = vadd.f32 %v2050, %v2728
        %v2777 = vadd.f32 %v2051, %v2731
        %v2778 = vadd.f32 %v2052, %v2736
        %v2779 = vadd.f32 %v2053, %v2739
        %v2780 = vadd.f32 %v2054, %v2744
        %v2781 = vadd.f32 %v2055, %v2747
        %v2782 = vld [vmem:[%s1697] sm:$0xe]
        %v2783 = vld [vmem:[%s1697 + $0xc] sm:$0xe]
        %v2784 = vld [vmem:[%s1697 + $0x18] sm:$0xe]
        %v2785 = vld [vmem:[%s1697 + $0x24] sm:$0xe]
        %v2786 = vld [vmem:[%s1697 + $0x30] sm:$0xe]
        %v2787 = vld [vmem:[%s1697 + $0x3c] sm:$0xe]
        %v2788 = vld [vmem:[%s1697 + $0x48] sm:$0xe]
        %v2789 = vld [vmem:[%s1697 + $0x54] sm:$0xe]
        %v2790 = vld [vmem:[%s1697 + $0x60] sm:$0xe]
        %v2791 = vld [vmem:[%s1697 + $0x6c] sm:$0xe]
        %v2792 = vld [vmem:[%s1697 + $0x78] sm:$0xe]
        %v2793 = vld [vmem:[%s1697 + $0x84] sm:$0xe]
        %v2794 = vld [vmem:[%s1697 + $0x90] sm:$0xe]
        %v2795 = vld [vmem:[%s1697 + $0x9c] sm:$0xe]
        %v2796 = vld [vmem:[%s1697 + $0xa8] sm:$0xe]
        %v2797 = vld [vmem:[%s1697 + $0xb4] sm:$0xe]
        %v2846 = vrot.slane %v2782, 5
        %v2847 = vrot.slane %v2846, 4
        %v2848 = vrot.slane %v2057, 5
        %v2849 = vsel %vm1290, %v2847, %v2848
        %v2850 = vrot.slane %v2848, 4
        %v2851 = vrot.slane %v2058, 5
        %v2852 = vsel %vm1290, %v2850, %v2851
        %v2853 = vrot.slane %v2783, 5
        %v2854 = vrot.slane %v2853, 4
        %v2855 = vrot.slane %v2060, 5
        %v2856 = vsel %vm1290, %v2854, %v2855
        %v2857 = vrot.slane %v2855, 4
        %v2858 = vrot.slane %v2061, 5
        %v2859 = vsel %vm1290, %v2857, %v2858
        %v2860 = vrot.slane %v2784, 5
        %v2861 = vrot.slane %v2860, 4
        %v2862 = vrot.slane %v2063, 5
        %v2863 = vsel %vm1290, %v2861, %v2862
        %v2864 = vrot.slane %v2862, 4
        %v2865 = vrot.slane %v2064, 5
        %v2866 = vsel %vm1290, %v2864, %v2865
        %v2867 = vrot.slane %v2785, 5
        %v2868 = vrot.slane %v2867, 4
        %v2869 = vrot.slane %v2066, 5
        %v2870 = vsel %vm1290, %v2868, %v2869
        %v2871 = vrot.slane %v2869, 4
        %v2872 = vrot.slane %v2067, 5
        %v2873 = vsel %vm1290, %v2871, %v2872
        %v2874 = vrot.slane %v2786, 5
        %v2875 = vrot.slane %v2874, 4
        %v2876 = vrot.slane %v2069, 5
        %v2877 = vsel %vm1290, %v2875, %v2876
        %v2878 = vrot.slane %v2876, 4
        %v2879 = vrot.slane %v2070, 5
        %v2880 = vsel %vm1290, %v2878, %v2879
        %v2881 = vrot.slane %v2787, 5
        %v2882 = vrot.slane %v2881, 4
        %v2883 = vrot.slane %v2072, 5
        %v2884 = vsel %vm1290, %v2882, %v2883
        %v2885 = vrot.slane %v2883, 4
        %v2886 = vrot.slane %v2073, 5
        %v2887 = vsel %vm1290, %v2885, %v2886
        %v2888 = vrot.slane %v2788, 5
        %v2889 = vrot.slane %v2888, 4
        %v2890 = vrot.slane %v2075, 5
        %v2891 = vsel %vm1290, %v2889, %v2890
        %v2892 = vrot.slane %v2890, 4
        %v2893 = vrot.slane %v2076, 5
        %v2894 = vsel %vm1290, %v2892, %v2893
        %v2895 = vrot.slane %v2789, 5
        %v2896 = vrot.slane %v2895, 4
        %v2897 = vrot.slane %v2078, 5
        %v2898 = vsel %vm1290, %v2896, %v2897
        %v2899 = vrot.slane %v2897, 4
        %v2900 = vrot.slane %v2079, 5
        %v2901 = vsel %vm1290, %v2899, %v2900
        %v2902 = vrot.slane %v2790, 5
        %v2903 = vrot.slane %v2902, 4
        %v2904 = vrot.slane %v2081, 5
        %v2905 = vsel %vm1290, %v2903, %v2904
        %v2906 = vrot.slane %v2904, 4
        %v2907 = vrot.slane %v2082, 5
        %v2908 = vsel %vm1290, %v2906, %v2907
        %v2909 = vrot.slane %v2791, 5
        %v2910 = vrot.slane %v2909, 4
        %v2911 = vrot.slane %v2084, 5
        %v2912 = vsel %vm1290, %v2910, %v2911
        %v2913 = vrot.slane %v2911, 4
        %v2914 = vrot.slane %v2085, 5
        %v2915 = vsel %vm1290, %v2913, %v2914
        %v2916 = vrot.slane %v2792, 5
        %v2917 = vrot.slane %v2916, 4
        %v2918 = vrot.slane %v2087, 5
        %v2919 = vsel %vm1290, %v2917, %v2918
        %v2920 = vrot.slane %v2918, 4
        %v2921 = vrot.slane %v2088, 5
        %v2922 = vsel %vm1290, %v2920, %v2921
        %v2923 = vrot.slane %v2793, 5
        %v2924 = vrot.slane %v2923, 4
        %v2925 = vrot.slane %v2090, 5
        %v2926 = vsel %vm1290, %v2924, %v2925
        %v2927 = vrot.slane %v2925, 4
        %v2928 = vrot.slane %v2091, 5
        %v2929 = vsel %vm1290, %v2927, %v2928
        %v2930 = vrot.slane %v2794, 5
        %v2931 = vrot.slane %v2930, 4
        %v2932 = vrot.slane %v2093, 5
        %v2933 = vsel %vm1290, %v2931, %v2932
        %v2934 = vrot.slane %v2932, 4
        %v2935 = vrot.slane %v2094, 5
        %v2936 = vsel %vm1290, %v2934, %v2935
        %v2937 = vrot.slane %v2795, 5
        %v2938 = vrot.slane %v2937, 4
        %v2939 = vrot.slane %v2096, 5
        %v2940 = vsel %vm1290, %v2938, %v2939
        %v2941 = vrot.slane %v2939, 4
        %v2942 = vrot.slane %v2097, 5
        %v2943 = vsel %vm1290, %v2941, %v2942
        %v2944 = vrot.slane %v2796, 5
        %v2945 = vrot.slane %v2944, 4
        %v2946 = vrot.slane %v2099, 5
        %v2947 = vsel %vm1290, %v2945, %v2946
        %v2948 = vrot.slane %v2946, 4
        %v2949 = vrot.slane %v2100, 5
        %v2950 = vsel %vm1290, %v2948, %v2949
        %v2951 = vrot.slane %v2797, 5
        %v2952 = vrot.slane %v2951, 4
        %v2953 = vrot.slane %v2102, 5
        %v2954 = vsel %vm1290, %v2952, %v2953
        %v2955 = vrot.slane %v2953, 4
        %v2956 = vrot.slane %v2103, 5
        %v2957 = vsel %vm1290, %v2955, %v2956
        %s2958 = scalar_lea.vmem [#allocation5], 20
        %v2959 = vld [vmem:[%s2958] sm:$0xf]
        %v2960 = vunpack.c.l.b16 %v2849
        %v2961 = vunpack.c.l.b16 %v2852
        %v2962 = vunpack.c.l.b16 %v2856
        %v2963 = vunpack.c.l.b16 %v2859
        %v2964 = vunpack.c.l.b16 %v2863
        %v2965 = vunpack.c.l.b16 %v2866
        %v2966 = vunpack.c.l.b16 %v2870
        %v2967 = vunpack.c.l.b16 %v2873
        %v2968 = vunpack.c.l.b16 %v2877
        %v2969 = vunpack.c.l.b16 %v2880
        %v2970 = vunpack.c.l.b16 %v2884
        %v2971 = vunpack.c.l.b16 %v2887
        %v2972 = vunpack.c.l.b16 %v2891
        %v2973 = vunpack.c.l.b16 %v2894
        %v2974 = vunpack.c.l.b16 %v2898
        %v2975 = vunpack.c.l.b16 %v2901
        %v2976 = vunpack.c.l.b16 %v2905
        %v2977 = vunpack.c.l.b16 %v2908
        %v2978 = vunpack.c.l.b16 %v2912
        %v2979 = vunpack.c.l.b16 %v2915
        %v2980 = vunpack.c.l.b16 %v2919
        %v2981 = vunpack.c.l.b16 %v2922
        %v2982 = vunpack.c.l.b16 %v2926
        %v2983 = vunpack.c.l.b16 %v2929
        %v2984 = vunpack.c.l.b16 %v2933
        %v2985 = vunpack.c.l.b16 %v2936
        %v2986 = vunpack.c.l.b16 %v2940
        %v2987 = vunpack.c.l.b16 %v2943
        %v2988 = vunpack.c.l.b16 %v2947
        %v2989 = vunpack.c.l.b16 %v2950
        %v2990 = vunpack.c.l.b16 %v2954
        %v2991 = vunpack.c.l.b16 %v2957
        %v2992 = vpack.c.b16 %v2961, %v2960
        %v2993 = vpack.c.b16 %v2963, %v2962
        %v2994 = vpack.c.b16 %v2965, %v2964
        %v2995 = vpack.c.b16 %v2967, %v2966
        %v2996 = vpack.c.b16 %v2969, %v2968
        %v2997 = vpack.c.b16 %v2971, %v2970
        %v2998 = vpack.c.b16 %v2973, %v2972
        %v2999 = vpack.c.b16 %v2975, %v2974
        %v3000 = vpack.c.b16 %v2977, %v2976
        %v3001 = vpack.c.b16 %v2979, %v2978
        %v3002 = vpack.c.b16 %v2981, %v2980
        %v3003 = vpack.c.b16 %v2983, %v2982
        %v3004 = vpack.c.b16 %v2985, %v2984
        %v3005 = vpack.c.b16 %v2987, %v2986
        %v3006 = vpack.c.b16 %v2989, %v2988
        %v3007 = vpack.c.b16 %v2991, %v2990
        %v3009 = vsel %vm734, %v2992, 0
        %v3012 = vsel %vm734, %v2993, 0
        %v3015 = vsel %vm734, %v2994, 0
        %v3018 = vsel %vm734, %v2995, 0
        %v3021 = vsel %vm734, %v2996, 0
        %v3024 = vsel %vm734, %v2997, 0
        %v3027 = vsel %vm734, %v2998, 0
        %v3030 = vsel %vm734, %v2999, 0
        %v3033 = vsel %vm734, %v3000, 0
        %v3036 = vsel %vm734, %v3001, 0
        %v3039 = vsel %vm734, %v3002, 0
        %v3042 = vsel %vm734, %v3003, 0
        %v3045 = vsel %vm734, %v3004, 0
        %v3048 = vsel %vm734, %v3005, 0
        %v3051 = vsel %vm734, %v3006, 0
        %v3054 = vsel %vm734, %v3007, 0
        %v3057 = vsel %vm783, %v2959, 0
        %3059 = vmatprep.subr.bf16.mxu0 0
        %3060 = vmatpush1.bf16.msra.mxu0 %v3057
        %3061 = vmatprep.subr.bf16.mxu0 0
        %3062 = vmatpush1.bf16.msra.mxu0 0
        %3063 = vmatprep.subr.bf16.mxu0 0
        %3064 = vmatpush1.bf16.msra.mxu0 0
        %3065 = vmatprep.subr.bf16.mxu0 0
        %3066 = vmatpush1.bf16.msra.mxu0 0
        %3067 = vmatprep.subr.bf16.mxu0 0
        %3068 = vmatpush1.bf16.msra.mxu0 0
        %3069 = vmatprep.subr.bf16.mxu0 0
        %3070 = vmatpush1.bf16.msra.mxu0 0
        %3071 = vmatprep.subr.bf16.mxu0 0
        %3072 = vmatpush1.bf16.msra.mxu0 0
        %3073 = vmatprep.subr.bf16.mxu0 0
        %3074 = vmatpush1.bf16.msra.mxu0 0
        %3075 = vmatprep.subr.bf16.mxu0 0
        %3076 = vmatpush1.bf16.msra.mxu0 0
        %3077 = vmatprep.subr.bf16.mxu0 0
        %3078 = vmatpush1.bf16.msra.mxu0 0
        %3079 = vmatprep.subr.bf16.mxu0 0
        %3080 = vmatpush1.bf16.msra.mxu0 0
        %3081 = vmatprep.subr.bf16.mxu0 0
        %3082 = vmatpush1.bf16.msra.mxu0 0
        %3083 = vmatprep.subr.bf16.mxu0 0
        %3084 = vmatpush1.bf16.msra.mxu0 0
        %3085 = vmatprep.subr.bf16.mxu0 0
        %3086 = vmatpush1.bf16.msra.mxu0 0
        %3087 = vmatprep.subr.bf16.mxu0 0
        %3088 = vmatpush1.bf16.msra.mxu0 0
        %3089 = vmatprep.subr.bf16.mxu0 0
        %3090 = vmatpush1.bf16.msra.mxu0 0
        %3091 = vmatprep.mubr.bf16.mxu0 0
        %3092 = vmatmul.mubr.bf16.gmra.mrb[0].mxu0 %v3009
        %v3093 = vpop.f32.mrb[0].mxu0
        %v3094 = vadd.f32 0.0, %v3093
        %v3095 = vpop.f32.mrb[0].mxu0
        %v3096 = vpop.f32.mrb[0].mxu0
        %v3097 = vadd.f32 0.0, %v3096
        %v3098 = vpop.f32.mrb[0].mxu0
        %3099 = vmatprep.mubr.bf16.mxu0 0
        %3100 = vmatmul.mubr.bf16.gmra.mrb[0].mxu0 %v3012
        %v3101 = vpop.f32.mrb[0].mxu0
        %v3102 = vadd.f32 0.0, %v3101
        %v3103 = vpop.f32.mrb[0].mxu0
        %v3104 = vpop.f32.mrb[0].mxu0
        %v3105 = vadd.f32 0.0, %v3104
        %v3106 = vpop.f32.mrb[0].mxu0
        %3107 = vmatprep.mubr.bf16.mxu0 0
        %3108 = vmatmul.mubr.bf16.gmra.mrb[0].mxu0 %v3015
        %v3109 = vpop.f32.mrb[0].mxu0
        %v3110 = vadd.f32 0.0, %v3109
        %v3111 = vpop.f32.mrb[0].mxu0
        %v3112 = vpop.f32.mrb[0].mxu0
        %v3113 = vadd.f32 0.0, %v3112
        %v3114 = vpop.f32.mrb[0].mxu0
        %3115 = vmatprep.mubr.bf16.mxu0 0
        %3116 = vmatmul.mubr.bf16.gmra.mrb[0].mxu0 %v3018
        %v3117 = vpop.f32.mrb[0].mxu0
        %v3118 = vadd.f32 0.0, %v3117
        %v3119 = vpop.f32.mrb[0].mxu0
        %v3120 = vpop.f32.mrb[0].mxu0
        %v3121 = vadd.f32 0.0, %v3120
        %v3122 = vpop.f32.mrb[0].mxu0
        %3123 = vmatprep.mubr.bf16.mxu0 0
        %3124 = vmatmul.mubr.bf16.gmra.mrb[0].mxu0 %v3021
        %v3125 = vpop.f32.mrb[0].mxu0
        %v3126 = vadd.f32 0.0, %v3125
        %v3127 = vpop.f32.mrb[0].mxu0
        %v3128 = vpop.f32.mrb[0].mxu0
        %v3129 = vadd.f32 0.0, %v3128
        %v3130 = vpop.f32.mrb[0].mxu0
        %3131 = vmatprep.mubr.bf16.mxu0 0
        %3132 = vmatmul.mubr.bf16.gmra.mrb[0].mxu0 %v3024
        %v3133 = vpop.f32.mrb[0].mxu0
        %v3134 = vadd.f32 0.0, %v3133
        %v3135 = vpop.f32.mrb[0].mxu0
        %v3136 = vpop.f32.mrb[0].mxu0
        %v3137 = vadd.f32 0.0, %v3136
        %v3138 = vpop.f32.mrb[0].mxu0
        %3139 = vmatprep.mubr.bf16.mxu0 0
        %3140 = vmatmul.mubr.bf16.gmra.mrb[0].mxu0 %v3027
        %v3141 = vpop.f32.mrb[0].mxu0
        %v3142 = vadd.f32 0.0, %v3141
        %v3143 = vpop.f32.mrb[0].mxu0
        %v3144 = vpop.f32.mrb[0].mxu0
        %v3145 = vadd.f32 0.0, %v3144
        %v3146 = vpop.f32.mrb[0].mxu0
        %3147 = vmatprep.mubr.bf16.mxu0 0
        %3148 = vmatmul.mubr.bf16.gmra.mrb[0].mxu0 %v3030
        %v3149 = vpop.f32.mrb[0].mxu0
        %v3150 = vadd.f32 0.0, %v3149
        %v3151 = vpop.f32.mrb[0].mxu0
        %v3152 = vpop.f32.mrb[0].mxu0
        %v3153 = vadd.f32 0.0, %v3152
        %v3154 = vpop.f32.mrb[0].mxu0
        %3155 = vmatprep.mubr.bf16.mxu0 0
        %3156 = vmatmul.mubr.bf16.gmra.mrb[0].mxu0 %v3033
        %v3157 = vpop.f32.mrb[0].mxu0
        %v3158 = vadd.f32 0.0, %v3157
        %v3159 = vpop.f32.mrb[0].mxu0
        %v3160 = vpop.f32.mrb[0].mxu0
        %v3161 = vadd.f32 0.0, %v3160
        %v3162 = vpop.f32.mrb[0].mxu0
        %3163 = vmatprep.mubr.bf16.mxu0 0
        %3164 = vmatmul.mubr.bf16.gmra.mrb[0].mxu0 %v3036
        %v3165 = vpop.f32.mrb[0].mxu0
        %v3166 = vadd.f32 0.0, %v3165
        %v3167 = vpop.f32.mrb[0].mxu0
        %v3168 = vpop.f32.mrb[0].mxu0
        %v3169 = vadd.f32 0.0, %v3168
        %v3170 = vpop.f32.mrb[0].mxu0
        %3171 = vmatprep.mubr.bf16.mxu0 0
        %3172 = vmatmul.mubr.bf16.gmra.mrb[0].mxu0 %v3039
        %v3173 = vpop.f32.mrb[0].mxu0
        %v3174 = vadd.f32 0.0, %v3173
        %v3175 = vpop.f32.mrb[0].mxu0
        %v3176 = vpop.f32.mrb[0].mxu0
        %v3177 = vadd.f32 0.0, %v3176
        %v3178 = vpop.f32.mrb[0].mxu0
        %3179 = vmatprep.mubr.bf16.mxu0 0
        %3180 = vmatmul.mubr.bf16.gmra.mrb[0].mxu0 %v3042
        %v3181 = vpop.f32.mrb[0].mxu0
        %v3182 = vadd.f32 0.0, %v3181
        %v3183 = vpop.f32.mrb[0].mxu0
        %v3184 = vpop.f32.mrb[0].mxu0
        %v3185 = vadd.f32 0.0, %v3184
        %v3186 = vpop.f32.mrb[0].mxu0
        %3187 = vmatprep.mubr.bf16.mxu0 0
        %3188 = vmatmul.mubr.bf16.gmra.mrb[0].mxu0 %v3045
        %v3189 = vpop.f32.mrb[0].mxu0
        %v3190 = vadd.f32 0.0, %v3189
        %v3191 = vpop.f32.mrb[0].mxu0
        %v3192 = vpop.f32.mrb[0].mxu0
        %v3193 = vadd.f32 0.0, %v3192
        %v3194 = vpop.f32.mrb[0].mxu0
        %3195 = vmatprep.mubr.bf16.mxu0 0
        %3196 = vmatmul.mubr.bf16.gmra.mrb[0].mxu0 %v3048
        %v3197 = vpop.f32.mrb[0].mxu0
        %v3198 = vadd.f32 0.0, %v3197
        %v3199 = vpop.f32.mrb[0].mxu0
        %v3200 = vpop.f32.mrb[0].mxu0
        %v3201 = vadd.f32 0.0, %v3200
        %v3202 = vpop.f32.mrb[0].mxu0
        %3203 = vmatprep.mubr.bf16.mxu0 0
        %3204 = vmatmul.mubr.bf16.gmra.mrb[0].mxu0 %v3051
        %v3205 = vpop.f32.mrb[0].mxu0
        %v3206 = vadd.f32 0.0, %v3205
        %v3207 = vpop.f32.mrb[0].mxu0
        %v3208 = vpop.f32.mrb[0].mxu0
        %v3209 = vadd.f32 0.0, %v3208
        %v3210 = vpop.f32.mrb[0].mxu0
        %3211 = vmatprep.mubr.bf16.mxu0 0
        %3212 = vmatmul.mubr.bf16.gmra.mrb[0].mxu0 %v3054
        %v3213 = vpop.f32.mrb[0].mxu0
        %v3214 = vadd.f32 0.0, %v3213
        %v3215 = vpop.f32.mrb[0].mxu0
        %v3216 = vpop.f32.mrb[0].mxu0
        %v3217 = vadd.f32 0.0, %v3216
        %v3218 = vpop.f32.mrb[0].mxu0
        %3219 = vdwg.mxu0
        %v3220 = vadd.f32 %v2750, %v3094
        %v3221 = vadd.f32 %v2751, %v3097
        %v3222 = vadd.f32 %v2752, %v3102
        %v3223 = vadd.f32 %v2753, %v3105
        %v3224 = vadd.f32 %v2754, %v3110
        %v3225 = vadd.f32 %v2755, %v3113
        %v3226 = vadd.f32 %v2756, %v3118
        %v3227 = vadd.f32 %v2757, %v3121
        %v3228 = vadd.f32 %v2758, %v3126
        %v3229 = vadd.f32 %v2759, %v3129
        %v3230 = vadd.f32 %v2760, %v3134
        %v3231 = vadd.f32 %v2761, %v3137
        %v3232 = vadd.f32 %v2762, %v3142
        %v3233 = vadd.f32 %v2763, %v3145
        %v3234 = vadd.f32 %v2764, %v3150
        %v3235 = vadd.f32 %v2765, %v3153
        %v3236 = vadd.f32 %v2766, %v3158
        %v3237 = vadd.f32 %v2767, %v3161
        %v3238 = vadd.f32 %v2768, %v3166
        %v3239 = vadd.f32 %v2769, %v3169
        %v3240 = vadd.f32 %v2770, %v3174
        %v3241 = vadd.f32 %v2771, %v3177
        %v3242 = vadd.f32 %v2772, %v3182
        %v3243 = vadd.f32 %v2773, %v3185
        %v3244 = vadd.f32 %v2774, %v3190
        %v3245 = vadd.f32 %v2775, %v3193
        %v3246 = vadd.f32 %v2776, %v3198
        %v3247 = vadd.f32 %v2777, %v3201
        %v3248 = vadd.f32 %v2778, %v3206
        %v3249 = vadd.f32 %v2779, %v3209
        %v3250 = vadd.f32 %v2780, %v3214
        %v3251 = vadd.f32 %v2781, %v3217
        %s3252 = scalar_lea.vmem %s210, 24 [#allocation2]
        %v3253 = vld [vmem:[%s3252] sm:$0xf]
        %v3254 = vld [vmem:[%s3252 + $0x4] sm:$0xf]
        %v3255 = vld [vmem:[%s3252 + $0xc] sm:$0xf]
        %v3256 = vld [vmem:[%s3252 + $0x10] sm:$0xf]
        %v3257 = vld [vmem:[%s3252 + $0x18] sm:$0xf]
        %v3258 = vld [vmem:[%s3252 + $0x1c] sm:$0xf]
        %v3259 = vld [vmem:[%s3252 + $0x24] sm:$0xf]
        %v3260 = vld [vmem:[%s3252 + $0x28] sm:$0xf]
        %v3261 = vld [vmem:[%s3252 + $0x30] sm:$0xf]
        %v3262 = vld [vmem:[%s3252 + $0x34] sm:$0xf]
        %v3263 = vld [vmem:[%s3252 + $0x3c] sm:$0xf]
        %v3264 = vld [vmem:[%s3252 + $0x40] sm:$0xf]
        %v3265 = vld [vmem:[%s3252 + $0x48] sm:$0xf]
        %v3266 = vld [vmem:[%s3252 + $0x4c] sm:$0xf]
        %v3267 = vld [vmem:[%s3252 + $0x54] sm:$0xf]
        %v3268 = vld [vmem:[%s3252 + $0x58] sm:$0xf]
        %v3269 = vld [vmem:[%s3252 + $0x60] sm:$0xf]
        %v3270 = vld [vmem:[%s3252 + $0x64] sm:$0xf]
        %v3271 = vld [vmem:[%s3252 + $0x6c] sm:$0xf]
        %v3272 = vld [vmem:[%s3252 + $0x70] sm:$0xf]
        %v3273 = vld [vmem:[%s3252 + $0x78] sm:$0xf]
        %v3274 = vld [vmem:[%s3252 + $0x7c] sm:$0xf]
        %v3275 = vld [vmem:[%s3252 + $0x84] sm:$0xf]
        %v3276 = vld [vmem:[%s3252 + $0x88] sm:$0xf]
        %v3277 = vld [vmem:[%s3252 + $0x90] sm:$0xf]
        %v3278 = vld [vmem:[%s3252 + $0x94] sm:$0xf]
        %v3279 = vld [vmem:[%s3252 + $0x9c] sm:$0xf]
        %v3280 = vld [vmem:[%s3252 + $0xa0] sm:$0xf]
        %v3281 = vld [vmem:[%s3252 + $0xa8] sm:$0xf]
        %v3282 = vld [vmem:[%s3252 + $0xac] sm:$0xf]
        %v3283 = vld [vmem:[%s3252 + $0xb4] sm:$0xf]
        %v3284 = vld [vmem:[%s3252 + $0xb8] sm:$0xf]
        %s3285 = scalar_lea.vmem [#allocation5], 24
        %v3286 = vld [vmem:[%s3285] sm:$0xf]
        %v3319 = vunpack.c.l.b16 %v3253
        %v3320 = vunpack.c.l.b16 %v3254
        %v3321 = vunpack.c.l.b16 %v3255
        %v3322 = vunpack.c.l.b16 %v3256
        %v3323 = vunpack.c.l.b16 %v3257
        %v3324 = vunpack.c.l.b16 %v3258
        %v3325 = vunpack.c.l.b16 %v3259
        %v3326 = vunpack.c.l.b16 %v3260
        %v3327 = vunpack.c.l.b16 %v3261
        %v3328 = vunpack.c.l.b16 %v3262
        %v3329 = vunpack.c.l.b16 %v3263
        %v3330 = vunpack.c.l.b16 %v3264
        %v3331 = vunpack.c.l.b16 %v3265
        %v3332 = vunpack.c.l.b16 %v3266
        %v3333 = vunpack.c.l.b16 %v3267
        %v3334 = vunpack.c.l.b16 %v3268
        %v3335 = vunpack.c.l.b16 %v3269
        %v3336 = vunpack.c.l.b16 %v3270
        %v3337 = vunpack.c.l.b16 %v3271
        %v3338 = vunpack.c.l.b16 %v3272
        %v3339 = vunpack.c.l.b16 %v3273
        %v3340 = vunpack.c.l.b16 %v3274
        %v3341 = vunpack.c.l.b16 %v3275
        %v3342 = vunpack.c.l.b16 %v3276
        %v3343 = vunpack.c.l.b16 %v3277
        %v3344 = vunpack.c.l.b16 %v3278
        %v3345 = vunpack.c.l.b16 %v3279
        %v3346 = vunpack.c.l.b16 %v3280
        %v3347 = vunpack.c.l.b16 %v3281
        %v3348 = vunpack.c.l.b16 %v3282
        %v3349 = vunpack.c.l.b16 %v3283
        %v3350 = vunpack.c.l.b16 %v3284
        %v3351 = vpack.c.b16 %v3320, %v3319
        %v3352 = vpack.c.b16 %v3322, %v3321
        %v3353 = vpack.c.b16 %v3324, %v3323
        %v3354 = vpack.c.b16 %v3326, %v3325
        %v3355 = vpack.c.b16 %v3328, %v3327
        %v3356 = vpack.c.b16 %v3330, %v3329
        %v3357 = vpack.c.b16 %v3332, %v3331
        %v3358 = vpack.c.b16 %v3334, %v3333
        %v3359 = vpack.c.b16 %v3336, %v3335
        %v3360 = vpack.c.b16 %v3338, %v3337
        %v3361 = vpack.c.b16 %v3340, %v3339
        %v3362 = vpack.c.b16 %v3342, %v3341
        %v3363 = vpack.c.b16 %v3344, %v3343
        %v3364 = vpack.c.b16 %v3346, %v3345
        %v3365 = vpack.c.b16 %v3348, %v3347
        %v3366 = vpack.c.b16 %v3350, %v3349
        %v3368 = vsel %vm734, %v3351, 0
        %v3371 = vsel %vm734, %v3352, 0
        %v3374 = vsel %vm734, %v3353, 0
        %v3377 = vsel %vm734, %v3354, 0
        %v3380 = vsel %vm734, %v3355, 0
        %v3383 = vsel %vm734, %v3356, 0
        %v3386 = vsel %vm734, %v3357, 0
        %v3389 = vsel %vm734, %v3358, 0
        %v3392 = vsel %vm734, %v3359, 0
        %v3395 = vsel %vm734, %v3360, 0
        %v3398 = vsel %vm734, %v3361, 0
        %v3401 = vsel %vm734, %v3362, 0
        %v3404 = vsel %vm734, %v3363, 0
        %v3407 = vsel %vm734, %v3364, 0
        %v3410 = vsel %vm734, %v3365, 0
        %v3413 = vsel %vm734, %v3366, 0
        %v3416 = vsel %vm783, %v3286, 0
        %3418 = vmatprep.subr.bf16.mxu0 0
        %3419 = vmatpush1.bf16.msra.mxu0 %v3416
        %3420 = vmatprep.subr.bf16.mxu0 0
        %3421 = vmatpush1.bf16.msra.mxu0 0
        %3422 = vmatprep.subr.bf16.mxu0 0
        %3423 = vmatpush1.bf16.msra.mxu0 0
        %3424 = vmatprep.subr.bf16.mxu0 0
        %3425 = vmatpush1.bf16.msra.mxu0 0
        %3426 = vmatprep.subr.bf16.mxu0 0
        %3427 = vmatpush1.bf16.msra.mxu0 0
        %3428 = vmatprep.subr.bf16.mxu0 0
        %3429 = vmatpush1.bf16.msra.mxu0 0
        %3430 = vmatprep.subr.bf16.mxu0 0
        %3431 = vmatpush1.bf16.msra.mxu0 0
        %3432 = vmatprep.subr.bf16.mxu0 0
        %3433 = vmatpush1.bf16.msra.mxu0 0
        %3434 = vmatprep.subr.bf16.mxu0 0
        %3435 = vmatpush1.bf16.msra.mxu0 0
        %3436 = vmatprep.subr.bf16.mxu0 0
        %3437 = vmatpush1.bf16.msra.mxu0 0
        %3438 = vmatprep.subr.bf16.mxu0 0
        %3439 = vmatpush1.bf16.msra.mxu0 0
        %3440 = vmatprep.subr.bf16.mxu0 0
        %3441 = vmatpush1.bf16.msra.mxu0 0
        %3442 = vmatprep.subr.bf16.mxu0 0
        %3443 = vmatpush1.bf16.msra.mxu0 0
        %3444 = vmatprep.subr.bf16.mxu0 0
        %3445 = vmatpush1.bf16.msra.mxu0 0
        %3446 = vmatprep.subr.bf16.mxu0 0
        %3447 = vmatpush1.bf16.msra.mxu0 0
        %3448 = vmatprep.subr.bf16.mxu0 0
        %3449 = vmatpush1.bf16.msra.mxu0 0
        %3450 = vmatprep.mubr.bf16.mxu0 0
        %3451 = vmatmul.mubr.bf16.gmra.mrb[0].mxu0 %v3368
        %v3452 = vpop.f32.mrb[0].mxu0
        %v3453 = vadd.f32 0.0, %v3452
        %v3454 = vpop.f32.mrb[0].mxu0
        %v3455 = vpop.f32.mrb[0].mxu0
        %v3456 = vadd.f32 0.0, %v3455
        %v3457 = vpop.f32.mrb[0].mxu0
        %3458 = vmatprep.mubr.bf16.mxu0 0
        %3459 = vmatmul.mubr.bf16.gmra.mrb[0].mxu0 %v3371
        %v3460 = vpop.f32.mrb[0].mxu0
        %v3461 = vadd.f32 0.0, %v3460
        %v3462 = vpop.f32.mrb[0].mxu0
        %v3463 = vpop.f32.mrb[0].mxu0
        %v3464 = vadd.f32 0.0, %v3463
        %v3465 = vpop.f32.mrb[0].mxu0
        %3466 = vmatprep.mubr.bf16.mxu0 0
        %3467 = vmatmul.mubr.bf16.gmra.mrb[0].mxu0 %v3374
        %v3468 = vpop.f32.mrb[0].mxu0
        %v3469 = vadd.f32 0.0, %v3468
        %v3470 = vpop.f32.mrb[0].mxu0
        %v3471 = vpop.f32.mrb[0].mxu0
        %v3472 = vadd.f32 0.0, %v3471
        %v3473 = vpop.f32.mrb[0].mxu0
        %3474 = vmatprep.mubr.bf16.mxu0 0
        %3475 = vmatmul.mubr.bf16.gmra.mrb[0].mxu0 %v3377
        %v3476 = vpop.f32.mrb[0].mxu0
        %v3477 = vadd.f32 0.0, %v3476
        %v3478 = vpop.f32.mrb[0].mxu0
        %v3479 = vpop.f32.mrb[0].mxu0
        %v3480 = vadd.f32 0.0, %v3479
        %v3481 = vpop.f32.mrb[0].mxu0
        %3482 = vmatprep.mubr.bf16.mxu0 0
        %3483 = vmatmul.mubr.bf16.gmra.mrb[0].mxu0 %v3380
        %v3484 = vpop.f32.mrb[0].mxu0
        %v3485 = vadd.f32 0.0, %v3484
        %v3486 = vpop.f32.mrb[0].mxu0
        %v3487 = vpop.f32.mrb[0].mxu0
        %v3488 = vadd.f32 0.0, %v3487
        %v3489 = vpop.f32.mrb[0].mxu0
        %3490 = vmatprep.mubr.bf16.mxu0 0
        %3491 = vmatmul.mubr.bf16.gmra.mrb[0].mxu0 %v3383
        %v3492 = vpop.f32.mrb[0].mxu0
        %v3493 = vadd.f32 0.0, %v3492
        %v3494 = vpop.f32.mrb[0].mxu0
        %v3495 = vpop.f32.mrb[0].mxu0
        %v3496 = vadd.f32 0.0, %v3495
        %v3497 = vpop.f32.mrb[0].mxu0
        %3498 = vmatprep.mubr.bf16.mxu0 0
        %3499 = vmatmul.mubr.bf16.gmra.mrb[0].mxu0 %v3386
        %v3500 = vpop.f32.mrb[0].mxu0
        %v3501 = vadd.f32 0.0, %v3500
        %v3502 = vpop.f32.mrb[0].mxu0
        %v3503 = vpop.f32.mrb[0].mxu0
        %v3504 = vadd.f32 0.0, %v3503
        %v3505 = vpop.f32.mrb[0].mxu0
        %3506 = vmatprep.mubr.bf16.mxu0 0
        %3507 = vmatmul.mubr.bf16.gmra.mrb[0].mxu0 %v3389
        %v3508 = vpop.f32.mrb[0].mxu0
        %v3509 = vadd.f32 0.0, %v3508
        %v3510 = vpop.f32.mrb[0].mxu0
        %v3511 = vpop.f32.mrb[0].mxu0
        %v3512 = vadd.f32 0.0, %v3511
        %v3513 = vpop.f32.mrb[0].mxu0
        %3514 = vmatprep.mubr.bf16.mxu0 0
        %3515 = vmatmul.mubr.bf16.gmra.mrb[0].mxu0 %v3392
        %v3516 = vpop.f32.mrb[0].mxu0
        %v3517 = vadd.f32 0.0, %v3516
        %v3518 = vpop.f32.mrb[0].mxu0
        %v3519 = vpop.f32.mrb[0].mxu0
        %v3520 = vadd.f32 0.0, %v3519
        %v3521 = vpop.f32.mrb[0].mxu0
        %3522 = vmatprep.mubr.bf16.mxu0 0
        %3523 = vmatmul.mubr.bf16.gmra.mrb[0].mxu0 %v3395
        %v3524 = vpop.f32.mrb[0].mxu0
        %v3525 = vadd.f32 0.0, %v3524
        %v3526 = vpop.f32.mrb[0].mxu0
        %v3527 = vpop.f32.mrb[0].mxu0
        %v3528 = vadd.f32 0.0, %v3527
        %v3529 = vpop.f32.mrb[0].mxu0
        %3530 = vmatprep.mubr.bf16.mxu0 0
        %3531 = vmatmul.mubr.bf16.gmra.mrb[0].mxu0 %v3398
        %v3532 = vpop.f32.mrb[0].mxu0
        %v3533 = vadd.f32 0.0, %v3532
        %v3534 = vpop.f32.mrb[0].mxu0
        %v3535 = vpop.f32.mrb[0].mxu0
        %v3536 = vadd.f32 0.0, %v3535
        %v3537 = vpop.f32.mrb[0].mxu0
        %3538 = vmatprep.mubr.bf16.mxu0 0
        %3539 = vmatmul.mubr.bf16.gmra.mrb[0].mxu0 %v3401
        %v3540 = vpop.f32.mrb[0].mxu0
        %v3541 = vadd.f32 0.0, %v3540
        %v3542 = vpop.f32.mrb[0].mxu0
        %v3543 = vpop.f32.mrb[0].mxu0
        %v3544 = vadd.f32 0.0, %v3543
        %v3545 = vpop.f32.mrb[0].mxu0
        %3546 = vmatprep.mubr.bf16.mxu0 0
        %3547 = vmatmul.mubr.bf16.gmra.mrb[0].mxu0 %v3404
        %v3548 = vpop.f32.mrb[0].mxu0
        %v3549 = vadd.f32 0.0, %v3548
        %v3550 = vpop.f32.mrb[0].mxu0
        %v3551 = vpop.f32.mrb[0].mxu0
        %v3552 = vadd.f32 0.0, %v3551
        %v3553 = vpop.f32.mrb[0].mxu0
        %3554 = vmatprep.mubr.bf16.mxu0 0
        %3555 = vmatmul.mubr.bf16.gmra.mrb[0].mxu0 %v3407
        %v3556 = vpop.f32.mrb[0].mxu0
        %v3557 = vadd.f32 0.0, %v3556
        %v3558 = vpop.f32.mrb[0].mxu0
        %v3559 = vpop.f32.mrb[0].mxu0
        %v3560 = vadd.f32 0.0, %v3559
        %v3561 = vpop.f32.mrb[0].mxu0
        %3562 = vmatprep.mubr.bf16.mxu0 0
        %3563 = vmatmul.mubr.bf16.gmra.mrb[0].mxu0 %v3410
        %v3564 = vpop.f32.mrb[0].mxu0
        %v3565 = vadd.f32 0.0, %v3564
        %v3566 = vpop.f32.mrb[0].mxu0
        %v3567 = vpop.f32.mrb[0].mxu0
        %v3568 = vadd.f32 0.0, %v3567
        %v3569 = vpop.f32.mrb[0].mxu0
        %3570 = vmatprep.mubr.bf16.mxu0 0
        %3571 = vmatmul.mubr.bf16.gmra.mrb[0].mxu0 %v3413
        %v3572 = vpop.f32.mrb[0].mxu0
        %v3573 = vadd.f32 0.0, %v3572
        %v3574 = vpop.f32.mrb[0].mxu0
        %v3575 = vpop.f32.mrb[0].mxu0
        %v3576 = vadd.f32 0.0, %v3575
        %v3577 = vpop.f32.mrb[0].mxu0
        %3578 = vdwg.mxu0
        %v3579 = vadd.f32 %v3220, %v3453
        %v3580 = vadd.f32 %v3221, %v3456
        %v3581 = vadd.f32 %v3222, %v3461
        %v3582 = vadd.f32 %v3223, %v3464
        %v3583 = vadd.f32 %v3224, %v3469
        %v3584 = vadd.f32 %v3225, %v3472
        %v3585 = vadd.f32 %v3226, %v3477
        %v3586 = vadd.f32 %v3227, %v3480
        %v3587 = vadd.f32 %v3228, %v3485
        %v3588 = vadd.f32 %v3229, %v3488
        %v3589 = vadd.f32 %v3230, %v3493
        %v3590 = vadd.f32 %v3231, %v3496
        %v3591 = vadd.f32 %v3232, %v3501
        %v3592 = vadd.f32 %v3233, %v3504
        %v3593 = vadd.f32 %v3234, %v3509
        %v3594 = vadd.f32 %v3235, %v3512
        %v3595 = vadd.f32 %v3236, %v3517
        %v3596 = vadd.f32 %v3237, %v3520
        %v3597 = vadd.f32 %v3238, %v3525
        %v3598 = vadd.f32 %v3239, %v3528
        %v3599 = vadd.f32 %v3240, %v3533
        %v3600 = vadd.f32 %v3241, %v3536
        %v3601 = vadd.f32 %v3242, %v3541
        %v3602 = vadd.f32 %v3243, %v3544
        %v3603 = vadd.f32 %v3244, %v3549
        %v3604 = vadd.f32 %v3245, %v3552
        %v3605 = vadd.f32 %v3246, %v3557
        %v3606 = vadd.f32 %v3247, %v3560
        %v3607 = vadd.f32 %v3248, %v3565
        %v3608 = vadd.f32 %v3249, %v3568
        %v3609 = vadd.f32 %v3250, %v3573
        %v3610 = vadd.f32 %v3251, %v3576
        %v3611 = vld [vmem:[%s3252] sm:$0xf]
        %v3612 = vld [vmem:[%s3252 + $0x4] sm:$0xf]
        %v3613 = vld [vmem:[%s3252 + $0x8] sm:$0x1]
        %v3614 = vld [vmem:[%s3252 + $0xc] sm:$0xf]
        %v3615 = vld [vmem:[%s3252 + $0x10] sm:$0xf]
        %v3616 = vld [vmem:[%s3252 + $0x14] sm:$0x1]
        %v3617 = vld [vmem:[%s3252 + $0x18] sm:$0xf]
        %v3618 = vld [vmem:[%s3252 + $0x1c] sm:$0xf]
        %v3619 = vld [vmem:[%s3252 + $0x20] sm:$0x1]
        %v3620 = vld [vmem:[%s3252 + $0x24] sm:$0xf]
        %v3621 = vld [vmem:[%s3252 + $0x28] sm:$0xf]
        %v3622 = vld [vmem:[%s3252 + $0x2c] sm:$0x1]
        %v3623 = vld [vmem:[%s3252 + $0x30] sm:$0xf]
        %v3624 = vld [vmem:[%s3252 + $0x34] sm:$0xf]
        %v3625 = vld [vmem:[%s3252 + $0x38] sm:$0x1]
        %v3626 = vld [vmem:[%s3252 + $0x3c] sm:$0xf]
        %v3627 = vld [vmem:[%s3252 + $0x40] sm:$0xf]
        %v3628 = vld [vmem:[%s3252 + $0x44] sm:$0x1]
        %v3629 = vld [vmem:[%s3252 + $0x48] sm:$0xf]
        %v3630 = vld [vmem:[%s3252 + $0x4c] sm:$0xf]
        %v3631 = vld [vmem:[%s3252 + $0x50] sm:$0x1]
        %v3632 = vld [vmem:[%s3252 + $0x54] sm:$0xf]
        %v3633 = vld [vmem:[%s3252 + $0x58] sm:$0xf]
        %v3634 = vld [vmem:[%s3252 + $0x5c] sm:$0x1]
        %v3635 = vld [vmem:[%s3252 + $0x60] sm:$0xf]
        %v3636 = vld [vmem:[%s3252 + $0x64] sm:$0xf]
        %v3637 = vld [vmem:[%s3252 + $0x68] sm:$0x1]
        %v3638 = vld [vmem:[%s3252 + $0x6c] sm:$0xf]
        %v3639 = vld [vmem:[%s3252 + $0x70] sm:$0xf]
        %v3640 = vld [vmem:[%s3252 + $0x74] sm:$0x1]
        %v3641 = vld [vmem:[%s3252 + $0x78] sm:$0xf]
        %v3642 = vld [vmem:[%s3252 + $0x7c] sm:$0xf]
        %v3643 = vld [vmem:[%s3252 + $0x80] sm:$0x1]
        %v3644 = vld [vmem:[%s3252 + $0x84] sm:$0xf]
        %v3645 = vld [vmem:[%s3252 + $0x88] sm:$0xf]
        %v3646 = vld [vmem:[%s3252 + $0x8c] sm:$0x1]
        %v3647 = vld [vmem:[%s3252 + $0x90] sm:$0xf]
        %v3648 = vld [vmem:[%s3252 + $0x94] sm:$0xf]
        %v3649 = vld [vmem:[%s3252 + $0x98] sm:$0x1]
        %v3650 = vld [vmem:[%s3252 + $0x9c] sm:$0xf]
        %v3651 = vld [vmem:[%s3252 + $0xa0] sm:$0xf]
        %v3652 = vld [vmem:[%s3252 + $0xa4] sm:$0x1]
        %v3653 = vld [vmem:[%s3252 + $0xa8] sm:$0xf]
        %v3654 = vld [vmem:[%s3252 + $0xac] sm:$0xf]
        %v3655 = vld [vmem:[%s3252 + $0xb0] sm:$0x1]
        %v3656 = vld [vmem:[%s3252 + $0xb4] sm:$0xf]
        %v3657 = vld [vmem:[%s3252 + $0xb8] sm:$0xf]
        %v3658 = vld [vmem:[%s3252 + $0xbc] sm:$0x1]
        %v3660 = vshrl.u32 %v3611, 16
        %v3662 = vrot.slane %v3660, 4
        %v3663 = vshll.u32 %v3611, 16
        %v3665 = vrot.slane %v3663, 5
        %v3666 = vor.u32 %v3662, %v3665
        %v3667 = vrot.slane %v3666, 4
        %v3669 = vshll.u32 %v3612, 16
        %v3671 = vrot.slane %v3669, 5
        %v3672 = vsel %vm299, %v3667, %v3671
        %v3673 = vshrl.u32 %v3612, 16
        %v3675 = vrot.slane %v3673, 4
        %v3676 = vor.u32 %v3675, %v3671
        %v3677 = vrot.slane %v3676, 4
        %v3679 = vshll.u32 %v3613, 16
        %v3681 = vrot.slane %v3679, 5
        %v3682 = vsel %vm299, %v3677, %v3681
        %v3684 = vshrl.u32 %v3614, 16
        %v3686 = vrot.slane %v3684, 4
        %v3687 = vshll.u32 %v3614, 16
        %v3689 = vrot.slane %v3687, 5
        %v3690 = vor.u32 %v3686, %v3689
        %v3691 = vrot.slane %v3690, 4
        %v3693 = vshll.u32 %v3615, 16
        %v3695 = vrot.slane %v3693, 5
        %v3696 = vsel %vm299, %v3691, %v3695
        %v3697 = vshrl.u32 %v3615, 16
        %v3699 = vrot.slane %v3697, 4
        %v3700 = vor.u32 %v3699, %v3695
        %v3701 = vrot.slane %v3700, 4
        %v3703 = vshll.u32 %v3616, 16
        %v3705 = vrot.slane %v3703, 5
        %v3706 = vsel %vm299, %v3701, %v3705
        %v3708 = vshrl.u32 %v3617, 16
        %v3710 = vrot.slane %v3708, 4
        %v3711 = vshll.u32 %v3617, 16
        %v3713 = vrot.slane %v3711, 5
        %v3714 = vor.u32 %v3710, %v3713
        %v3715 = vrot.slane %v3714, 4
        %v3717 = vshll.u32 %v3618, 16
        %v3719 = vrot.slane %v3717, 5
        %v3720 = vsel %vm299, %v3715, %v3719
        %v3721 = vshrl.u32 %v3618, 16
        %v3723 = vrot.slane %v3721, 4
        %v3724 = vor.u32 %v3723, %v3719
        %v3725 = vrot.slane %v3724, 4
        %v3727 = vshll.u32 %v3619, 16
        %v3729 = vrot.slane %v3727, 5
        %v3730 = vsel %vm299, %v3725, %v3729
        %v3732 = vshrl.u32 %v3620, 16
        %v3734 = vrot.slane %v3732, 4
        %v3735 = vshll.u32 %v3620, 16
        %v3737 = vrot.slane %v3735, 5
        %v3738 = vor.u32 %v3734, %v3737
        %v3739 = vrot.slane %v3738, 4
        %v3741 = vshll.u32 %v3621, 16
        %v3743 = vrot.slane %v3741, 5
        %v3744 = vsel %vm299, %v3739, %v3743
        %v3745 = vshrl.u32 %v3621, 16
        %v3747 = vrot.slane %v3745, 4
        %v3748 = vor.u32 %v3747, %v3743
        %v3749 = vrot.slane %v3748, 4
        %v3751 = vshll.u32 %v3622, 16
        %v3753 = vrot.slane %v3751, 5
        %v3754 = vsel %vm299, %v3749, %v3753
        %v3756 = vshrl.u32 %v3623, 16
        %v3758 = vrot.slane %v3756, 4
        %v3759 = vshll.u32 %v3623, 16
        %v3761 = vrot.slane %v3759, 5
        %v3762 = vor.u32 %v3758, %v3761
        %v3763 = vrot.slane %v3762, 4
        %v3765 = vshll.u32 %v3624, 16
        %v3767 = vrot.slane %v3765, 5
        %v3768 = vsel %vm299, %v3763, %v3767
        %v3769 = vshrl.u32 %v3624, 16
        %v3771 = vrot.slane %v3769, 4
        %v3772 = vor.u32 %v3771, %v3767
        %v3773 = vrot.slane %v3772, 4
        %v3775 = vshll.u32 %v3625, 16
        %v3777 = vrot.slane %v3775, 5
        %v3778 = vsel %vm299, %v3773, %v3777
        %v3780 = vshrl.u32 %v3626, 16
        %v3782 = vrot.slane %v3780, 4
        %v3783 = vshll.u32 %v3626, 16
        %v3785 = vrot.slane %v3783, 5
        %v3786 = vor.u32 %v3782, %v3785
        %v3787 = vrot.slane %v3786, 4
        %v3789 = vshll.u32 %v3627, 16
        %v3791 = vrot.slane %v3789, 5
        %v3792 = vsel %vm299, %v3787, %v3791
        %v3793 = vshrl.u32 %v3627, 16
        %v3795 = vrot.slane %v3793, 4
        %v3796 = vor.u32 %v3795, %v3791
        %v3797 = vrot.slane %v3796, 4
        %v3799 = vshll.u32 %v3628, 16
        %v3801 = vrot.slane %v3799, 5
        %v3802 = vsel %vm299, %v3797, %v3801
        %v3804 = vshrl.u32 %v3629, 16
        %v3806 = vrot.slane %v3804, 4
        %v3807 = vshll.u32 %v3629, 16
        %v3809 = vrot.slane %v3807, 5
        %v3810 = vor.u32 %v3806, %v3809
        %v3811 = vrot.slane %v3810, 4
        %v3813 = vshll.u32 %v3630, 16
        %v3815 = vrot.slane %v3813, 5
        %v3816 = vsel %vm299, %v3811, %v3815
        %v3817 = vshrl.u32 %v3630, 16
        %v3819 = vrot.slane %v3817, 4
        %v3820 = vor.u32 %v3819, %v3815
        %v3821 = vrot.slane %v3820, 4
        %v3823 = vshll.u32 %v3631, 16
        %v3825 = vrot.slane %v3823, 5
        %v3826 = vsel %vm299, %v3821, %v3825
        %v3828 = vshrl.u32 %v3632, 16
        %v3830 = vrot.slane %v3828, 4
        %v3831 = vshll.u32 %v3632, 16
        %v3833 = vrot.slane %v3831, 5
        %v3834 = vor.u32 %v3830, %v3833
        %v3835 = vrot.slane %v3834, 4
        %v3837 = vshll.u32 %v3633, 16
        %v3839 = vrot.slane %v3837, 5
        %v3840 = vsel %vm299, %v3835, %v3839
        %v3841 = vshrl.u32 %v3633, 16
        %v3843 = vrot.slane %v3841, 4
        %v3844 = vor.u32 %v3843, %v3839
        %v3845 = vrot.slane %v3844, 4
        %v3847 = vshll.u32 %v3634, 16
        %v3849 = vrot.slane %v3847, 5
        %v3850 = vsel %vm299, %v3845, %v3849
        %v3852 = vshrl.u32 %v3635, 16
        %v3854 = vrot.slane %v3852, 4
        %v3855 = vshll.u32 %v3635, 16
        %v3857 = vrot.slane %v3855, 5
        %v3858 = vor.u32 %v3854, %v3857
        %v3859 = vrot.slane %v3858, 4
        %v3861 = vshll.u32 %v3636, 16
        %v3863 = vrot.slane %v3861, 5
        %v3864 = vsel %vm299, %v3859, %v3863
        %v3865 = vshrl.u32 %v3636, 16
        %v3867 = vrot.slane %v3865, 4
        %v3868 = vor.u32 %v3867, %v3863
        %v3869 = vrot.slane %v3868, 4
        %v3871 = vshll.u32 %v3637, 16
        %v3873 = vrot.slane %v3871, 5
        %v3874 = vsel %vm299, %v3869, %v3873
        %v3876 = vshrl.u32 %v3638, 16
        %v3878 = vrot.slane %v3876, 4
        %v3879 = vshll.u32 %v3638, 16
        %v3881 = vrot.slane %v3879, 5
        %v3882 = vor.u32 %v3878, %v3881
        %v3883 = vrot.slane %v3882, 4
        %v3885 = vshll.u32 %v3639, 16
        %v3887 = vrot.slane %v3885, 5
        %v3888 = vsel %vm299, %v3883, %v3887
        %v3889 = vshrl.u32 %v3639, 16
        %v3891 = vrot.slane %v3889, 4
        %v3892 = vor.u32 %v3891, %v3887
        %v3893 = vrot.slane %v3892, 4
        %v3895 = vshll.u32 %v3640, 16
        %v3897 = vrot.slane %v3895, 5
        %v3898 = vsel %vm299, %v3893, %v3897
        %v3900 = vshrl.u32 %v3641, 16
        %v3902 = vrot.slane %v3900, 4
        %v3903 = vshll.u32 %v3641, 16
        %v3905 = vrot.slane %v3903, 5
        %v3906 = vor.u32 %v3902, %v3905
        %v3907 = vrot.slane %v3906, 4
        %v3909 = vshll.u32 %v3642, 16
        %v3911 = vrot.slane %v3909, 5
        %v3912 = vsel %vm299, %v3907, %v3911
        %v3913 = vshrl.u32 %v3642, 16
        %v3915 = vrot.slane %v3913, 4
        %v3916 = vor.u32 %v3915, %v3911
        %v3917 = vrot.slane %v3916, 4
        %v3919 = vshll.u32 %v3643, 16
        %v3921 = vrot.slane %v3919, 5
        %v3922 = vsel %vm299, %v3917, %v3921
        %v3924 = vshrl.u32 %v3644, 16
        %v3926 = vrot.slane %v3924, 4
        %v3927 = vshll.u32 %v3644, 16
        %v3929 = vrot.slane %v3927, 5
        %v3930 = vor.u32 %v3926, %v3929
        %v3931 = vrot.slane %v3930, 4
        %v3933 = vshll.u32 %v3645, 16
        %v3935 = vrot.slane %v3933, 5
        %v3936 = vsel %vm299, %v3931, %v3935
        %v3937 = vshrl.u32 %v3645, 16
        %v3939 = vrot.slane %v3937, 4
        %v3940 = vor.u32 %v3939, %v3935
        %v3941 = vrot.slane %v3940, 4
        %v3943 = vshll.u32 %v3646, 16
        %v3945 = vrot.slane %v3943, 5
        %v3946 = vsel %vm299, %v3941, %v3945
        %v3948 = vshrl.u32 %v3647, 16
        %v3950 = vrot.slane %v3948, 4
        %v3951 = vshll.u32 %v3647, 16
        %v3953 = vrot.slane %v3951, 5
        %v3954 = vor.u32 %v3950, %v3953
        %v3955 = vrot.slane %v3954, 4
        %v3957 = vshll.u32 %v3648, 16
        %v3959 = vrot.slane %v3957, 5
        %v3960 = vsel %vm299, %v3955, %v3959
        %v3961 = vshrl.u32 %v3648, 16
        %v3963 = vrot.slane %v3961, 4
        %v3964 = vor.u32 %v3963, %v3959
        %v3965 = vrot.slane %v3964, 4
        %v3967 = vshll.u32 %v3649, 16
        %v3969 = vrot.slane %v3967, 5
        %v3970 = vsel %vm299, %v3965, %v3969
        %v3972 = vshrl.u32 %v3650, 16
        %v3974 = vrot.slane %v3972, 4
        %v3975 = vshll.u32 %v3650, 16
        %v3977 = vrot.slane %v3975, 5
        %v3978 = vor.u32 %v3974, %v3977
        %v3979 = vrot.slane %v3978, 4
        %v3981 = vshll.u32 %v3651, 16
        %v3983 = vrot.slane %v3981, 5
        %v3984 = vsel %vm299, %v3979, %v3983
        %v3985 = vshrl.u32 %v3651, 16
        %v3987 = vrot.slane %v3985, 4
        %v3988 = vor.u32 %v3987, %v3983
        %v3989 = vrot.slane %v3988, 4
        %v3991 = vshll.u32 %v3652, 16
        %v3993 = vrot.slane %v3991, 5
        %v3994 = vsel %vm299, %v3989, %v3993
        %v3996 = vshrl.u32 %v3653, 16
        %v3998 = vrot.slane %v3996, 4
        %v3999 = vshll.u32 %v3653, 16
        %v4001 = vrot.slane %v3999, 5
        %v4002 = vor.u32 %v3998, %v4001
        %v4003 = vrot.slane %v4002, 4
        %v4005 = vshll.u32 %v3654, 16
        %v4007 = vrot.slane %v4005, 5
        %v4008 = vsel %vm299, %v4003, %v4007
        %v4009 = vshrl.u32 %v3654, 16
        %v4011 = vrot.slane %v4009, 4
        %v4012 = vor.u32 %v4011, %v4007
        %v4013 = vrot.slane %v4012, 4
        %v4015 = vshll.u32 %v3655, 16
        %v4017 = vrot.slane %v4015, 5
        %v4018 = vsel %vm299, %v4013, %v4017
        %v4020 = vshrl.u32 %v3656, 16
        %v4022 = vrot.slane %v4020, 4
        %v4023 = vshll.u32 %v3656, 16
        %v4025 = vrot.slane %v4023, 5
        %v4026 = vor.u32 %v4022, %v4025
        %v4027 = vrot.slane %v4026, 4
        %v4029 = vshll.u32 %v3657, 16
        %v4031 = vrot.slane %v4029, 5
        %v4032 = vsel %vm299, %v4027, %v4031
        %v4033 = vshrl.u32 %v3657, 16
        %v4035 = vrot.slane %v4033, 4
        %v4036 = vor.u32 %v4035, %v4031
        %v4037 = vrot.slane %v4036, 4
        %v4039 = vshll.u32 %v3658, 16
        %v4041 = vrot.slane %v4039, 5
        %v4042 = vsel %vm299, %v4037, %v4041
        %s4043 = scalar_lea.vmem [#allocation5], 28
        %v4044 = vld [vmem:[%s4043] sm:$0xf]
        %v4045 = vunpack.c.l.b16 %v3672
        %v4046 = vunpack.c.l.b16 %v3682
        %v4047 = vunpack.c.l.b16 %v3696
        %v4048 = vunpack.c.l.b16 %v3706
        %v4049 = vunpack.c.l.b16 %v3720
        %v4050 = vunpack.c.l.b16 %v3730
        %v4051 = vunpack.c.l.b16 %v3744
        %v4052 = vunpack.c.l.b16 %v3754
        %v4053 = vunpack.c.l.b16 %v3768
        %v4054 = vunpack.c.l.b16 %v3778
        %v4055 = vunpack.c.l.b16 %v3792
        %v4056 = vunpack.c.l.b16 %v3802
        %v4057 = vunpack.c.l.b16 %v3816
        %v4058 = vunpack.c.l.b16 %v3826
        %v4059 = vunpack.c.l.b16 %v3840
        %v4060 = vunpack.c.l.b16 %v3850
        %v4061 = vunpack.c.l.b16 %v3864
        %v4062 = vunpack.c.l.b16 %v3874
        %v4063 = vunpack.c.l.b16 %v3888
        %v4064 = vunpack.c.l.b16 %v3898
        %v4065 = vunpack.c.l.b16 %v3912
        %v4066 = vunpack.c.l.b16 %v3922
        %v4067 = vunpack.c.l.b16 %v3936
        %v4068 = vunpack.c.l.b16 %v3946
        %v4069 = vunpack.c.l.b16 %v3960
        %v4070 = vunpack.c.l.b16 %v3970
        %v4071 = vunpack.c.l.b16 %v3984
        %v4072 = vunpack.c.l.b16 %v3994
        %v4073 = vunpack.c.l.b16 %v4008
        %v4074 = vunpack.c.l.b16 %v4018
        %v4075 = vunpack.c.l.b16 %v4032
        %v4076 = vunpack.c.l.b16 %v4042
        %v4077 = vpack.c.b16 %v4046, %v4045
        %v4078 = vpack.c.b16 %v4048, %v4047
        %v4079 = vpack.c.b16 %v4050, %v4049
        %v4080 = vpack.c.b16 %v4052, %v4051
        %v4081 = vpack.c.b16 %v4054, %v4053
        %v4082 = vpack.c.b16 %v4056, %v4055
        %v4083 = vpack.c.b16 %v4058, %v4057
        %v4084 = vpack.c.b16 %v4060, %v4059
        %v4085 = vpack.c.b16 %v4062, %v4061
        %v4086 = vpack.c.b16 %v4064, %v4063
        %v4087 = vpack.c.b16 %v4066, %v4065
        %v4088 = vpack.c.b16 %v4068, %v4067
        %v4089 = vpack.c.b16 %v4070, %v4069
        %v4090 = vpack.c.b16 %v4072, %v4071
        %v4091 = vpack.c.b16 %v4074, %v4073
        %v4092 = vpack.c.b16 %v4076, %v4075
        %v4094 = vsel %vm734, %v4077, 0
        %v4097 = vsel %vm734, %v4078, 0
        %v4100 = vsel %vm734, %v4079, 0
        %v4103 = vsel %vm734, %v4080, 0
        %v4106 = vsel %vm734, %v4081, 0
        %v4109 = vsel %vm734, %v4082, 0
        %v4112 = vsel %vm734, %v4083, 0
        %v4115 = vsel %vm734, %v4084, 0
        %v4118 = vsel %vm734, %v4085, 0
        %v4121 = vsel %vm734, %v4086, 0
        %v4124 = vsel %vm734, %v4087, 0
        %v4127 = vsel %vm734, %v4088, 0
        %v4130 = vsel %vm734, %v4089, 0
        %v4133 = vsel %vm734, %v4090, 0
        %v4136 = vsel %vm734, %v4091, 0
        %v4139 = vsel %vm734, %v4092, 0
        %v4142 = vsel %vm783, %v4044, 0
        %4144 = vmatprep.subr.bf16.mxu0 0
        %4145 = vmatpush1.bf16.msra.mxu0 %v4142
        %4146 = vmatprep.subr.bf16.mxu0 0
        %4147 = vmatpush1.bf16.msra.mxu0 0
        %4148 = vmatprep.subr.bf16.mxu0 0
        %4149 = vmatpush1.bf16.msra.mxu0 0
        %4150 = vmatprep.subr.bf16.mxu0 0
        %4151 = vmatpush1.bf16.msra.mxu0 0
        %4152 = vmatprep.subr.bf16.mxu0 0
        %4153 = vmatpush1.bf16.msra.mxu0 0
        %4154 = vmatprep.subr.bf16.mxu0 0
        %4155 = vmatpush1.bf16.msra.mxu0 0
        %4156 = vmatprep.subr.bf16.mxu0 0
        %4157 = vmatpush1.bf16.msra.mxu0 0
        %4158 = vmatprep.subr.bf16.mxu0 0
        %4159 = vmatpush1.bf16.msra.mxu0 0
        %4160 = vmatprep.subr.bf16.mxu0 0
        %4161 = vmatpush1.bf16.msra.mxu0 0
        %4162 = vmatprep.subr.bf16.mxu0 0
        %4163 = vmatpush1.bf16.msra.mxu0 0
        %4164 = vmatprep.subr.bf16.mxu0 0
        %4165 = vmatpush1.bf16.msra.mxu0 0
        %4166 = vmatprep.subr.bf16.mxu0 0
        %4167 = vmatpush1.bf16.msra.mxu0 0
        %4168 = vmatprep.subr.bf16.mxu0 0
        %4169 = vmatpush1.bf16.msra.mxu0 0
        %4170 = vmatprep.subr.bf16.mxu0 0
        %4171 = vmatpush1.bf16.msra.mxu0 0
        %4172 = vmatprep.subr.bf16.mxu0 0
        %4173 = vmatpush1.bf16.msra.mxu0 0
        %4174 = vmatprep.subr.bf16.mxu0 0
        %4175 = vmatpush1.bf16.msra.mxu0 0
        %4176 = vmatprep.mubr.bf16.mxu0 0
        %4177 = vmatmul.mubr.bf16.gmra.mrb[0].mxu0 %v4094
        %v4178 = vpop.f32.mrb[0].mxu0
        %v4179 = vadd.f32 0.0, %v4178
        %v4180 = vpop.f32.mrb[0].mxu0
        %v4181 = vpop.f32.mrb[0].mxu0
        %v4182 = vadd.f32 0.0, %v4181
        %v4183 = vpop.f32.mrb[0].mxu0
        %4184 = vmatprep.mubr.bf16.mxu0 0
        %4185 = vmatmul.mubr.bf16.gmra.mrb[0].mxu0 %v4097
        %v4186 = vpop.f32.mrb[0].mxu0
        %v4187 = vadd.f32 0.0, %v4186
        %v4188 = vpop.f32.mrb[0].mxu0
        %v4189 = vpop.f32.mrb[0].mxu0
        %v4190 = vadd.f32 0.0, %v4189
        %v4191 = vpop.f32.mrb[0].mxu0
        %4192 = vmatprep.mubr.bf16.mxu0 0
        %4193 = vmatmul.mubr.bf16.gmra.mrb[0].mxu0 %v4100
        %v4194 = vpop.f32.mrb[0].mxu0
        %v4195 = vadd.f32 0.0, %v4194
        %v4196 = vpop.f32.mrb[0].mxu0
        %v4197 = vpop.f32.mrb[0].mxu0
        %v4198 = vadd.f32 0.0, %v4197
        %v4199 = vpop.f32.mrb[0].mxu0
        %4200 = vmatprep.mubr.bf16.mxu0 0
        %4201 = vmatmul.mubr.bf16.gmra.mrb[0].mxu0 %v4103
        %v4202 = vpop.f32.mrb[0].mxu0
        %v4203 = vadd.f32 0.0, %v4202
        %v4204 = vpop.f32.mrb[0].mxu0
        %v4205 = vpop.f32.mrb[0].mxu0
        %v4206 = vadd.f32 0.0, %v4205
        %v4207 = vpop.f32.mrb[0].mxu0
        %4208 = vmatprep.mubr.bf16.mxu0 0
        %4209 = vmatmul.mubr.bf16.gmra.mrb[0].mxu0 %v4106
        %v4210 = vpop.f32.mrb[0].mxu0
        %v4211 = vadd.f32 0.0, %v4210
        %v4212 = vpop.f32.mrb[0].mxu0
        %v4213 = vpop.f32.mrb[0].mxu0
        %v4214 = vadd.f32 0.0, %v4213
        %v4215 = vpop.f32.mrb[0].mxu0
        %4216 = vmatprep.mubr.bf16.mxu0 0
        %4217 = vmatmul.mubr.bf16.gmra.mrb[0].mxu0 %v4109
        %v4218 = vpop.f32.mrb[0].mxu0
        %v4219 = vadd.f32 0.0, %v4218
        %v4220 = vpop.f32.mrb[0].mxu0
        %v4221 = vpop.f32.mrb[0].mxu0
        %v4222 = vadd.f32 0.0, %v4221
        %v4223 = vpop.f32.mrb[0].mxu0
        %4224 = vmatprep.mubr.bf16.mxu0 0
        %4225 = vmatmul.mubr.bf16.gmra.mrb[0].mxu0 %v4112
        %v4226 = vpop.f32.mrb[0].mxu0
        %v4227 = vadd.f32 0.0, %v4226
        %v4228 = vpop.f32.mrb[0].mxu0
        %v4229 = vpop.f32.mrb[0].mxu0
        %v4230 = vadd.f32 0.0, %v4229
        %v4231 = vpop.f32.mrb[0].mxu0
        %4232 = vmatprep.mubr.bf16.mxu0 0
        %4233 = vmatmul.mubr.bf16.gmra.mrb[0].mxu0 %v4115
        %v4234 = vpop.f32.mrb[0].mxu0
        %v4235 = vadd.f32 0.0, %v4234
        %v4236 = vpop.f32.mrb[0].mxu0
        %v4237 = vpop.f32.mrb[0].mxu0
        %v4238 = vadd.f32 0.0, %v4237
        %v4239 = vpop.f32.mrb[0].mxu0
        %4240 = vmatprep.mubr.bf16.mxu0 0
        %4241 = vmatmul.mubr.bf16.gmra.mrb[0].mxu0 %v4118
        %v4242 = vpop.f32.mrb[0].mxu0
        %v4243 = vadd.f32 0.0, %v4242
        %v4244 = vpop.f32.mrb[0].mxu0
        %v4245 = vpop.f32.mrb[0].mxu0
        %v4246 = vadd.f32 0.0, %v4245
        %v4247 = vpop.f32.mrb[0].mxu0
        %4248 = vmatprep.mubr.bf16.mxu0 0
        %4249 = vmatmul.mubr.bf16.gmra.mrb[0].mxu0 %v4121
        %v4250 = vpop.f32.mrb[0].mxu0
        %v4251 = vadd.f32 0.0, %v4250
        %v4252 = vpop.f32.mrb[0].mxu0
        %v4253 = vpop.f32.mrb[0].mxu0
        %v4254 = vadd.f32 0.0, %v4253
        %v4255 = vpop.f32.mrb[0].mxu0
        %4256 = vmatprep.mubr.bf16.mxu0 0
        %4257 = vmatmul.mubr.bf16.gmra.mrb[0].mxu0 %v4124
        %v4258 = vpop.f32.mrb[0].mxu0
        %v4259 = vadd.f32 0.0, %v4258
        %v4260 = vpop.f32.mrb[0].mxu0
        %v4261 = vpop.f32.mrb[0].mxu0
        %v4262 = vadd.f32 0.0, %v4261
        %v4263 = vpop.f32.mrb[0].mxu0
        %4264 = vmatprep.mubr.bf16.mxu0 0
        %4265 = vmatmul.mubr.bf16.gmra.mrb[0].mxu0 %v4127
        %v4266 = vpop.f32.mrb[0].mxu0
        %v4267 = vadd.f32 0.0, %v4266
        %v4268 = vpop.f32.mrb[0].mxu0
        %v4269 = vpop.f32.mrb[0].mxu0
        %v4270 = vadd.f32 0.0, %v4269
        %v4271 = vpop.f32.mrb[0].mxu0
        %4272 = vmatprep.mubr.bf16.mxu0 0
        %4273 = vmatmul.mubr.bf16.gmra.mrb[0].mxu0 %v4130
        %v4274 = vpop.f32.mrb[0].mxu0
        %v4275 = vadd.f32 0.0, %v4274
        %v4276 = vpop.f32.mrb[0].mxu0
        %v4277 = vpop.f32.mrb[0].mxu0
        %v4278 = vadd.f32 0.0, %v4277
        %v4279 = vpop.f32.mrb[0].mxu0
        %4280 = vmatprep.mubr.bf16.mxu0 0
        %4281 = vmatmul.mubr.bf16.gmra.mrb[0].mxu0 %v4133
        %v4282 = vpop.f32.mrb[0].mxu0
        %v4283 = vadd.f32 0.0, %v4282
        %v4284 = vpop.f32.mrb[0].mxu0
        %v4285 = vpop.f32.mrb[0].mxu0
        %v4286 = vadd.f32 0.0, %v4285
        %v4287 = vpop.f32.mrb[0].mxu0
        %4288 = vmatprep.mubr.bf16.mxu0 0
        %4289 = vmatmul.mubr.bf16.gmra.mrb[0].mxu0 %v4136
        %v4290 = vpop.f32.mrb[0].mxu0
        %v4291 = vadd.f32 0.0, %v4290
        %v4292 = vpop.f32.mrb[0].mxu0
        %v4293 = vpop.f32.mrb[0].mxu0
        %v4294 = vadd.f32 0.0, %v4293
        %v4295 = vpop.f32.mrb[0].mxu0
        %4296 = vmatprep.mubr.bf16.mxu0 0
        %4297 = vmatmul.mubr.bf16.gmra.mrb[0].mxu0 %v4139
        %v4298 = vpop.f32.mrb[0].mxu0
        %v4299 = vadd.f32 0.0, %v4298
        %v4300 = vpop.f32.mrb[0].mxu0
        %v4301 = vpop.f32.mrb[0].mxu0
        %v4302 = vadd.f32 0.0, %v4301
        %v4303 = vpop.f32.mrb[0].mxu0
        %4304 = vdwg.mxu0
        %v4305 = vadd.f32 %v3579, %v4179
        %v4306 = vadd.f32 %v3580, %v4182
        %v4307 = vadd.f32 %v3581, %v4187
        %v4308 = vadd.f32 %v3582, %v4190
        %v4309 = vadd.f32 %v3583, %v4195
        %v4310 = vadd.f32 %v3584, %v4198
        %v4311 = vadd.f32 %v3585, %v4203
        %v4312 = vadd.f32 %v3586, %v4206
        %v4313 = vadd.f32 %v3587, %v4211
        %v4314 = vadd.f32 %v3588, %v4214
        %v4315 = vadd.f32 %v3589, %v4219
        %v4316 = vadd.f32 %v3590, %v4222
        %v4317 = vadd.f32 %v3591, %v4227
        %v4318 = vadd.f32 %v3592, %v4230
        %v4319 = vadd.f32 %v3593, %v4235
        %v4320 = vadd.f32 %v3594, %v4238
        %v4321 = vadd.f32 %v3595, %v4243
        %v4322 = vadd.f32 %v3596, %v4246
        %v4323 = vadd.f32 %v3597, %v4251
        %v4324 = vadd.f32 %v3598, %v4254
        %v4325 = vadd.f32 %v3599, %v4259
        %v4326 = vadd.f32 %v3600, %v4262
        %v4327 = vadd.f32 %v3601, %v4267
        %v4328 = vadd.f32 %v3602, %v4270
        %v4329 = vadd.f32 %v3603, %v4275
        %v4330 = vadd.f32 %v3604, %v4278
        %v4331 = vadd.f32 %v3605, %v4283
        %v4332 = vadd.f32 %v3606, %v4286
        %v4333 = vadd.f32 %v3607, %v4291
        %v4334 = vadd.f32 %v3608, %v4294
        %v4335 = vadd.f32 %v3609, %v4299
        %v4336 = vadd.f32 %v3610, %v4302
        %v4337 = vld [vmem:[%s3252] sm:$0xe]
        %v4338 = vld [vmem:[%s3252 + $0xc] sm:$0xe]
        %v4339 = vld [vmem:[%s3252 + $0x18] sm:$0xe]
        %v4340 = vld [vmem:[%s3252 + $0x24] sm:$0xe]
        %v4341 = vld [vmem:[%s3252 + $0x30] sm:$0xe]
        %v4342 = vld [vmem:[%s3252 + $0x3c] sm:$0xe]
        %v4343 = vld [vmem:[%s3252 + $0x48] sm:$0xe]
        %v4344 = vld [vmem:[%s3252 + $0x54] sm:$0xe]
        %v4345 = vld [vmem:[%s3252 + $0x60] sm:$0xe]
        %v4346 = vld [vmem:[%s3252 + $0x6c] sm:$0xe]
        %v4347 = vld [vmem:[%s3252 + $0x78] sm:$0xe]
        %v4348 = vld [vmem:[%s3252 + $0x84] sm:$0xe]
        %v4349 = vld [vmem:[%s3252 + $0x90] sm:$0xe]
        %v4350 = vld [vmem:[%s3252 + $0x9c] sm:$0xe]
        %v4351 = vld [vmem:[%s3252 + $0xa8] sm:$0xe]
        %v4352 = vld [vmem:[%s3252 + $0xb4] sm:$0xe]
        %v4401 = vrot.slane %v4337, 5
        %v4402 = vrot.slane %v4401, 4
        %v4403 = vrot.slane %v3612, 5
        %v4404 = vsel %vm1290, %v4402, %v4403
        %v4405 = vrot.slane %v4403, 4
        %v4406 = vrot.slane %v3613, 5
        %v4407 = vsel %vm1290, %v4405, %v4406
        %v4408 = vrot.slane %v4338, 5
        %v4409 = vrot.slane %v4408, 4
        %v4410 = vrot.slane %v3615, 5
        %v4411 = vsel %vm1290, %v4409, %v4410
        %v4412 = vrot.slane %v4410, 4
        %v4413 = vrot.slane %v3616, 5
        %v4414 = vsel %vm1290, %v4412, %v4413
        %v4415 = vrot.slane %v4339, 5
        %v4416 = vrot.slane %v4415, 4
        %v4417 = vrot.slane %v3618, 5
        %v4418 = vsel %vm1290, %v4416, %v4417
        %v4419 = vrot.slane %v4417, 4
        %v4420 = vrot.slane %v3619, 5
        %v4421 = vsel %vm1290, %v4419, %v4420
        %v4422 = vrot.slane %v4340, 5
        %v4423 = vrot.slane %v4422, 4
        %v4424 = vrot.slane %v3621, 5
        %v4425 = vsel %vm1290, %v4423, %v4424
        %v4426 = vrot.slane %v4424, 4
        %v4427 = vrot.slane %v3622, 5
        %v4428 = vsel %vm1290, %v4426, %v4427
        %v4429 = vrot.slane %v4341, 5
        %v4430 = vrot.slane %v4429, 4
        %v4431 = vrot.slane %v3624, 5
        %v4432 = vsel %vm1290, %v4430, %v4431
        %v4433 = vrot.slane %v4431, 4
        %v4434 = vrot.slane %v3625, 5
        %v4435 = vsel %vm1290, %v4433, %v4434
        %v4436 = vrot.slane %v4342, 5
        %v4437 = vrot.slane %v4436, 4
        %v4438 = vrot.slane %v3627, 5
        %v4439 = vsel %vm1290, %v4437, %v4438
        %v4440 = vrot.slane %v4438, 4
        %v4441 = vrot.slane %v3628, 5
        %v4442 = vsel %vm1290, %v4440, %v4441
        %v4443 = vrot.slane %v4343, 5
        %v4444 = vrot.slane %v4443, 4
        %v4445 = vrot.slane %v3630, 5
        %v4446 = vsel %vm1290, %v4444, %v4445
        %v4447 = vrot.slane %v4445, 4
        %v4448 = vrot.slane %v3631, 5
        %v4449 = vsel %vm1290, %v4447, %v4448
        %v4450 = vrot.slane %v4344, 5
        %v4451 = vrot.slane %v4450, 4
        %v4452 = vrot.slane %v3633, 5
        %v4453 = vsel %vm1290, %v4451, %v4452
        %v4454 = vrot.slane %v4452, 4
        %v4455 = vrot.slane %v3634, 5
        %v4456 = vsel %vm1290, %v4454, %v4455
        %v4457 = vrot.slane %v4345, 5
        %v4458 = vrot.slane %v4457, 4
        %v4459 = vrot.slane %v3636, 5
        %v4460 = vsel %vm1290, %v4458, %v4459
        %v4461 = vrot.slane %v4459, 4
        %v4462 = vrot.slane %v3637, 5
        %v4463 = vsel %vm1290, %v4461, %v4462
        %v4464 = vrot.slane %v4346, 5
        %v4465 = vrot.slane %v4464, 4
        %v4466 = vrot.slane %v3639, 5
        %v4467 = vsel %vm1290, %v4465, %v4466
        %v4468 = vrot.slane %v4466, 4
        %v4469 = vrot.slane %v3640, 5
        %v4470 = vsel %vm1290, %v4468, %v4469
        %v4471 = vrot.slane %v4347, 5
        %v4472 = vrot.slane %v4471, 4
        %v4473 = vrot.slane %v3642, 5
        %v4474 = vsel %vm1290, %v4472, %v4473
        %v4475 = vrot.slane %v4473, 4
        %v4476 = vrot.slane %v3643, 5
        %v4477 = vsel %vm1290, %v4475, %v4476
        %v4478 = vrot.slane %v4348, 5
        %v4479 = vrot.slane %v4478, 4
        %v4480 = vrot.slane %v3645, 5
        %v4481 = vsel %vm1290, %v4479, %v4480
        %v4482 = vrot.slane %v4480, 4
        %v4483 = vrot.slane %v3646, 5
        %v4484 = vsel %vm1290, %v4482, %v4483
        %v4485 = vrot.slane %v4349, 5
        %v4486 = vrot.slane %v4485, 4
        %v4487 = vrot.slane %v3648, 5
        %v4488 = vsel %vm1290, %v4486, %v4487
        %v4489 = vrot.slane %v4487, 4
        %v4490 = vrot.slane %v3649, 5
        %v4491 = vsel %vm1290, %v4489, %v4490
        %v4492 = vrot.slane %v4350, 5
        %v4493 = vrot.slane %v4492, 4
        %v4494 = vrot.slane %v3651, 5
        %v4495 = vsel %vm1290, %v4493, %v4494
        %v4496 = vrot.slane %v4494, 4
        %v4497 = vrot.slane %v3652, 5
        %v4498 = vsel %vm1290, %v4496, %v4497
        %v4499 = vrot.slane %v4351, 5
        %v4500 = vrot.slane %v4499, 4
        %v4501 = vrot.slane %v3654, 5
        %v4502 = vsel %vm1290, %v4500, %v4501
        %v4503 = vrot.slane %v4501, 4
        %v4504 = vrot.slane %v3655, 5
        %v4505 = vsel %vm1290, %v4503, %v4504
        %v4506 = vrot.slane %v4352, 5
        %v4507 = vrot.slane %v4506, 4
        %v4508 = vrot.slane %v3657, 5
        %v4509 = vsel %vm1290, %v4507, %v4508
        %v4510 = vrot.slane %v4508, 4
        %v4511 = vrot.slane %v3658, 5
        %v4512 = vsel %vm1290, %v4510, %v4511
        %s4513 = scalar_lea.vmem [#allocation5], 32
        %v4514 = vld [vmem:[%s4513] sm:$0xf]
        %v4515 = vunpack.c.l.b16 %v4404
        %v4516 = vunpack.c.l.b16 %v4407
        %v4517 = vunpack.c.l.b16 %v4411
        %v4518 = vunpack.c.l.b16 %v4414
        %v4519 = vunpack.c.l.b16 %v4418
        %v4520 = vunpack.c.l.b16 %v4421
        %v4521 = vunpack.c.l.b16 %v4425
        %v4522 = vunpack.c.l.b16 %v4428
        %v4523 = vunpack.c.l.b16 %v4432
        %v4524 = vunpack.c.l.b16 %v4435
        %v4525 = vunpack.c.l.b16 %v4439
        %v4526 = vunpack.c.l.b16 %v4442
        %v4527 = vunpack.c.l.b16 %v4446
        %v4528 = vunpack.c.l.b16 %v4449
        %v4529 = vunpack.c.l.b16 %v4453
        %v4530 = vunpack.c.l.b16 %v4456
        %v4531 = vunpack.c.l.b16 %v4460
        %v4532 = vunpack.c.l.b16 %v4463
        %v4533 = vunpack.c.l.b16 %v4467
        %v4534 = vunpack.c.l.b16 %v4470
        %v4535 = vunpack.c.l.b16 %v4474
        %v4536 = vunpack.c.l.b16 %v4477
        %v4537 = vunpack.c.l.b16 %v4481
        %v4538 = vunpack.c.l.b16 %v4484
        %v4539 = vunpack.c.l.b16 %v4488
        %v4540 = vunpack.c.l.b16 %v4491
        %v4541 = vunpack.c.l.b16 %v4495
        %v4542 = vunpack.c.l.b16 %v4498
        %v4543 = vunpack.c.l.b16 %v4502
        %v4544 = vunpack.c.l.b16 %v4505
        %v4545 = vunpack.c.l.b16 %v4509
        %v4546 = vunpack.c.l.b16 %v4512
        %v4547 = vpack.c.b16 %v4516, %v4515
        %v4548 = vpack.c.b16 %v4518, %v4517
        %v4549 = vpack.c.b16 %v4520, %v4519
        %v4550 = vpack.c.b16 %v4522, %v4521
        %v4551 = vpack.c.b16 %v4524, %v4523
        %v4552 = vpack.c.b16 %v4526, %v4525
        %v4553 = vpack.c.b16 %v4528, %v4527
        %v4554 = vpack.c.b16 %v4530, %v4529
        %v4555 = vpack.c.b16 %v4532, %v4531
        %v4556 = vpack.c.b16 %v4534, %v4533
        %v4557 = vpack.c.b16 %v4536, %v4535
        %v4558 = vpack.c.b16 %v4538, %v4537
        %v4559 = vpack.c.b16 %v4540, %v4539
        %v4560 = vpack.c.b16 %v4542, %v4541
        %v4561 = vpack.c.b16 %v4544, %v4543
        %v4562 = vpack.c.b16 %v4546, %v4545
        %v4564 = vsel %vm734, %v4547, 0
        %v4567 = vsel %vm734, %v4548, 0
        %v4570 = vsel %vm734, %v4549, 0
        %v4573 = vsel %vm734, %v4550, 0
        %v4576 = vsel %vm734, %v4551, 0
        %v4579 = vsel %vm734, %v4552, 0
        %v4582 = vsel %vm734, %v4553, 0
        %v4585 = vsel %vm734, %v4554, 0
        %v4588 = vsel %vm734, %v4555, 0
        %v4591 = vsel %vm734, %v4556, 0
        %v4594 = vsel %vm734, %v4557, 0
        %v4597 = vsel %vm734, %v4558, 0
        %v4600 = vsel %vm734, %v4559, 0
        %v4603 = vsel %vm734, %v4560, 0
        %v4606 = vsel %vm734, %v4561, 0
        %v4609 = vsel %vm734, %v4562, 0
        %v4612 = vsel %vm783, %v4514, 0
        %4614 = vmatprep.subr.bf16.mxu0 0
        %4615 = vmatpush1.bf16.msra.mxu0 %v4612
        %4616 = vmatprep.subr.bf16.mxu0 0
        %4617 = vmatpush1.bf16.msra.mxu0 0
        %4618 = vmatprep.subr.bf16.mxu0 0
        %4619 = vmatpush1.bf16.msra.mxu0 0
        %4620 = vmatprep.subr.bf16.mxu0 0
        %4621 = vmatpush1.bf16.msra.mxu0 0
        %4622 = vmatprep.subr.bf16.mxu0 0
        %4623 = vmatpush1.bf16.msra.mxu0 0
        %4624 = vmatprep.subr.bf16.mxu0 0
        %4625 = vmatpush1.bf16.msra.mxu0 0
        %4626 = vmatprep.subr.bf16.mxu0 0
        %4627 = vmatpush1.bf16.msra.mxu0 0
        %4628 = vmatprep.subr.bf16.mxu0 0
        %4629 = vmatpush1.bf16.msra.mxu0 0
        %4630 = vmatprep.subr.bf16.mxu0 0
        %4631 = vmatpush1.bf16.msra.mxu0 0
        %4632 = vmatprep.subr.bf16.mxu0 0
        %4633 = vmatpush1.bf16.msra.mxu0 0
        %4634 = vmatprep.subr.bf16.mxu0 0
        %4635 = vmatpush1.bf16.msra.mxu0 0
        %4636 = vmatprep.subr.bf16.mxu0 0
        %4637 = vmatpush1.bf16.msra.mxu0 0
        %4638 = vmatprep.subr.bf16.mxu0 0
        %4639 = vmatpush1.bf16.msra.mxu0 0
        %4640 = vmatprep.subr.bf16.mxu0 0
        %4641 = vmatpush1.bf16.msra.mxu0 0
        %4642 = vmatprep.subr.bf16.mxu0 0
        %4643 = vmatpush1.bf16.msra.mxu0 0
        %4644 = vmatprep.subr.bf16.mxu0 0
        %4645 = vmatpush1.bf16.msra.mxu0 0
        %4646 = vmatprep.mubr.bf16.mxu0 0
        %4647 = vmatmul.mubr.bf16.gmra.mrb[0].mxu0 %v4564
        %v4648 = vpop.f32.mrb[0].mxu0
        %v4649 = vadd.f32 0.0, %v4648
        %v4650 = vpop.f32.mrb[0].mxu0
        %v4651 = vpop.f32.mrb[0].mxu0
        %v4652 = vadd.f32 0.0, %v4651
        %v4653 = vpop.f32.mrb[0].mxu0
        %4654 = vmatprep.mubr.bf16.mxu0 0
        %4655 = vmatmul.mubr.bf16.gmra.mrb[0].mxu0 %v4567
        %v4656 = vpop.f32.mrb[0].mxu0
        %v4657 = vadd.f32 0.0, %v4656
        %v4658 = vpop.f32.mrb[0].mxu0
        %v4659 = vpop.f32.mrb[0].mxu0
        %v4660 = vadd.f32 0.0, %v4659
        %v4661 = vpop.f32.mrb[0].mxu0
        %4662 = vmatprep.mubr.bf16.mxu0 0
        %4663 = vmatmul.mubr.bf16.gmra.mrb[0].mxu0 %v4570
        %v4664 = vpop.f32.mrb[0].mxu0
        %v4665 = vadd.f32 0.0, %v4664
        %v4666 = vpop.f32.mrb[0].mxu0
        %v4667 = vpop.f32.mrb[0].mxu0
        %v4668 = vadd.f32 0.0, %v4667
        %v4669 = vpop.f32.mrb[0].mxu0
        %4670 = vmatprep.mubr.bf16.mxu0 0
        %4671 = vmatmul.mubr.bf16.gmra.mrb[0].mxu0 %v4573
        %v4672 = vpop.f32.mrb[0].mxu0
        %v4673 = vadd.f32 0.0, %v4672
        %v4674 = vpop.f32.mrb[0].mxu0
        %v4675 = vpop.f32.mrb[0].mxu0
        %v4676 = vadd.f32 0.0, %v4675
        %v4677 = vpop.f32.mrb[0].mxu0
        %4678 = vmatprep.mubr.bf16.mxu0 0
        %4679 = vmatmul.mubr.bf16.gmra.mrb[0].mxu0 %v4576
        %v4680 = vpop.f32.mrb[0].mxu0
        %v4681 = vadd.f32 0.0, %v4680
        %v4682 = vpop.f32.mrb[0].mxu0
        %v4683 = vpop.f32.mrb[0].mxu0
        %v4684 = vadd.f32 0.0, %v4683
        %v4685 = vpop.f32.mrb[0].mxu0
        %4686 = vmatprep.mubr.bf16.mxu0 0
        %4687 = vmatmul.mubr.bf16.gmra.mrb[0].mxu0 %v4579
        %v4688 = vpop.f32.mrb[0].mxu0
        %v4689 = vadd.f32 0.0, %v4688
        %v4690 = vpop.f32.mrb[0].mxu0
        %v4691 = vpop.f32.mrb[0].mxu0
        %v4692 = vadd.f32 0.0, %v4691
        %v4693 = vpop.f32.mrb[0].mxu0
        %4694 = vmatprep.mubr.bf16.mxu0 0
        %4695 = vmatmul.mubr.bf16.gmra.mrb[0].mxu0 %v4582
        %v4696 = vpop.f32.mrb[0].mxu0
        %v4697 = vadd.f32 0.0, %v4696
        %v4698 = vpop.f32.mrb[0].mxu0
        %v4699 = vpop.f32.mrb[0].mxu0
        %v4700 = vadd.f32 0.0, %v4699
        %v4701 = vpop.f32.mrb[0].mxu0
        %4702 = vmatprep.mubr.bf16.mxu0 0
        %4703 = vmatmul.mubr.bf16.gmra.mrb[0].mxu0 %v4585
        %v4704 = vpop.f32.mrb[0].mxu0
        %v4705 = vadd.f32 0.0, %v4704
        %v4706 = vpop.f32.mrb[0].mxu0
        %v4707 = vpop.f32.mrb[0].mxu0
        %v4708 = vadd.f32 0.0, %v4707
        %v4709 = vpop.f32.mrb[0].mxu0
        %4710 = vmatprep.mubr.bf16.mxu0 0
        %4711 = vmatmul.mubr.bf16.gmra.mrb[0].mxu0 %v4588
        %v4712 = vpop.f32.mrb[0].mxu0
        %v4713 = vadd.f32 0.0, %v4712
        %v4714 = vpop.f32.mrb[0].mxu0
        %v4715 = vpop.f32.mrb[0].mxu0
        %v4716 = vadd.f32 0.0, %v4715
        %v4717 = vpop.f32.mrb[0].mxu0
        %4718 = vmatprep.mubr.bf16.mxu0 0
        %4719 = vmatmul.mubr.bf16.gmra.mrb[0].mxu0 %v4591
        %v4720 = vpop.f32.mrb[0].mxu0
        %v4721 = vadd.f32 0.0, %v4720
        %v4722 = vpop.f32.mrb[0].mxu0
        %v4723 = vpop.f32.mrb[0].mxu0
        %v4724 = vadd.f32 0.0, %v4723
        %v4725 = vpop.f32.mrb[0].mxu0
        %4726 = vmatprep.mubr.bf16.mxu0 0
        %4727 = vmatmul.mubr.bf16.gmra.mrb[0].mxu0 %v4594
        %v4728 = vpop.f32.mrb[0].mxu0
        %v4729 = vadd.f32 0.0, %v4728
        %v4730 = vpop.f32.mrb[0].mxu0
        %v4731 = vpop.f32.mrb[0].mxu0
        %v4732 = vadd.f32 0.0, %v4731
        %v4733 = vpop.f32.mrb[0].mxu0
        %4734 = vmatprep.mubr.bf16.mxu0 0
        %4735 = vmatmul.mubr.bf16.gmra.mrb[0].mxu0 %v4597
        %v4736 = vpop.f32.mrb[0].mxu0
        %v4737 = vadd.f32 0.0, %v4736
        %v4738 = vpop.f32.mrb[0].mxu0
        %v4739 = vpop.f32.mrb[0].mxu0
        %v4740 = vadd.f32 0.0, %v4739
        %v4741 = vpop.f32.mrb[0].mxu0
        %4742 = vmatprep.mubr.bf16.mxu0 0
        %4743 = vmatmul.mubr.bf16.gmra.mrb[0].mxu0 %v4600
        %v4744 = vpop.f32.mrb[0].mxu0
        %v4745 = vadd.f32 0.0, %v4744
        %v4746 = vpop.f32.mrb[0].mxu0
        %v4747 = vpop.f32.mrb[0].mxu0
        %v4748 = vadd.f32 0.0, %v4747
        %v4749 = vpop.f32.mrb[0].mxu0
        %4750 = vmatprep.mubr.bf16.mxu0 0
        %4751 = vmatmul.mubr.bf16.gmra.mrb[0].mxu0 %v4603
        %v4752 = vpop.f32.mrb[0].mxu0
        %v4753 = vadd.f32 0.0, %v4752
        %v4754 = vpop.f32.mrb[0].mxu0
        %v4755 = vpop.f32.mrb[0].mxu0
        %v4756 = vadd.f32 0.0, %v4755
        %v4757 = vpop.f32.mrb[0].mxu0
        %4758 = vmatprep.mubr.bf16.mxu0 0
        %4759 = vmatmul.mubr.bf16.gmra.mrb[0].mxu0 %v4606
        %v4760 = vpop.f32.mrb[0].mxu0
        %v4761 = vadd.f32 0.0, %v4760
        %v4762 = vpop.f32.mrb[0].mxu0
        %v4763 = vpop.f32.mrb[0].mxu0
        %v4764 = vadd.f32 0.0, %v4763
        %v4765 = vpop.f32.mrb[0].mxu0
        %4766 = vmatprep.mubr.bf16.mxu0 0
        %4767 = vmatmul.mubr.bf16.gmra.mrb[0].mxu0 %v4609
        %v4768 = vpop.f32.mrb[0].mxu0
        %v4769 = vadd.f32 0.0, %v4768
        %v4770 = vpop.f32.mrb[0].mxu0
        %v4771 = vpop.f32.mrb[0].mxu0
        %v4772 = vadd.f32 0.0, %v4771
        %v4773 = vpop.f32.mrb[0].mxu0
        %4774 = vdwg.mxu0
        %v4775 = vadd.f32 %v4305, %v4649
        %v4776 = vadd.f32 %v4306, %v4652
        %v4777 = vadd.f32 %v4307, %v4657
        %v4778 = vadd.f32 %v4308, %v4660
        %v4779 = vadd.f32 %v4309, %v4665
        %v4780 = vadd.f32 %v4310, %v4668
        %v4781 = vadd.f32 %v4311, %v4673
        %v4782 = vadd.f32 %v4312, %v4676
        %v4783 = vadd.f32 %v4313, %v4681
        %v4784 = vadd.f32 %v4314, %v4684
        %v4785 = vadd.f32 %v4315, %v4689
        %v4786 = vadd.f32 %v4316, %v4692
        %v4787 = vadd.f32 %v4317, %v4697
        %v4788 = vadd.f32 %v4318, %v4700
        %v4789 = vadd.f32 %v4319, %v4705
        %v4790 = vadd.f32 %v4320, %v4708
        %v4791 = vadd.f32 %v4321, %v4713
        %v4792 = vadd.f32 %v4322, %v4716
        %v4793 = vadd.f32 %v4323, %v4721
        %v4794 = vadd.f32 %v4324, %v4724
        %v4795 = vadd.f32 %v4325, %v4729
        %v4796 = vadd.f32 %v4326, %v4732
        %v4797 = vadd.f32 %v4327, %v4737
        %v4798 = vadd.f32 %v4328, %v4740
        %v4799 = vadd.f32 %v4329, %v4745
        %v4800 = vadd.f32 %v4330, %v4748
        %v4801 = vadd.f32 %v4331, %v4753
        %v4802 = vadd.f32 %v4332, %v4756
        %v4803 = vadd.f32 %v4333, %v4761
        %v4804 = vadd.f32 %v4334, %v4764
        %v4805 = vadd.f32 %v4335, %v4769
        %v4806 = vadd.f32 %v4336, %v4772
        %v4807 = vpack.c.bf16 %v4776, %v4775
        %v4808 = vpack.c.bf16 %v4778, %v4777
        %v4809 = vpack.c.bf16 %v4780, %v4779
        %v4810 = vpack.c.bf16 %v4782, %v4781
        %v4811 = vpack.c.bf16 %v4784, %v4783
        %v4812 = vpack.c.bf16 %v4786, %v4785
        %v4813 = vpack.c.bf16 %v4788, %v4787
        %v4814 = vpack.c.bf16 %v4790, %v4789
        %v4815 = vpack.c.bf16 %v4792, %v4791
        %v4816 = vpack.c.bf16 %v4794, %v4793
        %v4817 = vpack.c.bf16 %v4796, %v4795
        %v4818 = vpack.c.bf16 %v4798, %v4797
        %v4819 = vpack.c.bf16 %v4800, %v4799
        %v4820 = vpack.c.bf16 %v4802, %v4801
        %v4821 = vpack.c.bf16 %v4804, %v4803
        %v4822 = vpack.c.bf16 %v4806, %v4805
        %v4839 = vunpack.c.l.b16 %v4807
        %v4840 = vunpack.c.h.b16 %v4807
        %v4841 = vunpack.c.l.b16 %v4808
        %v4842 = vunpack.c.h.b16 %v4808
        %v4843 = vunpack.c.l.b16 %v4809
        %v4844 = vunpack.c.h.b16 %v4809
        %v4845 = vunpack.c.l.b16 %v4810
        %v4846 = vunpack.c.h.b16 %v4810
        %v4847 = vunpack.c.l.b16 %v4811
        %v4848 = vunpack.c.h.b16 %v4811
        %v4849 = vunpack.c.l.b16 %v4812
        %v4850 = vunpack.c.h.b16 %v4812
        %v4851 = vunpack.c.l.b16 %v4813
        %v4852 = vunpack.c.h.b16 %v4813
        %v4853 = vunpack.c.l.b16 %v4814
        %v4854 = vunpack.c.h.b16 %v4814
        %v4855 = vunpack.c.l.b16 %v4815
        %v4856 = vunpack.c.h.b16 %v4815
        %v4857 = vunpack.c.l.b16 %v4816
        %v4858 = vunpack.c.h.b16 %v4816
        %v4859 = vunpack.c.l.b16 %v4817
        %v4860 = vunpack.c.h.b16 %v4817
        %v4861 = vunpack.c.l.b16 %v4818
        %v4862 = vunpack.c.h.b16 %v4818
        %v4863 = vunpack.c.l.b16 %v4819
        %v4864 = vunpack.c.h.b16 %v4819
        %v4865 = vunpack.c.l.b16 %v4820
        %v4866 = vunpack.c.h.b16 %v4820
        %v4867 = vunpack.c.l.b16 %v4821
        %v4868 = vunpack.c.h.b16 %v4821
        %v4869 = vunpack.c.l.b16 %v4822
        %v4870 = vunpack.c.h.b16 %v4822
        %v4871 = vpack.c.b16 %v4839, %v4839
        %v4872 = vpack.c.b16 %v4840, %v4840
        %v4873 = vpack.c.b16 %v4841, %v4841
        %v4874 = vpack.c.b16 %v4842, %v4842
        %v4875 = vpack.c.b16 %v4843, %v4843
        %v4876 = vpack.c.b16 %v4844, %v4844
        %v4877 = vpack.c.b16 %v4845, %v4845
        %v4878 = vpack.c.b16 %v4846, %v4846
        %v4879 = vpack.c.b16 %v4847, %v4847
        %v4880 = vpack.c.b16 %v4848, %v4848
        %v4881 = vpack.c.b16 %v4849, %v4849
        %v4882 = vpack.c.b16 %v4850, %v4850
        %v4883 = vpack.c.b16 %v4851, %v4851
        %v4884 = vpack.c.b16 %v4852, %v4852
        %v4885 = vpack.c.b16 %v4853, %v4853
        %v4886 = vpack.c.b16 %v4854, %v4854
        %v4887 = vpack.c.b16 %v4855, %v4855
        %v4888 = vpack.c.b16 %v4856, %v4856
        %v4889 = vpack.c.b16 %v4857, %v4857
        %v4890 = vpack.c.b16 %v4858, %v4858
        %v4891 = vpack.c.b16 %v4859, %v4859
        %v4892 = vpack.c.b16 %v4860, %v4860
        %v4893 = vpack.c.b16 %v4861, %v4861
        %v4894 = vpack.c.b16 %v4862, %v4862
        %v4895 = vpack.c.b16 %v4863, %v4863
        %v4896 = vpack.c.b16 %v4864, %v4864
        %v4897 = vpack.c.b16 %v4865, %v4865
        %v4898 = vpack.c.b16 %v4866, %v4866
        %v4899 = vpack.c.b16 %v4867, %v4867
        %v4900 = vpack.c.b16 %v4868, %v4868
        %v4901 = vpack.c.b16 %v4869, %v4869
        %v4902 = vpack.c.b16 %v4870, %v4870
        %4935 = vst [vmem:[%s234] sm:$0xf] %v4871
        %4936 = vst [vmem:[%s234 + $0x4] sm:$0xf] %v4872
        %4937 = vst [vmem:[%s234 + $0x8] sm:$0xf] %v4873
        %4938 = vst [vmem:[%s234 + $0xc] sm:$0xf] %v4874
        %4939 = vst [vmem:[%s234 + $0x10] sm:$0xf] %v4875
        %4940 = vst [vmem:[%s234 + $0x14] sm:$0xf] %v4876
        %4941 = vst [vmem:[%s234 + $0x18] sm:$0xf] %v4877
        %4942 = vst [vmem:[%s234 + $0x1c] sm:$0xf] %v4878
        %4943 = vst [vmem:[%s234 + $0x20] sm:$0xf] %v4879
        %4944 = vst [vmem:[%s234 + $0x24] sm:$0xf] %v4880
        %4945 = vst [vmem:[%s234 + $0x28] sm:$0xf] %v4881
        %4946 = vst [vmem:[%s234 + $0x2c] sm:$0xf] %v4882
        %4947 = vst [vmem:[%s234 + $0x30] sm:$0xf] %v4883
        %4948 = vst [vmem:[%s234 + $0x34] sm:$0xf] %v4884
        %4949 = vst [vmem:[%s234 + $0x38] sm:$0xf] %v4885
        %4950 = vst [vmem:[%s234 + $0x3c] sm:$0xf] %v4886
        %4951 = vst [vmem:[%s234 + $0x40] sm:$0xf] %v4887
        %4952 = vst [vmem:[%s234 + $0x44] sm:$0xf] %v4888
        %4953 = vst [vmem:[%s234 + $0x48] sm:$0xf] %v4889
        %4954 = vst [vmem:[%s234 + $0x4c] sm:$0xf] %v4890
        %4955 = vst [vmem:[%s234 + $0x50] sm:$0xf] %v4891
        %4956 = vst [vmem:[%s234 + $0x54] sm:$0xf] %v4892
        %4957 = vst [vmem:[%s234 + $0x58] sm:$0xf] %v4893
        %4958 = vst [vmem:[%s234 + $0x5c] sm:$0xf] %v4894
        %4959 = vst [vmem:[%s234 + $0x60] sm:$0xf] %v4895
        %4960 = vst [vmem:[%s234 + $0x64] sm:$0xf] %v4896
        %4961 = vst [vmem:[%s234 + $0x68] sm:$0xf] %v4897
        %4962 = vst [vmem:[%s234 + $0x6c] sm:$0xf] %v4898
        %4963 = vst [vmem:[%s234 + $0x70] sm:$0xf] %v4899
        %4964 = vst [vmem:[%s234 + $0x74] sm:$0xf] %v4900
        %4965 = vst [vmem:[%s234 + $0x78] sm:$0xf] %v4901
        %4966 = vst [vmem:[%s234 + $0x7c] sm:$0xf] %v4902
        %v4967 = vadd.f32 %v4775, %v4776
        %v4968 = vadd.f32 %v4967, %v4777
        %v4969 = vadd.f32 %v4968, %v4778
        %v4970 = vadd.f32 %v4969, %v4779
        %v4971 = vadd.f32 %v4970, %v4780
        %v4972 = vadd.f32 %v4971, %v4781
        %v4973 = vadd.f32 %v4972, %v4782
        %v4974 = vadd.f32 %v4973, %v4783
        %v4975 = vadd.f32 %v4974, %v4784
        %v4976 = vadd.f32 %v4975, %v4785
        %v4977 = vadd.f32 %v4976, %v4786
        %v4978 = vadd.f32 %v4977, %v4787
        %v4979 = vadd.f32 %v4978, %v4788
        %v4980 = vadd.f32 %v4979, %v4789
        %v4981 = vadd.f32 %v4980, %v4790
        %v4982 = vadd.f32 %v4981, %v4791
        %v4983 = vadd.f32 %v4982, %v4792
        %v4984 = vadd.f32 %v4983, %v4793
        %v4985 = vadd.f32 %v4984, %v4794
        %v4986 = vadd.f32 %v4985, %v4795
        %v4987 = vadd.f32 %v4986, %v4796
        %v4988 = vadd.f32 %v4987, %v4797
        %v4989 = vadd.f32 %v4988, %v4798
        %v4990 = vadd.f32 %v4989, %v4799
        %v4991 = vadd.f32 %v4990, %v4800
        %v4992 = vadd.f32 %v4991, %v4801
        %v4993 = vadd.f32 %v4992, %v4802
        %v4994 = vadd.f32 %v4993, %v4803
        %v4995 = vadd.f32 %v4994, %v4804
        %v4996 = vadd.f32 %v4995, %v4805
        %v4997 = vadd.f32 %v4996, %v4806
        %v4998 = vrot.slane %v4997, 4
        %v4999 = vadd.f32 %v4997, %v4998
        %v5000 = vrot.slane %v4999, 2
        %v5001 = vadd.f32 %v4999, %v5000
        %v5002 = vrot.slane %v5001, 1
        %v5003 = vadd.f32 %v5001, %v5002
        %5004 = vst [vmem:[%s240] sm:$0x1] %v5003
        %v5005 = vmul.f32 %v4775, %v4775
        %v5006 = vmul.f32 %v4776, %v4776
        %v5007 = vmul.f32 %v4777, %v4777
        %v5008 = vmul.f32 %v4778, %v4778
        %v5009 = vmul.f32 %v4779, %v4779
        %v5010 = vmul.f32 %v4780, %v4780
        %v5011 = vmul.f32 %v4781, %v4781
        %v5012 = vmul.f32 %v4782, %v4782
        %v5013 = vmul.f32 %v4783, %v4783
        %v5014 = vmul.f32 %v4784, %v4784
        %v5015 = vmul.f32 %v4785, %v4785
        %v5016 = vmul.f32 %v4786, %v4786
        %v5017 = vmul.f32 %v4787, %v4787
        %v5018 = vmul.f32 %v4788, %v4788
        %v5019 = vmul.f32 %v4789, %v4789
        %v5020 = vmul.f32 %v4790, %v4790
        %v5021 = vmul.f32 %v4791, %v4791
        %v5022 = vmul.f32 %v4792, %v4792
        %v5023 = vmul.f32 %v4793, %v4793
        %v5024 = vmul.f32 %v4794, %v4794
        %v5025 = vmul.f32 %v4795, %v4795
        %v5026 = vmul.f32 %v4796, %v4796
        %v5027 = vmul.f32 %v4797, %v4797
        %v5028 = vmul.f32 %v4798, %v4798
        %v5029 = vmul.f32 %v4799, %v4799
        %v5030 = vmul.f32 %v4800, %v4800
        %v5031 = vmul.f32 %v4801, %v4801
        %v5032 = vmul.f32 %v4802, %v4802
        %v5033 = vmul.f32 %v4803, %v4803
        %v5034 = vmul.f32 %v4804, %v4804
        %v5035 = vmul.f32 %v4805, %v4805
        %v5036 = vmul.f32 %v4806, %v4806
        %v5037 = vadd.f32 %v5005, %v5006
        %v5038 = vadd.f32 %v5037, %v5007
        %v5039 = vadd.f32 %v5038, %v5008
        %v5040 = vadd.f32 %v5039, %v5009
        %v5041 = vadd.f32 %v5040, %v5010
        %v5042 = vadd.f32 %v5041, %v5011
        %v5043 = vadd.f32 %v5042, %v5012
        %v5044 = vadd.f32 %v5043, %v5013
        %v5045 = vadd.f32 %v5044, %v5014
        %v5046 = vadd.f32 %v5045, %v5015
        %v5047 = vadd.f32 %v5046, %v5016
        %v5048 = vadd.f32 %v5047, %v5017
        %v5049 = vadd.f32 %v5048, %v5018
        %v5050 = vadd.f32 %v5049, %v5019
        %v5051 = vadd.f32 %v5050, %v5020
        %v5052 = vadd.f32 %v5051, %v5021
        %v5053 = vadd.f32 %v5052, %v5022
        %v5054 = vadd.f32 %v5053, %v5023
        %v5055 = vadd.f32 %v5054, %v5024
        %v5056 = vadd.f32 %v5055, %v5025
        %v5057 = vadd.f32 %v5056, %v5026
        %v5058 = vadd.f32 %v5057, %v5027
        %v5059 = vadd.f32 %v5058, %v5028
        %v5060 = vadd.f32 %v5059, %v5029
        %v5061 = vadd.f32 %v5060, %v5030
        %v5062 = vadd.f32 %v5061, %v5031
        %v5063 = vadd.f32 %v5062, %v5032
        %v5064 = vadd.f32 %v5063, %v5033
        %v5065 = vadd.f32 %v5064, %v5034
        %v5066 = vadd.f32 %v5065, %v5035
        %v5067 = vadd.f32 %v5066, %v5036
        %v5068 = vrot.slane %v5067, 4
        %v5069 = vadd.f32 %v5067, %v5068
        %v5070 = vrot.slane %v5069, 2
        %v5071 = vadd.f32 %v5069, %v5070
        %v5072 = vrot.slane %v5071, 1
        %v5073 = vadd.f32 %v5071, %v5072
        %5074 = vst [vmem:[%s246] sm:$0x1] %v5073
        %s5075 = sand.u32 %s81, 1
        %s5076 = scalar_lea.sflag [#allocation4], %s5075
        %s5077 = sand.u32 %s81, 1
        %s5078 = smul.addr %s5077, 128
        %s5079 = scalar_lea.vmem [#allocation7], %s5078
        %s5080 = sand.u32 %s26, 1
        %s5081 = scalar_lea.sflag [#allocation9], %s5080
        %s5082 = sand.u32 %s107, 1
        %s5083 = scalar_lea.vmem [#allocation8], %s5082
        %s5084 = sand.u32 %s26, 1
        %s5085 = scalar_lea.sflag [#allocation9], %s5084
        %s5086 = sand.u32 %s133, 1
        %s5087 = scalar_lea.vmem [#allocation10], %s5086
        // Predicated region
        $region37: #{basic_conv_forward.2} parent=27 // pred_check
          %p5088 = pneg %p91
        $region38: #{basic_conv_forward.2} parent=27 // pred_check_branch
          %5090 = sbr.rel (%p5088) target = $region40
        $region39: #{basic_conv_forward.2} parent=27 // pred_region
          %s5092 = ssub.s32 2048, 2048
          %5093 = vsyncadd %s5076, %s5092
          %s5094 = smul.addr %s26, 32
          %s5095 = smul.addr %s5094, 64
          %s5096 = scalar_lea.hbm %s2, %s5095
          %s5097 = sshll.u32 %s5079, 4
          %s5098 = int_to_ptr.vmem [resolvable:$true] %s5097
          %5103 = dma.vmem_to_hbm [thread:$0]  %s5098, 2048, %s5096, %s5076, 64, 64, 4
        $region40: #{basic_conv_forward.2} parent=27 // pred_fallthru
          _
        // Predicated region
        $region41: #{basic_conv_forward.2} parent=27 // pred_check
          %p5104 = pneg %p117
        $region42: #{basic_conv_forward.2} parent=27 // pred_check_branch
          %5106 = sbr.rel (%p5104) target = $region44
        $region43: #{basic_conv_forward.2} parent=27 // pred_region
          %s5108 = ssub.s32 16, 16
          %5109 = vsyncadd %s5081, %s5108
          %s5110 = smul.addr %s26, 16
          %s5111 = scalar_lea.hbm %s3, %s5110
          %s5113 = sshll.u32 %s5083, 4
          %s5114 = int_to_ptr.vmem [resolvable:$true] %s5113
          %5116 = dma.vmem_to_hbm [thread:$0]  %s5114, 16, %s5111, %s5081
        $region44: #{basic_conv_forward.2} parent=27 // pred_fallthru
          _
        // Predicated region
        $region45: #{basic_conv_forward.2} parent=27 // pred_check
          %p5117 = pneg %p143
        $region46: #{basic_conv_forward.2} parent=27 // pred_check_branch
          %5119 = sbr.rel (%p5117) target = $region48
        $region47: #{basic_conv_forward.2} parent=27 // pred_region
          %s5121 = ssub.s32 16, 16
          %5122 = vsyncadd %s5085, %s5121
          %s5123 = smul.addr %s26, 16
          %s5124 = scalar_lea.hbm %s4, %s5123
          %s5126 = sshll.u32 %s5087, 4
          %s5127 = int_to_ptr.vmem [resolvable:$true] %s5126
          %5129 = dma.vmem_to_hbm [thread:$0]  %s5127, 16, %s5124, %s5085
        $region48: #{basic_conv_forward.2} parent=27 // pred_fallthru
          _
      $region28: #{basic_conv_forward.2} parent=5 // pred_fallthru
        _
      %p5130 = scmp.le.s32.totalorder 2, %s21
      // Predicated region
      $region49: #{basic_conv_forward.2} parent=5 // pred_check
        %p5131 = pneg %p5130
      $region50: #{basic_conv_forward.2} parent=5 // pred_check_branch
        %5133 = sbr.rel (%p5131) target = $region52
      $region51: #{basic_conv_forward.2} parent=5 // pred_region
        %s5134 = ssub.s32 %s21, 2
        // Predicated region
        $region53: #{basic_conv_forward.2} parent=51 // pred_check
          %p5135 = pneg %p97
        $region54: #{basic_conv_forward.2} parent=51 // pred_check_branch
          %5137 = sbr.rel (%p5135) target = $region56
        $region55: #{basic_conv_forward.2} parent=51 // pred_region
          %s5138 = sand.u32 %s82, 1
          %s5139 = scalar_lea.sflag [#allocation4], %s5138
          %s5140 = sand.u32 %s82, 1
          %s5141 = smul.addr %s5140, 128
          %s5142 = scalar_lea.vmem [#allocation7], %s5141
          %5143 = dma.done %s5139, 2048
        $region56: #{basic_conv_forward.2} parent=51 // pred_fallthru
          _
        // Predicated region
        $region57: #{basic_conv_forward.2} parent=51 // pred_check
          %p5144 = pneg %p123
        $region58: #{basic_conv_forward.2} parent=51 // pred_check_branch
          %5146 = sbr.rel (%p5144) target = $region60
        $region59: #{basic_conv_forward.2} parent=51 // pred_region
          %s5147 = sand.u32 %s27, 1
          %s5148 = scalar_lea.sflag [#allocation9], %s5147
          %s5149 = sand.u32 %s108, 1
          %s5150 = scalar_lea.vmem [#allocation8], %s5149
          %5151 = dma.done %s5148, 16
        $region60: #{basic_conv_forward.2} parent=51 // pred_fallthru
          _
        // Predicated region
        $region61: #{basic_conv_forward.2} parent=51 // pred_check
          %p5152 = pneg %p149
        $region62: #{basic_conv_forward.2} parent=51 // pred_check_branch
          %5154 = sbr.rel (%p5152) target = $region64
        $region63: #{basic_conv_forward.2} parent=51 // pred_region
          %s5155 = sand.u32 %s27, 1
          %s5156 = scalar_lea.sflag [#allocation9], %s5155
          %s5157 = sand.u32 %s134, 1
          %s5158 = scalar_lea.vmem [#allocation10], %s5157
          %5159 = dma.done %s5156, 16
        $region64: #{basic_conv_forward.2} parent=51 // pred_fallthru
          _
      $region52: #{basic_conv_forward.2} parent=5 // pred_fallthru
        _
    $region6: #{basic_conv_forward.2} parent=1 // loop_footer
      %s25 = sadd.s32 1, %s21
    $region7: #{basic_conv_forward.2} parent=1 // loop_footer_branch
      %20 = sbr.rel target = $region3
    $region8: #{basic_conv_forward.2} parent=1 // loop_exit
      _
    %5160 = vsyncpa [#allocation3], 1
    %s5161 = scalar_lea.sflag [#allocation3], 1
    %5162 = vsyncpa %s5161, 1
    %5163 = vsyncpa [#allocation6], 1
    %5164 = vsyncpa [#allocation4], 1
    %s5165 = scalar_lea.sflag [#allocation4], 1
    %5166 = vsyncpa %s5165, 1
    %5167 = vsyncpa [#allocation9], 1
    %s5168 = scalar_lea.sflag [#allocation9], 1
    %5169 = vsyncpa %s5168, 1

</llo_original>
